<compile_context>
chip_gen: v6e
topology: v6e:2x2x1
jax: 0.10.0
libtpu: 0.0.40
codegen_flags: <defaults>
</compile_context>

<pallas_src>
import functools
import math

import jax
import jax.numpy as jnp
from jax.experimental import pallas as pl
from jax.experimental.pallas import tpu as pltpu


def resnet_kernel(x_ref, w_in_ref, b_in_ref,
                  w1_ref, b1_ref, w2_ref, b2_ref,
                  w_out_ref, b_out_ref, o_ref,
                  h_ref, hb_ref, *, n_fused):
    """One (batch-tile, block-group) grid step.

    Grid axis 0: batch tiles ("parallel" -> megacore-shardable on v7x).
    Grid axis 1: groups of `n_fused` residual blocks ("arbitrary") -- h_ref / hb_ref carry
    the running activation (f32 + bf16 shadow) across the block axis.
    """
    step = pl.program_id(1)
    last = pl.num_programs(1) - 1

    # --- Input linear + relu: once per batch tile (first block-group step). ---
    # NOTE: we read h_ref/hb_ref right after this pl.when in the same grid step; Mosaic's
    # stateful ordering of the scf.if guarantees the store is visible to those loads.
    @pl.when(step == 0)
    def _():
        h0 = jnp.dot(x_ref[...], w_in_ref[...],
                     preferred_element_type=jnp.float32) + b_in_ref[...]
        h0 = jnp.maximum(h0, 0.0)
        h_ref[...] = h0
        hb_ref[...] = h0.astype(hb_ref.dtype)

    # --- n_fused residual blocks, unrolled:
    #       t = relu(h @ W1 + b1); t = t @ W2 + b2; h = relu(h + t) ---
    h = h_ref[...]          # f32 carry
    hb = hb_ref[...]        # bf16 shadow fed to the MXU
    for jj in range(n_fused):
        t = jnp.dot(hb, w1_ref[jj],
                    preferred_element_type=jnp.float32) + b1_ref[jj]
        t = jnp.maximum(t, 0.0)
        t = jnp.dot(t.astype(w2_ref.dtype), w2_ref[jj],
                    preferred_element_type=jnp.float32) + b2_ref[jj]
        h = jnp.maximum(h + t, 0.0)
        hb = h.astype(hb_ref.dtype)
    h_ref[...] = h
    hb_ref[...] = hb

    # --- Output linear: once per batch tile (last block-group step).  The module's extra
    #     relu before output_layer is a no-op here because h is already >= 0. ---
    @pl.when(step == last)
    def _():
        o = jnp.dot(hb, w_out_ref[...],
                    preferred_element_type=jnp.float32) + b_out_ref[...]
        o_ref[...] = o.astype(o_ref.dtype)


def _tpu_defaults():
    """(vmem_budget_bytes, min_batch_tiles) per TPU generation."""
    try:
        kind = jax.devices()[0].device_kind.lower()
    except Exception:
        kind = ""
    if any(v in kind for v in ("v2", "v3")):
        return 12 * 2**20, 1
    if any(v in kind for v in ("v4", "v5", "v6")):
        return 100 * 2**20, 1          # 128 MiB VMEM, single TensorCore
    # v7x (64 MiB / TensorCore, 2 TCs) or unknown: be conservative, keep >= 2 batch tiles.
    return 44 * 2**20, 2


def _vmem_estimate(bm, J, n_input, neuron, n_output, x_dtype, w_dt):
    """Working-set estimate in bytes (pipelined BlockSpecs are double-buffered)."""
    nb = lambda shape, dt: math.prod(shape) * jnp.dtype(dt).itemsize
    dbl = 2
    est = dbl * (
        nb((bm, n_input), x_dtype)                                              # x tile
        + nb((n_input, neuron), w_dt) + nb((8, neuron), jnp.float32)            # w_in / b_in
        + 2 * (J * nb((neuron, neuron), w_dt) + J * nb((8, neuron), jnp.float32))  # w1/b1 + w2/b2
        + nb((neuron, n_output), w_dt) + nb((8, n_output), jnp.float32)         # w_out / b_out
        + nb((bm, n_output), jnp.float32)                                       # out tile
    )
    est += nb((bm, neuron), jnp.float32) + nb((bm, neuron), w_dt)               # h carry + bf16 shadow
    return est


def resnet_forward(x, params, *, bm=None, blocks_per_step=None,
                   vmem_budget_bytes=None, min_batch_tiles=None):
    """x: [B, n_input] (bf16). params: see init_params. Returns [B, n_output] float32."""
    B, n_input = x.shape
    neuron = params["w_in"].shape[1]
    n_output = params["w_out"].shape[1]
    w_dt = params["w_in"].dtype

    w1, b1, w2, b2 = params["w1"], params["b1"], params["w2"], params["b2"]
    n_blocks = w1.shape[0]
    if n_blocks == 0:
        # block_num == 1: no residual blocks.  A zero-weight dummy block is an exact
        # identity (t == 0, h >= 0), so the same kernel path is reused.
        w1 = jnp.zeros((1, neuron, neuron), w_dt)
        w2 = jnp.zeros((1, neuron, neuron), w_dt)
        b1 = jnp.zeros((1, 1, neuron), jnp.float32)
        b2 = jnp.zeros((1, 1, neuron), jnp.float32)
        n_blocks = 1

    assert B % 8 == 0, "batch must be a multiple of 8 sublanes"
    assert n_input % 128 == 0 and neuron % 128 == 0 and n_output % 128 == 0, \
        "pad feature dims to multiples of 128 lanes for lane-dense layout"

    budget, dflt_min_tiles = _tpu_defaults()
    if vmem_budget_bytes is not None:
        budget = vmem_budget_bytes
    if min_batch_tiles is None:
        min_batch_tiles = dflt_min_tiles

    # --- J: residual blocks fused per grid step (amortizes ~0.35us/step overhead). ---
    if blocks_per_step is None:
        J = max(d for d in range(1, min(n_blocks, 8) + 1) if n_blocks % d == 0)
    else:
        J = int(blocks_per_step)
        assert 1 <= J <= n_blocks and n_blocks % J == 0

    # --- bm: largest batch tile (divisor of B, multiple of 8) that fits the VMEM budget,
    #     preferring >= min_batch_tiles tiles so v7x can use both TensorCores. ---
    headroom = 4 * 2**20
    if bm is None:
        cands = [d for d in range(8, B + 1, 8) if B % d == 0]
        fits = [d for d in cands
                if _vmem_estimate(d, J, n_input, neuron, n_output, x.dtype, w_dt)
                + headroom <= budget]
        if not fits:
            # TODO(synk): add a K/N weight-tiling grid axis for very large `neuron`
            #             (full (neuron, neuron) blocks stop fitting v7x around ~2048).
            fits = [min(cands)]
        pref = [d for d in fits if B // d >= min_batch_tiles]
        bm = max(pref) if pref else max(fits)
    assert bm % 8 == 0 and B % bm == 0, "batch must tile into multiples of 8 sublanes"

    est = _vmem_estimate(bm, J, n_input, neuron, n_output, x.dtype, w_dt)
    vmem_limit = max(est + headroom, 16 * 2**20)

    grid = (B // bm, n_blocks // J)
    kernel = functools.partial(resnet_kernel, n_fused=J)

    return pl.pallas_call(
        kernel,
        out_shape=jax.ShapeDtypeStruct((B, n_output), jnp.float32),
        grid_spec=pltpu.PrefetchScalarGridSpec(
            num_scalar_prefetch=0,
            grid=grid,
            in_specs=[
                pl.BlockSpec((bm, n_input), lambda i, j: (i, 0)),            # x tile
                pl.BlockSpec((n_input, neuron), lambda i, j: (0, 0)),        # w_in
                pl.BlockSpec((1, neuron), lambda i, j: (0, 0)),              # b_in
                pl.BlockSpec((J, neuron, neuron), lambda i, j: (j, 0, 0)),   # w1 group (streamed)
                pl.BlockSpec((J, 1, neuron), lambda i, j: (j, 0, 0)),        # b1 group
                pl.BlockSpec((J, neuron, neuron), lambda i, j: (j, 0, 0)),   # w2 group (streamed)
                pl.BlockSpec((J, 1, neuron), lambda i, j: (j, 0, 0)),        # b2 group
                pl.BlockSpec((neuron, n_output), lambda i, j: (0, 0)),       # w_out
                pl.BlockSpec((1, n_output), lambda i, j: (0, 0)),            # b_out
            ],
            out_specs=pl.BlockSpec((bm, n_output), lambda i, j: (i, 0)),
            scratch_shapes=[pltpu.VMEM((bm, neuron), jnp.float32),           # h carry (f32)
                            pltpu.VMEM((bm, neuron), w_dt)],                 # h shadow (bf16)
        ),
        compiler_params=pltpu.CompilerParams(
            dimension_semantics=("parallel", "arbitrary"),
            vmem_limit_bytes=int(vmem_limit),
        ),
    )(x, params["w_in"], params["b_in"], w1, b1, w2, b2,
      params["w_out"], params["b_out"])


def init_params(key, n_input, neuron, n_output, block_num, *, w_dtype=jnp.bfloat16):
    """Deterministic synthetic parameters.  Weights are stored transposed w.r.t.
    PyTorch, i.e. (in_features, out_features), so the kernel computes y = x @ W + b."""
    n_blocks = max(block_num - 1, 0)   # matches `for i in range(1, block_num)`
    ks = jax.random.split(key, 8)
    scale = 0.1
    nrm = lambda k, s: scale * jax.random.normal(k, s, jnp.float32)
    return {
        "w_in":  nrm(ks[0], (n_input, neuron)).astype(w_dtype),
        "b_in":  nrm(ks[1], (1, neuron)),
        "w1":    nrm(ks[2], (n_blocks, neuron, neuron)).astype(w_dtype),
        "b1":    nrm(ks[3], (n_blocks, 1, neuron)),
        "w2":    nrm(ks[4], (n_blocks, neuron, neuron)).astype(w_dtype),
        "b2":    nrm(ks[5], (n_blocks, 1, neuron)),
        "w_out": nrm(ks[6], (neuron, n_output)).astype(w_dtype),
        "b_out": nrm(ks[7], (1, n_output)),
    }


def resnet_reference(x, params):
    """Pure-JAX reference mirroring the PyTorch forward (same bf16-in / f32-acc mix)."""
    w_dt = params["w_in"].dtype

    def mm(a, w):
        return jnp.dot(a.astype(w_dt), w, preferred_element_type=jnp.float32)

    h = jnp.maximum(mm(x, params["w_in"]) + params["b_in"], 0.0)
    for i in range(params["w1"].shape[0]):
        t = jnp.maximum(mm(h, params["w1"][i]) + params["b1"][i], 0.0)
        t = mm(t, params["w2"][i]) + params["b2"][i]
        h = jnp.maximum(h + t, 0.0)
    h = jnp.maximum(h, 0.0)   # F.relu before output_layer (no-op: h >= 0)
    return mm(h, params["w_out"]) + params["b_out"]


if __name__ == "__main__":
    key = jax.random.PRNGKey(0)

    # Small but MXU/lane-friendly shapes: feature dims are multiples of 128 lanes,
    # batch tiles into large row slabs.  block_num=3 -> 2 residual blocks.
    B, n_input, neuron, n_output, block_num = 512, 128, 256, 128, 3
    kx, kp = jax.random.split(key)
    x = jax.random.normal(kx, (B, n_input), jnp.float32).astype(jnp.bfloat16)
    params = init_params(kp, n_input, neuron, n_output, block_num)

    out = jax.block_until_ready(resnet_forward(x, params))
    ref = resnet_reference(x, params)
    assert out.shape == (B, n_output)
    assert jnp.allclose(out, ref, atol=2e-2, rtol=2e-2), "mismatch vs reference"

    # block_num == 1 edge case (no residual blocks) exercises the zero-weight identity path.
    B2 = 64
    kx2, kp2 = jax.random.split(kp)
    x2 = jax.random.normal(kx2, (B2, n_input), jnp.float32).astype(jnp.bfloat16)
    params2 = init_params(kp2, n_input, neuron, n_output, block_num=1)
    out2 = jax.block_until_ready(resnet_forward(x2, params2))
    ref2 = resnet_reference(x2, params2)
    assert jnp.allclose(out2, ref2, atol=2e-2, rtol=2e-2), "mismatch vs reference (block_num=1)"

    print("KERNEL_OK")
</pallas_src>

<mosaic_0001>
module attributes {stable_mosaic.version = 11 : i64} {
  func.func @resnet_kernel(%arg0: i32, %arg1: i32, %arg2: memref<256x128xbf16, #tpu.memory_space<vmem>>, %arg3: memref<128x256xbf16, #tpu.memory_space<vmem>>, %arg4: memref<1x256xf32, #tpu.memory_space<vmem>>, %arg5: memref<2x256x256xbf16, #tpu.memory_space<vmem>>, %arg6: memref<2x1x256xf32, #tpu.memory_space<vmem>>, %arg7: memref<2x256x256xbf16, #tpu.memory_space<vmem>>, %arg8: memref<2x1x256xf32, #tpu.memory_space<vmem>>, %arg9: memref<256x128xbf16, #tpu.memory_space<vmem>>, %arg10: memref<1x128xf32, #tpu.memory_space<vmem>>, %arg11: memref<256x128xf32, #tpu.memory_space<vmem>>, %arg12: memref<256x256xf32, #tpu.memory_space<vmem>>, %arg13: memref<256x256xbf16, #tpu.memory_space<vmem>>) attributes {dimension_semantics = [#tpu.dimension_semantics<parallel>, #tpu.dimension_semantics<arbitrary>], iteration_bounds = array<i64: 2, 1>, scalar_prefetch = 0 : i64, scratch_operands = 2 : i64, tpu.core_type = #tpu.core_type<tc>, window_params = [{transform_indices = @transform_0, window_bounds = array<i64: 256, 128>}, {pipeline_mode = #tpu.pipeline_mode<synchronous>, transform_indices = @transform_1, window_bounds = array<i64: 128, 256>}, {pipeline_mode = #tpu.pipeline_mode<synchronous>, transform_indices = @transform_2, window_bounds = array<i64: 1, 256>}, {transform_indices = @transform_3, window_bounds = array<i64: 2, 256, 256>}, {transform_indices = @transform_4, window_bounds = array<i64: 2, 1, 256>}, {transform_indices = @transform_5, window_bounds = array<i64: 2, 256, 256>}, {transform_indices = @transform_6, window_bounds = array<i64: 2, 1, 256>}, {pipeline_mode = #tpu.pipeline_mode<synchronous>, transform_indices = @transform_7, window_bounds = array<i64: 256, 128>}, {pipeline_mode = #tpu.pipeline_mode<synchronous>, transform_indices = @transform_8, window_bounds = array<i64: 1, 128>}, {transform_indices = @transform_9, window_bounds = array<i64: 256, 128>}]} {
    %c0_i32 = arith.constant 0 : i32
    %0 = arith.cmpi eq, %arg1, %c0_i32 : i32
    %1 = arith.extui %0 : i1 to i32
    %c0_i32_0 = arith.constant 0 : i32
    %2 = arith.cmpi ne, %1, %c0_i32_0 : i32
    scf.if %2 {
      %c0_40 = arith.constant 0 : index
      %c0_41 = arith.constant 0 : index
      %52 = vector.load %arg2[%c0_40, %c0_41] : memref<256x128xbf16, #tpu.memory_space<vmem>>, vector<256x128xbf16>
      %c0_42 = arith.constant 0 : index
      %c0_43 = arith.constant 0 : index
      %53 = vector.load %arg3[%c0_42, %c0_43] : memref<128x256xbf16, #tpu.memory_space<vmem>>, vector<128x256xbf16>
      %cst_44 = arith.constant dense<0.000000e+00> : vector<256x256xf32>
      %54 = tpu.matmul %52, %53, %cst_44 {dimension_numbers = #tpu.dot_dimension_numbers<[1], [0], [0], [1], [0, 0, 1, 1], [], []>} : vector<256x128xbf16>, vector<128x256xbf16>, vector<256x256xf32> -> vector<256x256xf32>
      %c0_45 = arith.constant 0 : index
      %c0_46 = arith.constant 0 : index
      %55 = vector.load %arg4[%c0_45, %c0_46] : memref<1x256xf32, #tpu.memory_space<vmem>>, vector<1x256xf32>
      %56 = vector.broadcast %55 : vector<1x256xf32> to vector<256x256xf32>
      %57 = arith.addf %54, %56 : vector<256x256xf32>
      %cst_47 = arith.constant 0.000000e+00 : f32
      %58 = vector.broadcast %cst_47 : f32 to vector<256x256xf32>
      %59 = arith.maximumf %57, %58 : vector<256x256xf32>
      %c0_48 = arith.constant 0 : index
      %c0_49 = arith.constant 0 : index
      %60 = vector.load %arg12[%c0_48, %c0_49] : memref<256x256xf32, #tpu.memory_space<vmem>>, vector<256x256xf32>
      tpu.vector_store %arg12[%c0_48, %c0_49], %59 {strides = array<i32>} : memref<256x256xf32, #tpu.memory_space<vmem>>, vector<256x256xf32>,
      %61 = arith.truncf %59 : vector<256x256xf32> to vector<256x256xbf16>
      %c0_50 = arith.constant 0 : index
      %c0_51 = arith.constant 0 : index
      %62 = vector.load %arg13[%c0_50, %c0_51] : memref<256x256xbf16, #tpu.memory_space<vmem>>, vector<256x256xbf16>
      tpu.vector_store %arg13[%c0_50, %c0_51], %61 {strides = array<i32>} : memref<256x256xbf16, #tpu.memory_space<vmem>>, vector<256x256xbf16>,
    } else {
    }
    %c0 = arith.constant 0 : index
    %c0_1 = arith.constant 0 : index
    %3 = vector.load %arg12[%c0, %c0_1] : memref<256x256xf32, #tpu.memory_space<vmem>>, vector<256x256xf32>
    %c0_2 = arith.constant 0 : index
    %c0_3 = arith.constant 0 : index
    %4 = vector.load %arg13[%c0_2, %c0_3] : memref<256x256xbf16, #tpu.memory_space<vmem>>, vector<256x256xbf16>
    %c0_4 = arith.constant 0 : index
    %c0_5 = arith.constant 0 : index
    %c0_6 = arith.constant 0 : index
    %5 = vector.load %arg5[%c0_4, %c0_5, %c0_6] : memref<2x256x256xbf16, #tpu.memory_space<vmem>>, vector<1x256x256xbf16>
    %6 = vector.shape_cast %5 : vector<1x256x256xbf16> to vector<256x256xbf16>
    %cst = arith.constant dense<0.000000e+00> : vector<256x256xf32>
    %7 = tpu.matmul %4, %6, %cst {dimension_numbers = #tpu.dot_dimension_numbers<[1], [0], [0], [1], [0, 0, 1, 1], [], []>} : vector<256x256xbf16>, vector<256x256xbf16>, vector<256x256xf32> -> vector<256x256xf32>
    %c0_7 = arith.constant 0 : index
    %c0_8 = arith.constant 0 : index
    %c0_9 = arith.constant 0 : index
    %8 = vector.load %arg6[%c0_7, %c0_8, %c0_9] : memref<2x1x256xf32, #tpu.memory_space<vmem>>, vector<1x1x256xf32>
    %9 = vector.shape_cast %8 : vector<1x1x256xf32> to vector<1x256xf32>
    %10 = vector.broadcast %9 : vector<1x256xf32> to vector<256x256xf32>
    %11 = arith.addf %7, %10 : vector<256x256xf32>
    %cst_10 = arith.constant 0.000000e+00 : f32
    %12 = vector.broadcast %cst_10 : f32 to vector<256x256xf32>
    %13 = arith.maximumf %11, %12 : vector<256x256xf32>
    %14 = arith.truncf %13 : vector<256x256xf32> to vector<256x256xbf16>
    %c0_11 = arith.constant 0 : index
    %c0_12 = arith.constant 0 : index
    %c0_13 = arith.constant 0 : index
    %15 = vector.load %arg7[%c0_11, %c0_12, %c0_13] : memref<2x256x256xbf16, #tpu.memory_space<vmem>>, vector<1x256x256xbf16>
    %16 = vector.shape_cast %15 : vector<1x256x256xbf16> to vector<256x256xbf16>
    %cst_14 = arith.constant dense<0.000000e+00> : vector<256x256xf32>
    %17 = tpu.matmul %14, %16, %cst_14 {dimension_numbers = #tpu.dot_dimension_numbers<[1], [0], [0], [1], [0, 0, 1, 1], [], []>} : vector<256x256xbf16>, vector<256x256xbf16>, vector<256x256xf32> -> vector<256x256xf32>
    %c0_15 = arith.constant 0 : index
    %c0_16 = arith.constant 0 : index
    %c0_17 = arith.constant 0 : index
    %18 = vector.load %arg8[%c0_15, %c0_16, %c0_17] : memref<2x1x256xf32, #tpu.memory_space<vmem>>, vector<1x1x256xf32>
    %19 = vector.shape_cast %18 : vector<1x1x256xf32> to vector<1x256xf32>
    %20 = vector.broadcast %19 : vector<1x256xf32> to vector<256x256xf32>
    %21 = arith.addf %17, %20 : vector<256x256xf32>
    %22 = arith.addf %3, %21 : vector<256x256xf32>
    %cst_18 = arith.constant 0.000000e+00 : f32
    %23 = vector.broadcast %cst_18 : f32 to vector<256x256xf32>
    %24 = arith.maximumf %22, %23 : vector<256x256xf32>
    %25 = arith.truncf %24 : vector<256x256xf32> to vector<256x256xbf16>
    %c1 = arith.constant 1 : index
    %c0_19 = arith.constant 0 : index
    %c0_20 = arith.constant 0 : index
    %26 = vector.load %arg5[%c1, %c0_19, %c0_20] : memref<2x256x256xbf16, #tpu.memory_space<vmem>>, vector<1x256x256xbf16>
    %27 = vector.shape_cast %26 : vector<1x256x256xbf16> to vector<256x256xbf16>
    %cst_21 = arith.constant dense<0.000000e+00> : vector<256x256xf32>
    %28 = tpu.matmul %25, %27, %cst_21 {dimension_numbers = #tpu.dot_dimension_numbers<[1], [0], [0], [1], [0, 0, 1, 1], [], []>} : vector<256x256xbf16>, vector<256x256xbf16>, vector<256x256xf32> -> vector<256x256xf32>
    %c1_22 = arith.constant 1 : index
    %c0_23 = arith.constant 0 : index
    %c0_24 = arith.constant 0 : index
    %29 = vector.load %arg6[%c1_22, %c0_23, %c0_24] : memref<2x1x256xf32, #tpu.memory_space<vmem>>, vector<1x1x256xf32>
    %30 = vector.shape_cast %29 : vector<1x1x256xf32> to vector<1x256xf32>
    %31 = vector.broadcast %30 : vector<1x256xf32> to vector<256x256xf32>
    %32 = arith.addf %28, %31 : vector<256x256xf32>
    %cst_25 = arith.constant 0.000000e+00 : f32
    %33 = vector.broadcast %cst_25 : f32 to vector<256x256xf32>
    %34 = arith.maximumf %32, %33 : vector<256x256xf32>
    %35 = arith.truncf %34 : vector<256x256xf32> to vector<256x256xbf16>
    %c1_26 = arith.constant 1 : index
    %c0_27 = arith.constant 0 : index
    %c0_28 = arith.constant 0 : index
    %36 = vector.load %arg7[%c1_26, %c0_27, %c0_28] : memref<2x256x256xbf16, #tpu.memory_space<vmem>>, vector<1x256x256xbf16>
    %37 = vector.shape_cast %36 : vector<1x256x256xbf16> to vector<256x256xbf16>
    %cst_29 = arith.constant dense<0.000000e+00> : vector<256x256xf32>
    %38 = tpu.matmul %35, %37, %cst_29 {dimension_numbers = #tpu.dot_dimension_numbers<[1], [0], [0], [1], [0, 0, 1, 1], [], []>} : vector<256x256xbf16>, vector<256x256xbf16>, vector<256x256xf32> -> vector<256x256xf32>
    %c1_30 = arith.constant 1 : index
    %c0_31 = arith.constant 0 : index
    %c0_32 = arith.constant 0 : index
    %39 = vector.load %arg8[%c1_30, %c0_31, %c0_32] : memref<2x1x256xf32, #tpu.memory_space<vmem>>, vector<1x1x256xf32>
    %40 = vector.shape_cast %39 : vector<1x1x256xf32> to vector<1x256xf32>
    %41 = vector.broadcast %40 : vector<1x256xf32> to vector<256x256xf32>
    %42 = arith.addf %38, %41 : vector<256x256xf32>
    %43 = arith.addf %24, %42 : vector<256x256xf32>
    %cst_33 = arith.constant 0.000000e+00 : f32
    %44 = vector.broadcast %cst_33 : f32 to vector<256x256xf32>
    %45 = arith.maximumf %43, %44 : vector<256x256xf32>
    %46 = arith.truncf %45 : vector<256x256xf32> to vector<256x256xbf16>
    %c0_34 = arith.constant 0 : index
    %c0_35 = arith.constant 0 : index
    %47 = vector.load %arg12[%c0_34, %c0_35] : memref<256x256xf32, #tpu.memory_space<vmem>>, vector<256x256xf32>
    tpu.vector_store %arg12[%c0_34, %c0_35], %45 {strides = array<i32>} : memref<256x256xf32, #tpu.memory_space<vmem>>, vector<256x256xf32>,
    %c0_36 = arith.constant 0 : index
    %c0_37 = arith.constant 0 : index
    %48 = vector.load %arg13[%c0_36, %c0_37] : memref<256x256xbf16, #tpu.memory_space<vmem>>, vector<256x256xbf16>
    tpu.vector_store %arg13[%c0_36, %c0_37], %46 {strides = array<i32>} : memref<256x256xbf16, #tpu.memory_space<vmem>>, vector<256x256xbf16>,
    %c0_i32_38 = arith.constant 0 : i32
    %49 = arith.cmpi eq, %arg1, %c0_i32_38 : i32
    %50 = arith.extui %49 : i1 to i32
    %c0_i32_39 = arith.constant 0 : i32
    %51 = arith.cmpi ne, %50, %c0_i32_39 : i32
    scf.if %51 {
      %c0_40 = arith.constant 0 : index
      %c0_41 = arith.constant 0 : index
      %52 = vector.load %arg9[%c0_40, %c0_41] : memref<256x128xbf16, #tpu.memory_space<vmem>>, vector<256x128xbf16>
      %cst_42 = arith.constant dense<0.000000e+00> : vector<256x128xf32>
      %53 = tpu.matmul %46, %52, %cst_42 {dimension_numbers = #tpu.dot_dimension_numbers<[1], [0], [0], [1], [0, 0, 1, 1], [], []>} : vector<256x256xbf16>, vector<256x128xbf16>, vector<256x128xf32> -> vector<256x128xf32>
      %c0_43 = arith.constant 0 : index
      %c0_44 = arith.constant 0 : index
      %54 = vector.load %arg10[%c0_43, %c0_44] : memref<1x128xf32, #tpu.memory_space<vmem>>, vector<1x128xf32>
      %55 = vector.broadcast %54 : vector<1x128xf32> to vector<256x128xf32>
      %56 = arith.addf %53, %55 : vector<256x128xf32>
      %c0_45 = arith.constant 0 : index
      %c0_46 = arith.constant 0 : index
      %57 = vector.load %arg11[%c0_45, %c0_46] : memref<256x128xf32, #tpu.memory_space<vmem>>, vector<256x128xf32>
      tpu.vector_store %arg11[%c0_45, %c0_46], %56 {strides = array<i32>} : memref<256x128xf32, #tpu.memory_space<vmem>>, vector<256x128xf32>,
    } else {
    }
    return
  }
  func.func @transform_0(%arg0: i32, %arg1: i32) -> (i32, i32) {
    %c0_i32 = arith.constant 0 : i32
    %c0_i32_0 = arith.constant 0 : i32
    return %arg0, %c0_i32 : i32, i32
  }
  func.func @transform_1(%arg0: i32, %arg1: i32) -> (i32, i32) {
    %c0_i32 = arith.constant 0 : i32
    %c0_i32_0 = arith.constant 0 : i32
    %c0_i32_1 = arith.constant 0 : i32
    return %c0_i32, %c0_i32_0 : i32, i32
  }
  func.func @transform_2(%arg0: i32, %arg1: i32) -> (i32, i32) {
    %c0_i32 = arith.constant 0 : i32
    %c0_i32_0 = arith.constant 0 : i32
    %c0_i32_1 = arith.constant 0 : i32
    return %c0_i32, %c0_i32_0 : i32, i32
  }
  func.func @transform_3(%arg0: i32, %arg1: i32) -> (i32, i32, i32) {
    %c0_i32 = arith.constant 0 : i32
    %c0_i32_0 = arith.constant 0 : i32
    %c0_i32_1 = arith.constant 0 : i32
    return %arg1, %c0_i32, %c0_i32_0 : i32, i32, i32
  }
  func.func @transform_4(%arg0: i32, %arg1: i32) -> (i32, i32, i32) {
    %c0_i32 = arith.constant 0 : i32
    %c0_i32_0 = arith.constant 0 : i32
    %c0_i32_1 = arith.constant 0 : i32
    return %arg1, %c0_i32, %c0_i32_0 : i32, i32, i32
  }
  func.func @transform_5(%arg0: i32, %arg1: i32) -> (i32, i32, i32) {
    %c0_i32 = arith.constant 0 : i32
    %c0_i32_0 = arith.constant 0 : i32
    %c0_i32_1 = arith.constant 0 : i32
    return %arg1, %c0_i32, %c0_i32_0 : i32, i32, i32
  }
  func.func @transform_6(%arg0: i32, %arg1: i32) -> (i32, i32, i32) {
    %c0_i32 = arith.constant 0 : i32
    %c0_i32_0 = arith.constant 0 : i32
    %c0_i32_1 = arith.constant 0 : i32
    return %arg1, %c0_i32, %c0_i32_0 : i32, i32, i32
  }
  func.func @transform_7(%arg0: i32, %arg1: i32) -> (i32, i32) {
    %c0_i32 = arith.constant 0 : i32
    %c0_i32_0 = arith.constant 0 : i32
    %c0_i32_1 = arith.constant 0 : i32
    return %c0_i32, %c0_i32_0 : i32, i32
  }
  func.func @transform_8(%arg0: i32, %arg1: i32) -> (i32, i32) {
    %c0_i32 = arith.constant 0 : i32
    %c0_i32_0 = arith.constant 0 : i32
    %c0_i32_1 = arith.constant 0 : i32
    return %c0_i32, %c0_i32_0 : i32, i32
  }
  func.func @transform_9(%arg0: i32, %arg1: i32) -> (i32, i32) {
    %c0_i32 = arith.constant 0 : i32
    %c0_i32_0 = arith.constant 0 : i32
    return %arg0, %c0_i32 : i32, i32
  }
}

</mosaic_0001>

<llo_original>
// kernel: tpu_custom_call.1
$region0: #{tpu_custom_call.1}
  #allocation0 [shape = 'u32[]', space=smem, size = 0x4, offset = 0x4, fixed_abs, tag = 'smem constant byte address 0x4 - core index']
  #allocation1 [shape = 'u32[144,128]{1,0:T(1,128)}', space=vmem, size = 0x12000, scoped, tag = 'internal scratch']
  #allocation2 [shape = 'f32[256,256]{1,0:T(8,128)}', space=vmem, size = 0x40000, scoped, tag = 'scratch operand']
  #allocation3 [shape = 'bf16[256,256]{1,0:T(8,128)(2,1)}', space=vmem, size = 0x20000, scoped, tag = 'scratch operand']
  %s0 = inlined_call_operand.hbm [shape: bf16[512,128], index: 0, kind: input, shape index: {}]
  %s1 = inlined_call_operand.hbm [shape: bf16[128,256], index: 1, kind: input, shape index: {}]
  %s2 = inlined_call_operand.hbm [shape: f32[1,256], index: 2, kind: input, shape index: {}]
  %s3 = inlined_call_operand.hbm [shape: bf16[2,256,256], index: 3, kind: input, shape index: {}]
  %s4 = inlined_call_operand.vmem [shape: f32[2,1,256], index: 4, kind: input, shape index: {}]
  %s5 = inlined_call_operand.hbm [shape: bf16[2,256,256], index: 5, kind: input, shape index: {}]
  %s6 = inlined_call_operand.vmem [shape: f32[2,1,256], index: 6, kind: input, shape index: {}]
  %s7 = inlined_call_operand.hbm [shape: bf16[256,128], index: 7, kind: input, shape index: {}]
  %s8 = inlined_call_operand.vmem [shape: f32[1,128], index: 8, kind: input, shape index: {}]
  %s9 = inlined_call_operand.hbm [shape: f32[512,128], index: 9, kind: output, shape index: {}]
  %s10 = sld [smem:[#allocation0]]
  $region101: #{tpu_custom_call.1} parent=0
    _
  %s12 = ssub.s32 1, %s10
  %s13 = scalar_select 0, %s12, %s10
  $region1: #{tpu_custom_call.1} parent=0
    #allocation4 [shape = 'u8[131072]{0}', space=vmem, size = 0x20000, scoped, tag = 'input window, operand 0']
    #allocation5 [shape = 's32[2]{0}', space=sflag, size = 0x8, scoped, tag = 'scoped memory for tpu_custom_call.1']
    #allocation6 [shape = 's32[2]{0}', space=sflag, size = 0x8, scoped, tag = 'scoped memory for tpu_custom_call.1']
    #allocation7 [shape = 'u8[65536]{0}', space=vmem, size = 0x10000, scoped, tag = 'input window, operand 1, single buffered']
    #allocation8 [shape = 's32[1]{0}', space=sflag, size = 0x4, scoped, tag = 'scoped memory for tpu_custom_call.1']
    #allocation9 [shape = 'u8[1024]{0}', space=vmem, size = 0x400, scoped, tag = 'input window, operand 2, single buffered']
    #allocation10 [shape = 'u8[262144]{0}', space=vmem, size = 0x40000, scoped, tag = 'input window, operand 3, single buffered']
    #allocation11 [shape = 's32[1]{0}', space=sflag, size = 0x4, scoped, tag = 'scoped memory for tpu_custom_call.1']
    #allocation12 [shape = 'u8[262144]{0}', space=vmem, size = 0x40000, scoped, tag = 'input window, operand 5, single buffered']
    #allocation13 [shape = 'u8[65536]{0}', space=vmem, size = 0x10000, scoped, tag = 'input window, operand 7, single buffered']
    #allocation14 [shape = 's32[1]{0}', space=sflag, size = 0x4, scoped, tag = 'scoped memory for tpu_custom_call.1']
    #allocation15 [shape = 'u8[262144]{0}', space=vmem, size = 0x40000, scoped, tag = 'output window, operand 0']
    %14 = vsyncpa [#allocation5], 0
    %s15 = scalar_lea.sflag [#allocation5], 1
    %16 = vsyncpa %s15, 0
    %17 = vsyncpa [#allocation8], 0
    %18 = vsyncpa [#allocation11], 0
    %19 = vsyncpa [#allocation14], 0
    %20 = vsyncpa [#allocation6], 0
    %s21 = scalar_lea.sflag [#allocation6], 1
    %22 = vsyncpa %s21, 0
    loop: start=0, step=1, limit=4
    $region2: #{tpu_custom_call.1} parent=1 // loop_pre_header
      _
    $region3: #{tpu_custom_call.1} parent=1 // loop_header
      %s24 = sphi 0, %s28
      %p25 = scmp.ge.s32.totalorder %s24, 4
      %s31 = sphi 0, %s43
      %s32 = sphi 0, %s39
      %s33 = sphi 0, %s31
      %s34 = sphi 0, %s32
      %s35 = sphi 0, %s33
      %s36 = sphi 0, %s34
      %s46 = sphi 0, %s48
      %s49 = sphi 0, %s46
      %s50 = sphi 0, %s49
      %s66 = sphi 0, %s50
      %s70 = sphi 0, %s70
      %s72 = sphi 0, %s70
      %s73 = sphi 0, %s72
      %s87 = sphi 0, %s73
      %s91 = sphi 0, %s91
      %s93 = sphi 0, %s91
      %s94 = sphi 0, %s93
      %s108 = sphi 0, %s94
      %s114 = sphi 0, %s116
      %s117 = sphi 0, %s114
      %s118 = sphi 0, %s117
      %s134 = sphi 0, %s118
      %s140 = sphi 0, %s142
      %s143 = sphi 0, %s140
      %s144 = sphi 0, %s143
      %s160 = sphi 0, %s144
      %s166 = sphi 0, %s168
      %s169 = sphi 0, %s166
      %s170 = sphi 0, %s169
      %s186 = sphi 0, %s170
      %s192 = sphi 0, %s194
      %s195 = sphi 0, %s192
      %s196 = sphi 0, %s195
      %s212 = sphi 0, %s196
      %s216 = sphi 0, %s216
      %s218 = sphi 0, %s216
      %s219 = sphi 0, %s218
      %s233 = sphi 0, %s219
      %s237 = sphi 0, %s237
      %s239 = sphi 0, %s237
      %s240 = sphi 0, %s239
      %s254 = sphi 0, %s240
      %s260 = sphi 0, %s262
      %s263 = sphi 0, %s260
      %s264 = sphi 0, %s263
      %s280 = sphi 0, %s264
    $region4: #{tpu_custom_call.1} parent=1 // loop_header_branch
      %27 = sbr.rel (%p25) target = $region8
    $region5: #{tpu_custom_call.1} parent=1 // loop_body
      %s29 = ssub.s32 %s24, 1
      %s30 = ssub.s32 %s24, 2
      %s37 = sadd.s32 1, %s32
      %p38 = scmp.ge.s32.totalorder %s37, 1
      %s39 = scalar_select %p38, 0, %s37
      %s40 = sadd.s32 1, %s31
      %s41 = scalar_select %p38, %s40, %s31
      %p42 = scmp.ge.s32.totalorder %s41, 2
      %s43 = scalar_select %p42, 0, %s41
      %s44 = ssub.s32 %s31, %s43
      %p45 = scmp.eq.s32.totalorder %s44, 0
      %s47 = sadd.s32 %s46, 1
      %s48 = scalar_select %p45, %s46, %s47
      %p51 = pneg %p45
      %p52 = scmp.eq.s32.totalorder %s24, 1
      %p53 = por %p51, %p52
      %p54 = scmp.ne.s32.totalorder %s46, %s49
      %p55 = scmp.eq.s32.totalorder %s24, 0
      %p56 = por %p54, %p55
      %p57 = scmp.ne.s32.totalorder %s46, %s49
      %p58 = scmp.eq.s32.totalorder %s29, 1
      %p59 = por %p57, %p58
      %p60 = scmp.ne.s32.totalorder %s49, %s50
      %p61 = scmp.eq.s32.totalorder %s29, 0
      %p62 = por %p60, %p61
      %p63 = scmp.ne.s32.totalorder %s49, %s50
      %p64 = scmp.eq.s32.totalorder %s30, 1
      %p65 = por %p63, %p64
      %p67 = scmp.ne.s32.totalorder %s50, %s66
      %p68 = scmp.eq.s32.totalorder %s30, 0
      %p69 = por %p67, %p68
      %s71 = sadd.s32 %s70, 1
      %p74 = scmp.eq.s32.totalorder %s24, 1
      %p75 = scmp.ne.s32.totalorder %s70, %s72
      %p76 = scmp.eq.s32.totalorder %s24, 0
      %p77 = por %p75, %p76
      %p78 = scmp.ne.s32.totalorder %s70, %s72
      %p79 = scmp.eq.s32.totalorder %s29, 1
      %p80 = por %p78, %p79
      %p81 = scmp.ne.s32.totalorder %s72, %s73
      %p82 = scmp.eq.s32.totalorder %s29, 0
      %p83 = por %p81, %p82
      %p84 = scmp.ne.s32.totalorder %s72, %s73
      %p85 = scmp.eq.s32.totalorder %s30, 1
      %p86 = por %p84, %p85
      %p88 = scmp.ne.s32.totalorder %s73, %s87
      %p89 = scmp.eq.s32.totalorder %s30, 0
      %p90 = por %p88, %p89
      %s92 = sadd.s32 %s91, 1
      %p95 = scmp.eq.s32.totalorder %s24, 1
      %p96 = scmp.ne.s32.totalorder %s91, %s93
      %p97 = scmp.eq.s32.totalorder %s24, 0
      %p98 = por %p96, %p97
      %p99 = scmp.ne.s32.totalorder %s91, %s93
      %p100 = scmp.eq.s32.totalorder %s29, 1
      %p101 = por %p99, %p100
      %p102 = scmp.ne.s32.totalorder %s93, %s94
      %p103 = scmp.eq.s32.totalorder %s29, 0
      %p104 = por %p102, %p103
      %p105 = scmp.ne.s32.totalorder %s93, %s94
      %p106 = scmp.eq.s32.totalorder %s30, 1
      %p107 = por %p105, %p106
      %p109 = scmp.ne.s32.totalorder %s94, %s108
      %p110 = scmp.eq.s32.totalorder %s30, 0
      %p111 = por %p109, %p110
      %s112 = ssub.s32 %s32, %s39
      %p113 = scmp.eq.s32.totalorder %s112, 0
      %s115 = sadd.s32 %s114, 1
      %s116 = scalar_select %p113, %s114, %s115
      %p119 = pneg %p113
      %p120 = scmp.eq.s32.totalorder %s24, 1
      %p121 = por %p119, %p120
      %p122 = scmp.ne.s32.totalorder %s114, %s117
      %p123 = scmp.eq.s32.totalorder %s24, 0
      %p124 = por %p122, %p123
      %p125 = scmp.ne.s32.totalorder %s114, %s117
      %p126 = scmp.eq.s32.totalorder %s29, 1
      %p127 = por %p125, %p126
      %p128 = scmp.ne.s32.totalorder %s117, %s118
      %p129 = scmp.eq.s32.totalorder %s29, 0
      %p130 = por %p128, %p129
      %p131 = scmp.ne.s32.totalorder %s117, %s118
      %p132 = scmp.eq.s32.totalorder %s30, 1
      %p133 = por %p131, %p132
      %p135 = scmp.ne.s32.totalorder %s118, %s134
      %p136 = scmp.eq.s32.totalorder %s30, 0
      %p137 = por %p135, %p136
      %s138 = ssub.s32 %s32, %s39
      %p139 = scmp.eq.s32.totalorder %s138, 0
      %s141 = sadd.s32 %s140, 1
      %s142 = scalar_select %p139, %s140, %s141
      %p145 = pneg %p139
      %p146 = scmp.eq.s32.totalorder %s24, 1
      %p147 = por %p145, %p146
      %p148 = scmp.ne.s32.totalorder %s140, %s143
      %p149 = scmp.eq.s32.totalorder %s24, 0
      %p150 = por %p148, %p149
      %p151 = scmp.ne.s32.totalorder %s140, %s143
      %p152 = scmp.eq.s32.totalorder %s29, 1
      %p153 = por %p151, %p152
      %p154 = scmp.ne.s32.totalorder %s143, %s144
      %p155 = scmp.eq.s32.totalorder %s29, 0
      %p156 = por %p154, %p155
      %p157 = scmp.ne.s32.totalorder %s143, %s144
      %p158 = scmp.eq.s32.totalorder %s30, 1
      %p159 = por %p157, %p158
      %p161 = scmp.ne.s32.totalorder %s144, %s160
      %p162 = scmp.eq.s32.totalorder %s30, 0
      %p163 = por %p161, %p162
      %s164 = ssub.s32 %s32, %s39
      %p165 = scmp.eq.s32.totalorder %s164, 0
      %s167 = sadd.s32 %s166, 1
      %s168 = scalar_select %p165, %s166, %s167
      %p171 = pneg %p165
      %p172 = scmp.eq.s32.totalorder %s24, 1
      %p173 = por %p171, %p172
      %p174 = scmp.ne.s32.totalorder %s166, %s169
      %p175 = scmp.eq.s32.totalorder %s24, 0
      %p176 = por %p174, %p175
      %p177 = scmp.ne.s32.totalorder %s166, %s169
      %p178 = scmp.eq.s32.totalorder %s29, 1
      %p179 = por %p177, %p178
      %p180 = scmp.ne.s32.totalorder %s169, %s170
      %p181 = scmp.eq.s32.totalorder %s29, 0
      %p182 = por %p180, %p181
      %p183 = scmp.ne.s32.totalorder %s169, %s170
      %p184 = scmp.eq.s32.totalorder %s30, 1
      %p185 = por %p183, %p184
      %p187 = scmp.ne.s32.totalorder %s170, %s186
      %p188 = scmp.eq.s32.totalorder %s30, 0
      %p189 = por %p187, %p188
      %s190 = ssub.s32 %s32, %s39
      %p191 = scmp.eq.s32.totalorder %s190, 0
      %s193 = sadd.s32 %s192, 1
      %s194 = scalar_select %p191, %s192, %s193
      %p197 = pneg %p191
      %p198 = scmp.eq.s32.totalorder %s24, 1
      %p199 = por %p197, %p198
      %p200 = scmp.ne.s32.totalorder %s192, %s195
      %p201 = scmp.eq.s32.totalorder %s24, 0
      %p202 = por %p200, %p201
      %p203 = scmp.ne.s32.totalorder %s192, %s195
      %p204 = scmp.eq.s32.totalorder %s29, 1
      %p205 = por %p203, %p204
      %p206 = scmp.ne.s32.totalorder %s195, %s196
      %p207 = scmp.eq.s32.totalorder %s29, 0
      %p208 = por %p206, %p207
      %p209 = scmp.ne.s32.totalorder %s195, %s196
      %p210 = scmp.eq.s32.totalorder %s30, 1
      %p211 = por %p209, %p210
      %p213 = scmp.ne.s32.totalorder %s196, %s212
      %p214 = scmp.eq.s32.totalorder %s30, 0
      %p215 = por %p213, %p214
      %s217 = sadd.s32 %s216, 1
      %p220 = scmp.eq.s32.totalorder %s24, 1
      %p221 = scmp.ne.s32.totalorder %s216, %s218
      %p222 = scmp.eq.s32.totalorder %s24, 0
      %p223 = por %p221, %p222
      %p224 = scmp.ne.s32.totalorder %s216, %s218
      %p225 = scmp.eq.s32.totalorder %s29, 1
      %p226 = por %p224, %p225
      %p227 = scmp.ne.s32.totalorder %s218, %s219
      %p228 = scmp.eq.s32.totalorder %s29, 0
      %p229 = por %p227, %p228
      %p230 = scmp.ne.s32.totalorder %s218, %s219
      %p231 = scmp.eq.s32.totalorder %s30, 1
      %p232 = por %p230, %p231
      %p234 = scmp.ne.s32.totalorder %s219, %s233
      %p235 = scmp.eq.s32.totalorder %s30, 0
      %p236 = por %p234, %p235
      %s238 = sadd.s32 %s237, 1
      %p241 = scmp.eq.s32.totalorder %s24, 1
      %p242 = scmp.ne.s32.totalorder %s237, %s239
      %p243 = scmp.eq.s32.totalorder %s24, 0
      %p244 = por %p242, %p243
      %p245 = scmp.ne.s32.totalorder %s237, %s239
      %p246 = scmp.eq.s32.totalorder %s29, 1
      %p247 = por %p245, %p246
      %p248 = scmp.ne.s32.totalorder %s239, %s240
      %p249 = scmp.eq.s32.totalorder %s29, 0
      %p250 = por %p248, %p249
      %p251 = scmp.ne.s32.totalorder %s239, %s240
      %p252 = scmp.eq.s32.totalorder %s30, 1
      %p253 = por %p251, %p252
      %p255 = scmp.ne.s32.totalorder %s240, %s254
      %p256 = scmp.eq.s32.totalorder %s30, 0
      %p257 = por %p255, %p256
      %s258 = ssub.s32 %s31, %s43
      %p259 = scmp.eq.s32.totalorder %s258, 0
      %s261 = sadd.s32 %s260, 1
      %s262 = scalar_select %p259, %s260, %s261
      %p265 = pneg %p259
      %p266 = scmp.eq.s32.totalorder %s24, 1
      %p267 = por %p265, %p266
      %p268 = scmp.ne.s32.totalorder %s260, %s263
      %p269 = scmp.eq.s32.totalorder %s24, 0
      %p270 = por %p268, %p269
      %p271 = scmp.ne.s32.totalorder %s260, %s263
      %p272 = scmp.eq.s32.totalorder %s29, 1
      %p273 = por %p271, %p272
      %p274 = scmp.ne.s32.totalorder %s263, %s264
      %p275 = scmp.eq.s32.totalorder %s29, 0
      %p276 = por %p274, %p275
      %p277 = scmp.ne.s32.totalorder %s263, %s264
      %p278 = scmp.eq.s32.totalorder %s30, 1
      %p279 = por %p277, %p278
      %p281 = scmp.ne.s32.totalorder %s264, %s280
      %p282 = scmp.eq.s32.totalorder %s30, 0
      %p283 = por %p281, %p282
      %p284 = scmp.le.s32.totalorder 1, %s24
      %p285 = scmp.lt.s32.totalorder %s24, 3
      %p286 = pnand %p284, %p285
      %p287 = pneg %p286
      // Predicated region
      $region9: #{tpu_custom_call.1} parent=5 // pred_check
        _
      $region10: #{tpu_custom_call.1} parent=5 // pred_check_branch
        %289 = sbr.rel (%p286) target = $region12
      $region11: #{tpu_custom_call.1} parent=5 // pred_region
        %s290 = ssub.s32 %s24, 1
        // Predicated region
        $region13: #{tpu_custom_call.1} parent=11 // pred_check
          %p291 = pneg %p83
        $region14: #{tpu_custom_call.1} parent=11 // pred_check_branch
          %293 = sbr.rel (%p291) target = $region16
        $region15: #{tpu_custom_call.1} parent=11 // pred_region
          %s295 = ssub.s32 2048, 2048
          %296 = vsyncadd [#allocation8], %s295
          %s297 = sshll.u32 [#allocation7], 4
          %s298 = int_to_ptr.vmem [resolvable:$true] %s297
          %303 = dma.hbm_to_vmem [thread:$0]  %s1, 2048, %s298, [#allocation8], 128, 128, 8
        $region16: #{tpu_custom_call.1} parent=11 // pred_fallthru
          _
        // Predicated region
        $region17: #{tpu_custom_call.1} parent=11 // pred_check
          %p304 = pneg %p104
        $region18: #{tpu_custom_call.1} parent=11 // pred_check_branch
          %306 = sbr.rel (%p304) target = $region20
        $region19: #{tpu_custom_call.1} parent=11 // pred_region
          %s308 = ssub.s32 32, 32
          %309 = vsyncadd [#allocation8], %s308
          %s311 = sshll.u32 [#allocation9], 4
          %s312 = int_to_ptr.vmem [resolvable:$true] %s311
          %314 = dma.hbm_to_vmem [thread:$0]  %s2, 32, %s312, [#allocation8]
        $region20: #{tpu_custom_call.1} parent=11 // pred_fallthru
          _
        // Predicated region
        $region21: #{tpu_custom_call.1} parent=11 // pred_check
          %p315 = pneg %p130
        $region22: #{tpu_custom_call.1} parent=11 // pred_check_branch
          %317 = sbr.rel (%p315) target = $region24
        $region23: #{tpu_custom_call.1} parent=11 // pred_region
          %s318 = smul.u32 2, %s34
          %s320 = ssub.s32 8192, 8192
          %321 = vsyncadd [#allocation11], %s320
          %s322 = smul.addr %s318, 64
          %s323 = smul.addr %s322, 64
          %s324 = scalar_lea.hbm %s3, %s323
          %s325 = sshll.u32 [#allocation10], 4
          %s326 = int_to_ptr.vmem [resolvable:$true] %s325
          %331 = dma.hbm_to_vmem [thread:$0]  %s324, 8192, %s326, [#allocation11], 128, 128, 8
        $region24: #{tpu_custom_call.1} parent=11 // pred_fallthru
          _
        // Predicated region
        $region25: #{tpu_custom_call.1} parent=11 // pred_check
          %p332 = pneg %p156
        $region26: #{tpu_custom_call.1} parent=11 // pred_check_branch
          %334 = sbr.rel (%p332) target = $region28
        $region27: #{tpu_custom_call.1} parent=11 // pred_region
          %s335 = smul.u32 2, %s34
          %p336 = scmp.lt.s32.totalorder %s335, 1
          %s337 = scalar_select %p336, %s335, 1
          %s338 = smul.addr %s337, 2
          %s339 = scalar_lea.vmem %s4, %s338
          %s340 = smul.u32 2, %s34
        $region28: #{tpu_custom_call.1} parent=11 // pred_fallthru
          _
        // Predicated region
        $region29: #{tpu_custom_call.1} parent=11 // pred_check
          %p341 = pneg %p182
        $region30: #{tpu_custom_call.1} parent=11 // pred_check_branch
          %343 = sbr.rel (%p341) target = $region32
        $region31: #{tpu_custom_call.1} parent=11 // pred_region
          %s344 = smul.u32 2, %s34
          %s346 = ssub.s32 8192, 8192
          %347 = vsyncadd [#allocation11], %s346
          %s348 = smul.addr %s344, 64
          %s349 = smul.addr %s348, 64
          %s350 = scalar_lea.hbm %s5, %s349
          %s351 = sshll.u32 [#allocation12], 4
          %s352 = int_to_ptr.vmem [resolvable:$true] %s351
          %357 = dma.hbm_to_vmem [thread:$0]  %s350, 8192, %s352, [#allocation11], 128, 128, 8
        $region32: #{tpu_custom_call.1} parent=11 // pred_fallthru
          _
        // Predicated region
        $region33: #{tpu_custom_call.1} parent=11 // pred_check
          %p358 = pneg %p208
        $region34: #{tpu_custom_call.1} parent=11 // pred_check_branch
          %360 = sbr.rel (%p358) target = $region36
        $region35: #{tpu_custom_call.1} parent=11 // pred_region
          %s361 = smul.u32 2, %s34
          %p362 = scmp.lt.s32.totalorder %s361, 1
          %s363 = scalar_select %p362, %s361, 1
          %s364 = smul.addr %s363, 2
          %s365 = scalar_lea.vmem %s6, %s364
          %s366 = smul.u32 2, %s34
        $region36: #{tpu_custom_call.1} parent=11 // pred_fallthru
          _
        // Predicated region
        $region37: #{tpu_custom_call.1} parent=11 // pred_check
          %p367 = pneg %p229
        $region38: #{tpu_custom_call.1} parent=11 // pred_check_branch
          %369 = sbr.rel (%p367) target = $region40
        $region39: #{tpu_custom_call.1} parent=11 // pred_region
          %s371 = ssub.s32 2048, 2048
          %372 = vsyncadd [#allocation14], %s371
          %s373 = sshll.u32 [#allocation13], 4
          %s374 = int_to_ptr.vmem [resolvable:$true] %s373
          %379 = dma.hbm_to_vmem [thread:$0]  %s7, 2048, %s374, [#allocation14], 64, 64, 4
        $region40: #{tpu_custom_call.1} parent=11 // pred_fallthru
          _
        // Predicated region
        $region41: #{tpu_custom_call.1} parent=11 // pred_check
          %p380 = pneg %p250
        $region42: #{tpu_custom_call.1} parent=11 // pred_check_branch
          %382 = sbr.rel (%p380) target = $region44
        $region43: #{tpu_custom_call.1} parent=11 // pred_region
          _
        $region44: #{tpu_custom_call.1} parent=11 // pred_fallthru
          _
      $region12: #{tpu_custom_call.1} parent=5 // pred_fallthru
        _
      %p383 = scmp.lt.s32.totalorder %s24, 2
      // Predicated region
      $region45: #{tpu_custom_call.1} parent=5 // pred_check
        %p384 = pneg %p383
      $region46: #{tpu_custom_call.1} parent=5 // pred_check_branch
        %386 = sbr.rel (%p384) target = $region48
      $region47: #{tpu_custom_call.1} parent=5 // pred_region
        // Predicated region
        $region49: #{tpu_custom_call.1} parent=47 // pred_check
          %p387 = pneg %p56
        $region50: #{tpu_custom_call.1} parent=47 // pred_check_branch
          %389 = sbr.rel (%p387) target = $region52
        $region51: #{tpu_custom_call.1} parent=47 // pred_region
          %s390 = sand.u32 %s46, 1
          %s391 = scalar_lea.sflag [#allocation5], %s390
          %s392 = sand.u32 %s46, 1
          %s393 = smul.addr %s392, 128
          %s394 = scalar_lea.vmem [#allocation4], %s393
          %s395 = smul.u32 32, %s31
          %s397 = ssub.s32 2048, 2048
          %398 = vsyncadd %s391, %s397
          %s399 = smul.addr %s395, 64
          %s400 = scalar_lea.hbm %s0, %s399
          %s401 = sshll.u32 %s394, 4
          %s402 = int_to_ptr.vmem [resolvable:$true] %s401
          %407 = dma.hbm_to_vmem [thread:$0]  %s400, 2048, %s402, %s391, 64, 64, 4
        $region52: #{tpu_custom_call.1} parent=47 // pred_fallthru
          _
      $region48: #{tpu_custom_call.1} parent=5 // pred_fallthru
        _
      %p408 = scmp.le.s32.totalorder 1, %s24
      %p409 = scmp.lt.s32.totalorder %s24, 3
      %p410 = pnand %p408, %p409
      %p411 = pneg %p410
      // Predicated region
      $region53: #{tpu_custom_call.1} parent=5 // pred_check
        _
      $region54: #{tpu_custom_call.1} parent=5 // pred_check_branch
        %413 = sbr.rel (%p410) target = $region56
      $region55: #{tpu_custom_call.1} parent=5 // pred_region
        %s414 = ssub.s32 %s24, 1
        %s415 = sand.u32 %s49, 1
        %s416 = scalar_lea.sflag [#allocation5], %s415
        %s417 = sand.u32 %s49, 1
        %s418 = smul.addr %s417, 128
        %s419 = scalar_lea.vmem [#allocation4], %s418
        // Predicated region
        $region57: #{tpu_custom_call.1} parent=55 // pred_check
          %p420 = pneg %p62
        $region58: #{tpu_custom_call.1} parent=55 // pred_check_branch
          %422 = sbr.rel (%p420) target = $region60
        $region59: #{tpu_custom_call.1} parent=55 // pred_region
          %423 = dma.done %s416, 2048
        $region60: #{tpu_custom_call.1} parent=55 // pred_fallthru
          _
        // Predicated region
        $region61: #{tpu_custom_call.1} parent=55 // pred_check
          %p424 = pneg %p83
        $region62: #{tpu_custom_call.1} parent=55 // pred_check_branch
          %426 = sbr.rel (%p424) target = $region64
        $region63: #{tpu_custom_call.1} parent=55 // pred_region
          %427 = dma.done [#allocation8], 2048
        $region64: #{tpu_custom_call.1} parent=55 // pred_fallthru
          _
        // Predicated region
        $region65: #{tpu_custom_call.1} parent=55 // pred_check
          %p428 = pneg %p104
        $region66: #{tpu_custom_call.1} parent=55 // pred_check_branch
          %430 = sbr.rel (%p428) target = $region68
        $region67: #{tpu_custom_call.1} parent=55 // pred_region
          %431 = dma.done [#allocation8], 32
        $region68: #{tpu_custom_call.1} parent=55 // pred_fallthru
          _
        // Predicated region
        $region69: #{tpu_custom_call.1} parent=55 // pred_check
          %p432 = pneg %p130
        $region70: #{tpu_custom_call.1} parent=55 // pred_check_branch
          %434 = sbr.rel (%p432) target = $region72
        $region71: #{tpu_custom_call.1} parent=55 // pred_region
          %435 = dma.done [#allocation11], 8192
        $region72: #{tpu_custom_call.1} parent=55 // pred_fallthru
          _
        // Predicated region
        $region73: #{tpu_custom_call.1} parent=55 // pred_check
          %p436 = pneg %p182
        $region74: #{tpu_custom_call.1} parent=55 // pred_check_branch
          %438 = sbr.rel (%p436) target = $region76
        $region75: #{tpu_custom_call.1} parent=55 // pred_region
          %439 = dma.done [#allocation11], 8192
        $region76: #{tpu_custom_call.1} parent=55 // pred_fallthru
          _
        // Predicated region
        $region77: #{tpu_custom_call.1} parent=55 // pred_check
          %p440 = pneg %p229
        $region78: #{tpu_custom_call.1} parent=55 // pred_check_branch
          %442 = sbr.rel (%p440) target = $region80
        $region79: #{tpu_custom_call.1} parent=55 // pred_region
          %443 = dma.done [#allocation14], 2048
        $region80: #{tpu_custom_call.1} parent=55 // pred_fallthru
          _
        %s444 = sand.u32 %s49, 1
        %s445 = scalar_lea.sflag [#allocation5], %s444
        %s446 = sand.u32 %s49, 1
        %s447 = smul.addr %s446, 128
        %s448 = scalar_lea.vmem [#allocation4], %s447
        %p449 = pneg %p62
        %p450 = pneg %p59
        %p451 = pneg %p83
        %p452 = pneg %p80
        %p453 = pneg %p104
        %p454 = pneg %p101
        %p455 = pneg %p130
        %p456 = pneg %p127
        %s457 = smul.u32 2, %s34
        %p458 = scmp.lt.s32.totalorder %s457, 1
        %s459 = scalar_select %p458, %s457, 1
        %s460 = smul.addr %s459, 2
        %s461 = scalar_lea.vmem %s4, %s460
        %p462 = pneg %p156
        %p463 = pneg %p153
        %p464 = pneg %p182
        %p465 = pneg %p179
        %s466 = smul.u32 2, %s34
        %p467 = scmp.lt.s32.totalorder %s466, 1
        %s468 = scalar_select %p467, %s466, 1
        %s469 = smul.addr %s468, 2
        %s470 = scalar_lea.vmem %s6, %s469
        %p471 = pneg %p208
        %p472 = pneg %p205
        %p473 = pneg %p229
        %p474 = pneg %p226
        %p475 = pneg %p250
        %p476 = pneg %p247
        %p477 = pneg %p276
        %p478 = pneg %p273
        %s479 = sand.u32 %s263, 1
        %s480 = scalar_lea.sflag [#allocation6], %s479
        %s481 = sand.u32 %s263, 1
        %s482 = smul.addr %s481, 256
        %s483 = scalar_lea.vmem [#allocation15], %s482
        %s484 = smul.u32 32, %s33
        %s485 = smul.u32 2, %s34
        %s486 = smul.u32 2, %s34
        %p487 = scmp.lt.s32.totalorder %s486, 1
        %s488 = scalar_select %p487, %s486, 1
        %s489 = smul.addr %s488, 2
        %s490 = scalar_lea.vmem %s4, %s489
        %s491 = smul.u32 2, %s34
        %s492 = smul.u32 2, %s34
        %s493 = smul.u32 2, %s34
        %p494 = scmp.lt.s32.totalorder %s493, 1
        %s495 = scalar_select %p494, %s493, 1
        %s496 = smul.addr %s495, 2
        %s497 = scalar_lea.vmem %s6, %s496
        %s498 = smul.u32 2, %s34
        %s499 = smul.u32 32, %s33
        %p501 = scmp.eq.s32.totalorder %s34, 0
        // Predicated region
        $region81: #{tpu_custom_call.1} parent=55 // pred_check
          %p502 = pneg %p501
        $region82: #{tpu_custom_call.1} parent=55 // pred_check_branch
          %504 = sbr.rel (%p502) target = $region84
        $region83: #{tpu_custom_call.1} parent=55 // pred_region
          %v505 = vld [vmem:[%s419] sm:$0xf]
          %v506 = vld [vmem:[%s419 + $0x4] sm:$0xf]
          %v507 = vld [vmem:[%s419 + $0x8] sm:$0xf]
          %v508 = vld [vmem:[%s419 + $0xc] sm:$0xf]
          %v509 = vld [vmem:[%s419 + $0x10] sm:$0xf]
          %v510 = vld [vmem:[%s419 + $0x14] sm:$0xf]
          %v511 = vld [vmem:[%s419 + $0x18] sm:$0xf]
          %v512 = vld [vmem:[%s419 + $0x1c] sm:$0xf]
          %v513 = vld [vmem:[%s419 + $0x20] sm:$0xf]
          %v514 = vld [vmem:[%s419 + $0x24] sm:$0xf]
          %v515 = vld [vmem:[%s419 + $0x28] sm:$0xf]
          %v516 = vld [vmem:[%s419 + $0x2c] sm:$0xf]
          %v517 = vld [vmem:[%s419 + $0x30] sm:$0xf]
          %v518 = vld [vmem:[%s419 + $0x34] sm:$0xf]
          %v519 = vld [vmem:[%s419 + $0x38] sm:$0xf]
          %v520 = vld [vmem:[%s419 + $0x3c] sm:$0xf]
          %v521 = vld [vmem:[%s419 + $0x40] sm:$0xf]
          %v522 = vld [vmem:[%s419 + $0x44] sm:$0xf]
          %v523 = vld [vmem:[%s419 + $0x48] sm:$0xf]
          %v524 = vld [vmem:[%s419 + $0x4c] sm:$0xf]
          %v525 = vld [vmem:[%s419 + $0x50] sm:$0xf]
          %v526 = vld [vmem:[%s419 + $0x54] sm:$0xf]
          %v527 = vld [vmem:[%s419 + $0x58] sm:$0xf]
          %v528 = vld [vmem:[%s419 + $0x5c] sm:$0xf]
          %v529 = vld [vmem:[%s419 + $0x60] sm:$0xf]
          %v530 = vld [vmem:[%s419 + $0x64] sm:$0xf]
          %v531 = vld [vmem:[%s419 + $0x68] sm:$0xf]
          %v532 = vld [vmem:[%s419 + $0x6c] sm:$0xf]
          %v533 = vld [vmem:[%s419 + $0x70] sm:$0xf]
          %v534 = vld [vmem:[%s419 + $0x74] sm:$0xf]
          %v535 = vld [vmem:[%s419 + $0x78] sm:$0xf]
          %v536 = vld [vmem:[%s419 + $0x7c] sm:$0xf]
          %v537 = vld [vmem:[#allocation7] sm:$0xff]
          %v538 = vld [vmem:[#allocation7 + $0x8] sm:$0xff]
          %v539 = vld [vmem:[#allocation7 + $0x10] sm:$0xff]
          %v540 = vld [vmem:[#allocation7 + $0x18] sm:$0xff]
          %v541 = vld [vmem:[#allocation7 + $0x20] sm:$0xff]
          %v542 = vld [vmem:[#allocation7 + $0x28] sm:$0xff]
          %v543 = vld [vmem:[#allocation7 + $0x30] sm:$0xff]
          %v544 = vld [vmem:[#allocation7 + $0x38] sm:$0xff]
          %v545 = vld [vmem:[#allocation7 + $0x40] sm:$0xff]
          %v546 = vld [vmem:[#allocation7 + $0x48] sm:$0xff]
          %v547 = vld [vmem:[#allocation7 + $0x50] sm:$0xff]
          %v548 = vld [vmem:[#allocation7 + $0x58] sm:$0xff]
          %v549 = vld [vmem:[#allocation7 + $0x60] sm:$0xff]
          %v550 = vld [vmem:[#allocation7 + $0x68] sm:$0xff]
          %v551 = vld [vmem:[#allocation7 + $0x70] sm:$0xff]
          %v552 = vld [vmem:[#allocation7 + $0x78] sm:$0xff]
          %v553 = vld [vmem:[#allocation9] sm:$0x3]
          %v555 = vlaneseq
          %v556 = vshrl.u32 %v555, 7
          %v557 = vsub.s32 0, %v556
          %v558 = vrot.slane %v553, %v557
          %v559 = vlaneseq
          %v560 = vshrl.u32 %v559, 7
          %v561 = vsub.s32 1, %v560
          %v562 = vrot.slane %v553, %v561
          %v597 = vunpack.c.l.b16 %v505
          %v598 = vunpack.c.l.b16 %v506
          %v599 = vunpack.c.l.b16 %v507
          %v600 = vunpack.c.l.b16 %v508
          %v601 = vunpack.c.l.b16 %v509
          %v602 = vunpack.c.l.b16 %v510
          %v603 = vunpack.c.l.b16 %v511
          %v604 = vunpack.c.l.b16 %v512
          %v605 = vunpack.c.l.b16 %v513
          %v606 = vunpack.c.l.b16 %v514
          %v607 = vunpack.c.l.b16 %v515
          %v608 = vunpack.c.l.b16 %v516
          %v609 = vunpack.c.l.b16 %v517
          %v610 = vunpack.c.l.b16 %v518
          %v611 = vunpack.c.l.b16 %v519
          %v612 = vunpack.c.l.b16 %v520
          %v613 = vunpack.c.l.b16 %v521
          %v614 = vunpack.c.l.b16 %v522
          %v615 = vunpack.c.l.b16 %v523
          %v616 = vunpack.c.l.b16 %v524
          %v617 = vunpack.c.l.b16 %v525
          %v618 = vunpack.c.l.b16 %v526
          %v619 = vunpack.c.l.b16 %v527
          %v620 = vunpack.c.l.b16 %v528
          %v621 = vunpack.c.l.b16 %v529
          %v622 = vunpack.c.l.b16 %v530
          %v623 = vunpack.c.l.b16 %v531
          %v624 = vunpack.c.l.b16 %v532
          %v625 = vunpack.c.l.b16 %v533
          %v626 = vunpack.c.l.b16 %v534
          %v627 = vunpack.c.l.b16 %v535
          %v628 = vunpack.c.l.b16 %v536
          %v629 = vpack.c.b16 %v598, %v597
          %v630 = vpack.c.b16 %v600, %v599
          %v631 = vpack.c.b16 %v602, %v601
          %v632 = vpack.c.b16 %v604, %v603
          %v633 = vpack.c.b16 %v606, %v605
          %v634 = vpack.c.b16 %v608, %v607
          %v635 = vpack.c.b16 %v610, %v609
          %v636 = vpack.c.b16 %v612, %v611
          %v637 = vpack.c.b16 %v614, %v613
          %v638 = vpack.c.b16 %v616, %v615
          %v639 = vpack.c.b16 %v618, %v617
          %v640 = vpack.c.b16 %v620, %v619
          %v641 = vpack.c.b16 %v622, %v621
          %v642 = vpack.c.b16 %v624, %v623
          %v643 = vpack.c.b16 %v626, %v625
          %v644 = vpack.c.b16 %v628, %v627
          %v677 = vunpack.c.l.b16 %v537
          %v678 = vunpack.c.h.b16 %v537
          %v679 = vunpack.c.l.b16 %v538
          %v680 = vunpack.c.h.b16 %v538
          %v681 = vunpack.c.l.b16 %v539
          %v682 = vunpack.c.h.b16 %v539
          %v683 = vunpack.c.l.b16 %v540
          %v684 = vunpack.c.h.b16 %v540
          %v685 = vunpack.c.l.b16 %v541
          %v686 = vunpack.c.h.b16 %v541
          %v687 = vunpack.c.l.b16 %v542
          %v688 = vunpack.c.h.b16 %v542
          %v689 = vunpack.c.l.b16 %v543
          %v690 = vunpack.c.h.b16 %v543
          %v691 = vunpack.c.l.b16 %v544
          %v692 = vunpack.c.h.b16 %v544
          %v693 = vunpack.c.l.b16 %v545
          %v694 = vunpack.c.h.b16 %v545
          %v695 = vunpack.c.l.b16 %v546
          %v696 = vunpack.c.h.b16 %v546
          %v697 = vunpack.c.l.b16 %v547
          %v698 = vunpack.c.h.b16 %v547
          %v699 = vunpack.c.l.b16 %v548
          %v700 = vunpack.c.h.b16 %v548
          %v701 = vunpack.c.l.b16 %v549
          %v702 = vunpack.c.h.b16 %v549
          %v703 = vunpack.c.l.b16 %v550
          %v704 = vunpack.c.h.b16 %v550
          %v705 = vunpack.c.l.b16 %v551
          %v706 = vunpack.c.h.b16 %v551
          %v707 = vunpack.c.l.b16 %v552
          %v708 = vunpack.c.h.b16 %v552
          %v709 = vpack.c.b16 %v679, %v677
          %v710 = vpack.c.b16 %v680, %v678
          %v711 = vpack.c.b16 %v683, %v681
          %v712 = vpack.c.b16 %v684, %v682
          %v713 = vpack.c.b16 %v687, %v685
          %v714 = vpack.c.b16 %v688, %v686
          %v715 = vpack.c.b16 %v691, %v689
          %v716 = vpack.c.b16 %v692, %v690
          %v717 = vpack.c.b16 %v695, %v693
          %v718 = vpack.c.b16 %v696, %v694
          %v719 = vpack.c.b16 %v699, %v697
          %v720 = vpack.c.b16 %v700, %v698
          %v721 = vpack.c.b16 %v703, %v701
          %v722 = vpack.c.b16 %v704, %v702
          %v723 = vpack.c.b16 %v707, %v705
          %v724 = vpack.c.b16 %v708, %v706
          %741 = vmatprep.subr.bf16.mxu0 %v724
          %742 = vmatpush1.bf16.msra.mxu0 %v723
          %743 = vmatprep.subr.bf16.mxu0 %v722
          %744 = vmatpush1.bf16.msra.mxu0 %v721
          %745 = vmatprep.subr.bf16.mxu0 %v720
          %746 = vmatpush1.bf16.msra.mxu0 %v719
          %747 = vmatprep.subr.bf16.mxu0 %v718
          %748 = vmatpush1.bf16.msra.mxu0 %v717
          %749 = vmatprep.subr.bf16.mxu0 %v716
          %750 = vmatpush1.bf16.msra.mxu0 %v715
          %751 = vmatprep.subr.bf16.mxu0 %v714
          %752 = vmatpush1.bf16.msra.mxu0 %v713
          %753 = vmatprep.subr.bf16.mxu0 %v712
          %754 = vmatpush1.bf16.msra.mxu0 %v711
          %755 = vmatprep.subr.bf16.mxu0 %v710
          %756 = vmatpush1.bf16.msra.mxu0 %v709
          %757 = vmatprep.subr.bf16.mxu0 0
          %758 = vmatpush2.bf16.msra.mxu0 0
          %759 = vmatprep.subr.bf16.mxu0 0
          %760 = vmatpush2.bf16.msra.mxu0 0
          %761 = vmatprep.subr.bf16.mxu0 0
          %762 = vmatpush2.bf16.msra.mxu0 0
          %763 = vmatprep.subr.bf16.mxu0 0
          %764 = vmatpush2.bf16.msra.mxu0 0
          %765 = vmatprep.subr.bf16.mxu0 0
          %766 = vmatpush2.bf16.msra.mxu0 0
          %767 = vmatprep.subr.bf16.mxu0 0
          %768 = vmatpush2.bf16.msra.mxu0 0
          %769 = vmatprep.subr.bf16.mxu0 0
          %770 = vmatpush2.bf16.msra.mxu0 0
          %771 = vmatprep.subr.bf16.mxu0 0
          %772 = vmatpush2.bf16.msra.mxu0 0
          %773 = vmatprep.mubr.bf16.mxu0 0
          %774 = vmatmul.mubr.bf16.gmra.mxu0 %v629
          %v775 = vpop.f32.mrf.mxu0
          %v776 = vadd.f32 %v558, %v775
          %v777 = vpop.f32.mrf.mxu0
          %v778 = vadd.f32 %v562, %v777
          %v779 = vpop.f32.mrf.mxu0
          %v780 = vadd.f32 %v558, %v779
          %v781 = vpop.f32.mrf.mxu0
          %v782 = vadd.f32 %v562, %v781
          %783 = vmatprep.mubr.bf16.mxu0 0
          %784 = vmatmul.mubr.bf16.gmra.mxu0 %v630
          %v785 = vpop.f32.mrf.mxu0
          %v786 = vadd.f32 %v558, %v785
          %v787 = vpop.f32.mrf.mxu0
          %v788 = vadd.f32 %v562, %v787
          %v789 = vpop.f32.mrf.mxu0
          %v790 = vadd.f32 %v558, %v789
          %v791 = vpop.f32.mrf.mxu0
          %v792 = vadd.f32 %v562, %v791
          %793 = vmatprep.mubr.bf16.mxu0 0
          %794 = vmatmul.mubr.bf16.gmra.mxu0 %v631
          %v795 = vpop.f32.mrf.mxu0
          %v796 = vadd.f32 %v558, %v795
          %v797 = vpop.f32.mrf.mxu0
          %v798 = vadd.f32 %v562, %v797
          %v799 = vpop.f32.mrf.mxu0
          %v800 = vadd.f32 %v558, %v799
          %v801 = vpop.f32.mrf.mxu0
          %v802 = vadd.f32 %v562, %v801
          %803 = vmatprep.mubr.bf16.mxu0 0
          %804 = vmatmul.mubr.bf16.gmra.mxu0 %v632
          %v805 = vpop.f32.mrf.mxu0
          %v806 = vadd.f32 %v558, %v805
          %v807 = vpop.f32.mrf.mxu0
          %v808 = vadd.f32 %v562, %v807
          %v809 = vpop.f32.mrf.mxu0
          %v810 = vadd.f32 %v558, %v809
          %v811 = vpop.f32.mrf.mxu0
          %v812 = vadd.f32 %v562, %v811
          %813 = vmatprep.mubr.bf16.mxu0 0
          %814 = vmatmul.mubr.bf16.gmra.mxu0 %v633
          %v815 = vpop.f32.mrf.mxu0
          %v816 = vadd.f32 %v558, %v815
          %v817 = vpop.f32.mrf.mxu0
          %v818 = vadd.f32 %v562, %v817
          %v819 = vpop.f32.mrf.mxu0
          %v820 = vadd.f32 %v558, %v819
          %v821 = vpop.f32.mrf.mxu0
          %v822 = vadd.f32 %v562, %v821
          %823 = vmatprep.mubr.bf16.mxu0 0
          %824 = vmatmul.mubr.bf16.gmra.mxu0 %v634
          %v825 = vpop.f32.mrf.mxu0
          %v826 = vadd.f32 %v558, %v825
          %v827 = vpop.f32.mrf.mxu0
          %v828 = vadd.f32 %v562, %v827
          %v829 = vpop.f32.mrf.mxu0
          %v830 = vadd.f32 %v558, %v829
          %v831 = vpop.f32.mrf.mxu0
          %v832 = vadd.f32 %v562, %v831
          %833 = vmatprep.mubr.bf16.mxu0 0
          %834 = vmatmul.mubr.bf16.gmra.mxu0 %v635
          %v835 = vpop.f32.mrf.mxu0
          %v836 = vadd.f32 %v558, %v835
          %v837 = vpop.f32.mrf.mxu0
          %v838 = vadd.f32 %v562, %v837
          %v839 = vpop.f32.mrf.mxu0
          %v840 = vadd.f32 %v558, %v839
          %v841 = vpop.f32.mrf.mxu0
          %v842 = vadd.f32 %v562, %v841
          %843 = vmatprep.mubr.bf16.mxu0 0
          %844 = vmatmul.mubr.bf16.gmra.mxu0 %v636
          %v845 = vpop.f32.mrf.mxu0
          %v846 = vadd.f32 %v558, %v845
          %v847 = vpop.f32.mrf.mxu0
          %v848 = vadd.f32 %v562, %v847
          %v849 = vpop.f32.mrf.mxu0
          %v850 = vadd.f32 %v558, %v849
          %v851 = vpop.f32.mrf.mxu0
          %v852 = vadd.f32 %v562, %v851
          %853 = vmatprep.mubr.bf16.mxu0 0
          %854 = vmatmul.mubr.bf16.gmra.mxu0 %v637
          %v855 = vpop.f32.mrf.mxu0
          %v856 = vadd.f32 %v558, %v855
          %v857 = vpop.f32.mrf.mxu0
          %v858 = vadd.f32 %v562, %v857
          %v859 = vpop.f32.mrf.mxu0
          %v860 = vadd.f32 %v558, %v859
          %v861 = vpop.f32.mrf.mxu0
          %v862 = vadd.f32 %v562, %v861
          %863 = vmatprep.mubr.bf16.mxu0 0
          %864 = vmatmul.mubr.bf16.gmra.mxu0 %v638
          %v865 = vpop.f32.mrf.mxu0
          %v866 = vadd.f32 %v558, %v865
          %v867 = vpop.f32.mrf.mxu0
          %v868 = vadd.f32 %v562, %v867
          %v869 = vpop.f32.mrf.mxu0
          %v870 = vadd.f32 %v558, %v869
          %v871 = vpop.f32.mrf.mxu0
          %v872 = vadd.f32 %v562, %v871
          %873 = vmatprep.mubr.bf16.mxu0 0
          %874 = vmatmul.mubr.bf16.gmra.mxu0 %v639
          %v875 = vpop.f32.mrf.mxu0
          %v876 = vadd.f32 %v558, %v875
          %v877 = vpop.f32.mrf.mxu0
          %v878 = vadd.f32 %v562, %v877
          %v879 = vpop.f32.mrf.mxu0
          %v880 = vadd.f32 %v558, %v879
          %v881 = vpop.f32.mrf.mxu0
          %v882 = vadd.f32 %v562, %v881
          %883 = vmatprep.mubr.bf16.mxu0 0
          %884 = vmatmul.mubr.bf16.gmra.mxu0 %v640
          %v885 = vpop.f32.mrf.mxu0
          %v886 = vadd.f32 %v558, %v885
          %v887 = vpop.f32.mrf.mxu0
          %v888 = vadd.f32 %v562, %v887
          %v889 = vpop.f32.mrf.mxu0
          %v890 = vadd.f32 %v558, %v889
          %v891 = vpop.f32.mrf.mxu0
          %v892 = vadd.f32 %v562, %v891
          %893 = vmatprep.mubr.bf16.mxu0 0
          %894 = vmatmul.mubr.bf16.gmra.mxu0 %v641
          %v895 = vpop.f32.mrf.mxu0
          %v896 = vadd.f32 %v558, %v895
          %v897 = vpop.f32.mrf.mxu0
          %v898 = vadd.f32 %v562, %v897
          %v899 = vpop.f32.mrf.mxu0
          %v900 = vadd.f32 %v558, %v899
          %v901 = vpop.f32.mrf.mxu0
          %v902 = vadd.f32 %v562, %v901
          %903 = vmatprep.mubr.bf16.mxu0 0
          %904 = vmatmul.mubr.bf16.gmra.mxu0 %v642
          %v905 = vpop.f32.mrf.mxu0
          %v906 = vadd.f32 %v558, %v905
          %v907 = vpop.f32.mrf.mxu0
          %v908 = vadd.f32 %v562, %v907
          %v909 = vpop.f32.mrf.mxu0
          %v910 = vadd.f32 %v558, %v909
          %v911 = vpop.f32.mrf.mxu0
          %v912 = vadd.f32 %v562, %v911
          %913 = vmatprep.mubr.bf16.mxu0 0
          %914 = vmatmul.mubr.bf16.gmra.mxu0 %v643
          %v915 = vpop.f32.mrf.mxu0
          %v916 = vadd.f32 %v558, %v915
          %v917 = vpop.f32.mrf.mxu0
          %v918 = vadd.f32 %v562, %v917
          %v919 = vpop.f32.mrf.mxu0
          %v920 = vadd.f32 %v558, %v919
          %v921 = vpop.f32.mrf.mxu0
          %v922 = vadd.f32 %v562, %v921
          %923 = vmatprep.mubr.bf16.mxu0 0
          %924 = vmatmul.mubr.bf16.gmra.mxu0 %v644
          %v925 = vpop.f32.mrf.mxu0
          %v926 = vadd.f32 %v558, %v925
          %v927 = vpop.f32.mrf.mxu0
          %v928 = vadd.f32 %v562, %v927
          %v929 = vpop.f32.mrf.mxu0
          %v930 = vadd.f32 %v558, %v929
          %v931 = vpop.f32.mrf.mxu0
          %v932 = vadd.f32 %v562, %v931
          %933 = vdwg.mxu0
          %v934 = vmax.f32 %v776, 0.0
          %v935 = vmax.f32 %v778, 0.0
          %v936 = vmax.f32 %v780, 0.0
          %v937 = vmax.f32 %v782, 0.0
          %v938 = vmax.f32 %v786, 0.0
          %v939 = vmax.f32 %v788, 0.0
          %v940 = vmax.f32 %v790, 0.0
          %v941 = vmax.f32 %v792, 0.0
          %v942 = vmax.f32 %v796, 0.0
          %v943 = vmax.f32 %v798, 0.0
          %v944 = vmax.f32 %v800, 0.0
          %v945 = vmax.f32 %v802, 0.0
          %v946 = vmax.f32 %v806, 0.0
          %v947 = vmax.f32 %v808, 0.0
          %v948 = vmax.f32 %v810, 0.0
          %v949 = vmax.f32 %v812, 0.0
          %v950 = vmax.f32 %v816, 0.0
          %v951 = vmax.f32 %v818, 0.0
          %v952 = vmax.f32 %v820, 0.0
          %v953 = vmax.f32 %v822, 0.0
          %v954 = vmax.f32 %v826, 0.0
          %v955 = vmax.f32 %v828, 0.0
          %v956 = vmax.f32 %v830, 0.0
          %v957 = vmax.f32 %v832, 0.0
          %v958 = vmax.f32 %v836, 0.0
          %v959 = vmax.f32 %v838, 0.0
          %v960 = vmax.f32 %v840, 0.0
          %v961 = vmax.f32 %v842, 0.0
          %v962 = vmax.f32 %v846, 0.0
          %v963 = vmax.f32 %v848, 0.0
          %v964 = vmax.f32 %v850, 0.0
          %v965 = vmax.f32 %v852, 0.0
          %v966 = vmax.f32 %v856, 0.0
          %v967 = vmax.f32 %v858, 0.0
          %v968 = vmax.f32 %v860, 0.0
          %v969 = vmax.f32 %v862, 0.0
          %v970 = vmax.f32 %v866, 0.0
          %v971 = vmax.f32 %v868, 0.0
          %v972 = vmax.f32 %v870, 0.0
          %v973 = vmax.f32 %v872, 0.0
          %v974 = vmax.f32 %v876, 0.0
          %v975 = vmax.f32 %v878, 0.0
          %v976 = vmax.f32 %v880, 0.0
          %v977 = vmax.f32 %v882, 0.0
          %v978 = vmax.f32 %v886, 0.0
          %v979 = vmax.f32 %v888, 0.0
          %v980 = vmax.f32 %v890, 0.0
          %v981 = vmax.f32 %v892, 0.0
          %v982 = vmax.f32 %v896, 0.0
          %v983 = vmax.f32 %v898, 0.0
          %v984 = vmax.f32 %v900, 0.0
          %v985 = vmax.f32 %v902, 0.0
          %v986 = vmax.f32 %v906, 0.0
          %v987 = vmax.f32 %v908, 0.0
          %v988 = vmax.f32 %v910, 0.0
          %v989 = vmax.f32 %v912, 0.0
          %v990 = vmax.f32 %v916, 0.0
          %v991 = vmax.f32 %v918, 0.0
          %v992 = vmax.f32 %v920, 0.0
          %v993 = vmax.f32 %v922, 0.0
          %v994 = vmax.f32 %v926, 0.0
          %v995 = vmax.f32 %v928, 0.0
          %v996 = vmax.f32 %v930, 0.0
          %v997 = vmax.f32 %v932, 0.0
          %998 = vst [vmem:[#allocation2] sm:$0xff] %v934
          %999 = vst [vmem:[#allocation2 + $0x8] sm:$0xff] %v935
          %1000 = vst [vmem:[#allocation2 + $0x10] sm:$0xff] %v936
          %1001 = vst [vmem:[#allocation2 + $0x18] sm:$0xff] %v937
          %1002 = vst [vmem:[#allocation2 + $0x20] sm:$0xff] %v938
          %1003 = vst [vmem:[#allocation2 + $0x28] sm:$0xff] %v939
          %1004 = vst [vmem:[#allocation2 + $0x30] sm:$0xff] %v940
          %1005 = vst [vmem:[#allocation2 + $0x38] sm:$0xff] %v941
          %1006 = vst [vmem:[#allocation2 + $0x40] sm:$0xff] %v942
          %1007 = vst [vmem:[#allocation2 + $0x48] sm:$0xff] %v943
          %1008 = vst [vmem:[#allocation2 + $0x50] sm:$0xff] %v944
          %1009 = vst [vmem:[#allocation2 + $0x58] sm:$0xff] %v945
          %1010 = vst [vmem:[#allocation2 + $0x60] sm:$0xff] %v946
          %1011 = vst [vmem:[#allocation2 + $0x68] sm:$0xff] %v947
          %1012 = vst [vmem:[#allocation2 + $0x70] sm:$0xff] %v948
          %1013 = vst [vmem:[#allocation2 + $0x78] sm:$0xff] %v949
          %1014 = vst [vmem:[#allocation2 + $0x80] sm:$0xff] %v950
          %1015 = vst [vmem:[#allocation2 + $0x88] sm:$0xff] %v951
          %1016 = vst [vmem:[#allocation2 + $0x90] sm:$0xff] %v952
          %1017 = vst [vmem:[#allocation2 + $0x98] sm:$0xff] %v953
          %1018 = vst [vmem:[#allocation2 + $0xa0] sm:$0xff] %v954
          %1019 = vst [vmem:[#allocation2 + $0xa8] sm:$0xff] %v955
          %1020 = vst [vmem:[#allocation2 + $0xb0] sm:$0xff] %v956
          %1021 = vst [vmem:[#allocation2 + $0xb8] sm:$0xff] %v957
          %1022 = vst [vmem:[#allocation2 + $0xc0] sm:$0xff] %v958
          %1023 = vst [vmem:[#allocation2 + $0xc8] sm:$0xff] %v959
          %1024 = vst [vmem:[#allocation2 + $0xd0] sm:$0xff] %v960
          %1025 = vst [vmem:[#allocation2 + $0xd8] sm:$0xff] %v961
          %1026 = vst [vmem:[#allocation2 + $0xe0] sm:$0xff] %v962
          %1027 = vst [vmem:[#allocation2 + $0xe8] sm:$0xff] %v963
          %1028 = vst [vmem:[#allocation2 + $0xf0] sm:$0xff] %v964
          %1029 = vst [vmem:[#allocation2 + $0xf8] sm:$0xff] %v965
          %1030 = vst [vmem:[#allocation2 + $0x100] sm:$0xff] %v966
          %1031 = vst [vmem:[#allocation2 + $0x108] sm:$0xff] %v967
          %1032 = vst [vmem:[#allocation2 + $0x110] sm:$0xff] %v968
          %1033 = vst [vmem:[#allocation2 + $0x118] sm:$0xff] %v969
          %1034 = vst [vmem:[#allocation2 + $0x120] sm:$0xff] %v970
          %1035 = vst [vmem:[#allocation2 + $0x128] sm:$0xff] %v971
          %1036 = vst [vmem:[#allocation2 + $0x130] sm:$0xff] %v972
          %1037 = vst [vmem:[#allocation2 + $0x138] sm:$0xff] %v973
          %1038 = vst [vmem:[#allocation2 + $0x140] sm:$0xff] %v974
          %1039 = vst [vmem:[#allocation2 + $0x148] sm:$0xff] %v975
          %1040 = vst [vmem:[#allocation2 + $0x150] sm:$0xff] %v976
          %1041 = vst [vmem:[#allocation2 + $0x158] sm:$0xff] %v977
          %1042 = vst [vmem:[#allocation2 + $0x160] sm:$0xff] %v978
          %1043 = vst [vmem:[#allocation2 + $0x168] sm:$0xff] %v979
          %1044 = vst [vmem:[#allocation2 + $0x170] sm:$0xff] %v980
          %1045 = vst [vmem:[#allocation2 + $0x178] sm:$0xff] %v981
          %1046 = vst [vmem:[#allocation2 + $0x180] sm:$0xff] %v982
          %1047 = vst [vmem:[#allocation2 + $0x188] sm:$0xff] %v983
          %1048 = vst [vmem:[#allocation2 + $0x190] sm:$0xff] %v984
          %1049 = vst [vmem:[#allocation2 + $0x198] sm:$0xff] %v985
          %1050 = vst [vmem:[#allocation2 + $0x1a0] sm:$0xff] %v986
          %1051 = vst [vmem:[#allocation2 + $0x1a8] sm:$0xff] %v987
          %1052 = vst [vmem:[#allocation2 + $0x1b0] sm:$0xff] %v988
          %1053 = vst [vmem:[#allocation2 + $0x1b8] sm:$0xff] %v989
          %1054 = vst [vmem:[#allocation2 + $0x1c0] sm:$0xff] %v990
          %1055 = vst [vmem:[#allocation2 + $0x1c8] sm:$0xff] %v991
          %1056 = vst [vmem:[#allocation2 + $0x1d0] sm:$0xff] %v992
          %1057 = vst [vmem:[#allocation2 + $0x1d8] sm:$0xff] %v993
          %1058 = vst [vmem:[#allocation2 + $0x1e0] sm:$0xff] %v994
          %1059 = vst [vmem:[#allocation2 + $0x1e8] sm:$0xff] %v995
          %1060 = vst [vmem:[#allocation2 + $0x1f0] sm:$0xff] %v996
          %1061 = vst [vmem:[#allocation2 + $0x1f8] sm:$0xff] %v997
          %v1062 = vpack.c.bf16 %v936, %v934
          %v1063 = vpack.c.bf16 %v937, %v935
          %v1064 = vpack.c.bf16 %v940, %v938
          %v1065 = vpack.c.bf16 %v941, %v939
          %v1066 = vpack.c.bf16 %v944, %v942
          %v1067 = vpack.c.bf16 %v945, %v943
          %v1068 = vpack.c.bf16 %v948, %v946
          %v1069 = vpack.c.bf16 %v949, %v947
          %v1070 = vpack.c.bf16 %v952, %v950
          %v1071 = vpack.c.bf16 %v953, %v951
          %v1072 = vpack.c.bf16 %v956, %v954
          %v1073 = vpack.c.bf16 %v957, %v955
          %v1074 = vpack.c.bf16 %v960, %v958
          %v1075 = vpack.c.bf16 %v961, %v959
          %v1076 = vpack.c.bf16 %v964, %v962
          %v1077 = vpack.c.bf16 %v965, %v963
          %v1078 = vpack.c.bf16 %v968, %v966
          %v1079 = vpack.c.bf16 %v969, %v967
          %v1080 = vpack.c.bf16 %v972, %v970
          %v1081 = vpack.c.bf16 %v973, %v971
          %v1082 = vpack.c.bf16 %v976, %v974
          %v1083 = vpack.c.bf16 %v977, %v975
          %v1084 = vpack.c.bf16 %v980, %v978
          %v1085 = vpack.c.bf16 %v981, %v979
          %v1086 = vpack.c.bf16 %v984, %v982
          %v1087 = vpack.c.bf16 %v985, %v983
          %v1088 = vpack.c.bf16 %v988, %v986
          %v1089 = vpack.c.bf16 %v989, %v987
          %v1090 = vpack.c.bf16 %v992, %v990
          %v1091 = vpack.c.bf16 %v993, %v991
          %v1092 = vpack.c.bf16 %v996, %v994
          %v1093 = vpack.c.bf16 %v997, %v995
          %v1126 = vunpack.c.l.b16 %v1062
          %v1127 = vunpack.c.l.b16 %v1063
          %v1128 = vunpack.c.h.b16 %v1062
          %v1129 = vunpack.c.h.b16 %v1063
          %v1130 = vunpack.c.l.b16 %v1064
          %v1131 = vunpack.c.l.b16 %v1065
          %v1132 = vunpack.c.h.b16 %v1064
          %v1133 = vunpack.c.h.b16 %v1065
          %v1134 = vunpack.c.l.b16 %v1066
          %v1135 = vunpack.c.l.b16 %v1067
          %v1136 = vunpack.c.h.b16 %v1066
          %v1137 = vunpack.c.h.b16 %v1067
          %v1138 = vunpack.c.l.b16 %v1068
          %v1139 = vunpack.c.l.b16 %v1069
          %v1140 = vunpack.c.h.b16 %v1068
          %v1141 = vunpack.c.h.b16 %v1069
          %v1142 = vunpack.c.l.b16 %v1070
          %v1143 = vunpack.c.l.b16 %v1071
          %v1144 = vunpack.c.h.b16 %v1070
          %v1145 = vunpack.c.h.b16 %v1071
          %v1146 = vunpack.c.l.b16 %v1072
          %v1147 = vunpack.c.l.b16 %v1073
          %v1148 = vunpack.c.h.b16 %v1072
          %v1149 = vunpack.c.h.b16 %v1073
          %v1150 = vunpack.c.l.b16 %v1074
          %v1151 = vunpack.c.l.b16 %v1075
          %v1152 = vunpack.c.h.b16 %v1074
          %v1153 = vunpack.c.h.b16 %v1075
          %v1154 = vunpack.c.l.b16 %v1076
          %v1155 = vunpack.c.l.b16 %v1077
          %v1156 = vunpack.c.h.b16 %v1076
          %v1157 = vunpack.c.h.b16 %v1077
          %v1158 = vunpack.c.l.b16 %v1078
          %v1159 = vunpack.c.l.b16 %v1079
          %v1160 = vunpack.c.h.b16 %v1078
          %v1161 = vunpack.c.h.b16 %v1079
          %v1162 = vunpack.c.l.b16 %v1080
          %v1163 = vunpack.c.l.b16 %v1081
          %v1164 = vunpack.c.h.b16 %v1080
          %v1165 = vunpack.c.h.b16 %v1081
          %v1166 = vunpack.c.l.b16 %v1082
          %v1167 = vunpack.c.l.b16 %v1083
          %v1168 = vunpack.c.h.b16 %v1082
          %v1169 = vunpack.c.h.b16 %v1083
          %v1170 = vunpack.c.l.b16 %v1084
          %v1171 = vunpack.c.l.b16 %v1085
          %v1172 = vunpack.c.h.b16 %v1084
          %v1173 = vunpack.c.h.b16 %v1085
          %v1174 = vunpack.c.l.b16 %v1086
          %v1175 = vunpack.c.l.b16 %v1087
          %v1176 = vunpack.c.h.b16 %v1086
          %v1177 = vunpack.c.h.b16 %v1087
          %v1178 = vunpack.c.l.b16 %v1088
          %v1179 = vunpack.c.l.b16 %v1089
          %v1180 = vunpack.c.h.b16 %v1088
          %v1181 = vunpack.c.h.b16 %v1089
          %v1182 = vunpack.c.l.b16 %v1090
          %v1183 = vunpack.c.l.b16 %v1091
          %v1184 = vunpack.c.h.b16 %v1090
          %v1185 = vunpack.c.h.b16 %v1091
          %v1186 = vunpack.c.l.b16 %v1092
          %v1187 = vunpack.c.l.b16 %v1093
          %v1188 = vunpack.c.h.b16 %v1092
          %v1189 = vunpack.c.h.b16 %v1093
          %v1190 = vpack.c.b16 %v1127, %v1126
          %v1191 = vpack.c.b16 %v1129, %v1128
          %v1192 = vpack.c.b16 %v1131, %v1130
          %v1193 = vpack.c.b16 %v1133, %v1132
          %v1194 = vpack.c.b16 %v1135, %v1134
          %v1195 = vpack.c.b16 %v1137, %v1136
          %v1196 = vpack.c.b16 %v1139, %v1138
          %v1197 = vpack.c.b16 %v1141, %v1140
          %v1198 = vpack.c.b16 %v1143, %v1142
          %v1199 = vpack.c.b16 %v1145, %v1144
          %v1200 = vpack.c.b16 %v1147, %v1146
          %v1201 = vpack.c.b16 %v1149, %v1148
          %v1202 = vpack.c.b16 %v1151, %v1150
          %v1203 = vpack.c.b16 %v1153, %v1152
          %v1204 = vpack.c.b16 %v1155, %v1154
          %v1205 = vpack.c.b16 %v1157, %v1156
          %v1206 = vpack.c.b16 %v1159, %v1158
          %v1207 = vpack.c.b16 %v1161, %v1160
          %v1208 = vpack.c.b16 %v1163, %v1162
          %v1209 = vpack.c.b16 %v1165, %v1164
          %v1210 = vpack.c.b16 %v1167, %v1166
          %v1211 = vpack.c.b16 %v1169, %v1168
          %v1212 = vpack.c.b16 %v1171, %v1170
          %v1213 = vpack.c.b16 %v1173, %v1172
          %v1214 = vpack.c.b16 %v1175, %v1174
          %v1215 = vpack.c.b16 %v1177, %v1176
          %v1216 = vpack.c.b16 %v1179, %v1178
          %v1217 = vpack.c.b16 %v1181, %v1180
          %v1218 = vpack.c.b16 %v1183, %v1182
          %v1219 = vpack.c.b16 %v1185, %v1184
          %v1220 = vpack.c.b16 %v1187, %v1186
          %v1221 = vpack.c.b16 %v1189, %v1188
          %1254 = vst [vmem:[#allocation3] sm:$0xff] %v1190
          %1255 = vst [vmem:[#allocation3 + $0x8] sm:$0xff] %v1191
          %1256 = vst [vmem:[#allocation3 + $0x10] sm:$0xff] %v1192
          %1257 = vst [vmem:[#allocation3 + $0x18] sm:$0xff] %v1193
          %1258 = vst [vmem:[#allocation3 + $0x20] sm:$0xff] %v1194
          %1259 = vst [vmem:[#allocation3 + $0x28] sm:$0xff] %v1195
          %1260 = vst [vmem:[#allocation3 + $0x30] sm:$0xff] %v1196
          %1261 = vst [vmem:[#allocation3 + $0x38] sm:$0xff] %v1197
          %1262 = vst [vmem:[#allocation3 + $0x40] sm:$0xff] %v1198
          %1263 = vst [vmem:[#allocation3 + $0x48] sm:$0xff] %v1199
          %1264 = vst [vmem:[#allocation3 + $0x50] sm:$0xff] %v1200
          %1265 = vst [vmem:[#allocation3 + $0x58] sm:$0xff] %v1201
          %1266 = vst [vmem:[#allocation3 + $0x60] sm:$0xff] %v1202
          %1267 = vst [vmem:[#allocation3 + $0x68] sm:$0xff] %v1203
          %1268 = vst [vmem:[#allocation3 + $0x70] sm:$0xff] %v1204
          %1269 = vst [vmem:[#allocation3 + $0x78] sm:$0xff] %v1205
          %1270 = vst [vmem:[#allocation3 + $0x80] sm:$0xff] %v1206
          %1271 = vst [vmem:[#allocation3 + $0x88] sm:$0xff] %v1207
          %1272 = vst [vmem:[#allocation3 + $0x90] sm:$0xff] %v1208
          %1273 = vst [vmem:[#allocation3 + $0x98] sm:$0xff] %v1209
          %1274 = vst [vmem:[#allocation3 + $0xa0] sm:$0xff] %v1210
          %1275 = vst [vmem:[#allocation3 + $0xa8] sm:$0xff] %v1211
          %1276 = vst [vmem:[#allocation3 + $0xb0] sm:$0xff] %v1212
          %1277 = vst [vmem:[#allocation3 + $0xb8] sm:$0xff] %v1213
          %1278 = vst [vmem:[#allocation3 + $0xc0] sm:$0xff] %v1214
          %1279 = vst [vmem:[#allocation3 + $0xc8] sm:$0xff] %v1215
          %1280 = vst [vmem:[#allocation3 + $0xd0] sm:$0xff] %v1216
          %1281 = vst [vmem:[#allocation3 + $0xd8] sm:$0xff] %v1217
          %1282 = vst [vmem:[#allocation3 + $0xe0] sm:$0xff] %v1218
          %1283 = vst [vmem:[#allocation3 + $0xe8] sm:$0xff] %v1219
          %1284 = vst [vmem:[#allocation3 + $0xf0] sm:$0xff] %v1220
          %1285 = vst [vmem:[#allocation3 + $0xf8] sm:$0xff] %v1221
        $region84: #{tpu_custom_call.1} parent=55 // pred_fallthru
          _
        %v1286 = vld [vmem:[#allocation2] sm:$0xff]
        %v1287 = vld [vmem:[#allocation2 + $0x8] sm:$0xff]
        %v1288 = vld [vmem:[#allocation2 + $0x10] sm:$0xff]
        %v1289 = vld [vmem:[#allocation2 + $0x18] sm:$0xff]
        %v1290 = vld [vmem:[#allocation2 + $0x20] sm:$0xff]
        %v1291 = vld [vmem:[#allocation2 + $0x28] sm:$0xff]
        %v1292 = vld [vmem:[#allocation2 + $0x30] sm:$0xff]
        %v1293 = vld [vmem:[#allocation2 + $0x38] sm:$0xff]
        %v1294 = vld [vmem:[#allocation2 + $0x40] sm:$0xff]
        %v1295 = vld [vmem:[#allocation2 + $0x48] sm:$0xff]
        %v1296 = vld [vmem:[#allocation2 + $0x50] sm:$0xff]
        %v1297 = vld [vmem:[#allocation2 + $0x58] sm:$0xff]
        %v1298 = vld [vmem:[#allocation2 + $0x60] sm:$0xff]
        %v1299 = vld [vmem:[#allocation2 + $0x68] sm:$0xff]
        %v1300 = vld [vmem:[#allocation2 + $0x70] sm:$0xff]
        %v1301 = vld [vmem:[#allocation2 + $0x78] sm:$0xff]
        %v1302 = vld [vmem:[#allocation2 + $0x80] sm:$0xff]
        %v1303 = vld [vmem:[#allocation2 + $0x88] sm:$0xff]
        %v1304 = vld [vmem:[#allocation2 + $0x90] sm:$0xff]
        %v1305 = vld [vmem:[#allocation2 + $0x98] sm:$0xff]
        %v1306 = vld [vmem:[#allocation2 + $0xa0] sm:$0xff]
        %v1307 = vld [vmem:[#allocation2 + $0xa8] sm:$0xff]
        %v1308 = vld [vmem:[#allocation2 + $0xb0] sm:$0xff]
        %v1309 = vld [vmem:[#allocation2 + $0xb8] sm:$0xff]
        %v1310 = vld [vmem:[#allocation2 + $0xc0] sm:$0xff]
        %v1311 = vld [vmem:[#allocation2 + $0xc8] sm:$0xff]
        %v1312 = vld [vmem:[#allocation2 + $0xd0] sm:$0xff]
        %v1313 = vld [vmem:[#allocation2 + $0xd8] sm:$0xff]
        %v1314 = vld [vmem:[#allocation2 + $0xe0] sm:$0xff]
        %v1315 = vld [vmem:[#allocation2 + $0xe8] sm:$0xff]
        %v1316 = vld [vmem:[#allocation2 + $0xf0] sm:$0xff]
        %v1317 = vld [vmem:[#allocation2 + $0xf8] sm:$0xff]
        %v1318 = vld [vmem:[#allocation2 + $0x100] sm:$0xff]
        %v1319 = vld [vmem:[#allocation2 + $0x108] sm:$0xff]
        %v1320 = vld [vmem:[#allocation2 + $0x110] sm:$0xff]
        %v1321 = vld [vmem:[#allocation2 + $0x118] sm:$0xff]
        %v1322 = vld [vmem:[#allocation2 + $0x120] sm:$0xff]
        %v1323 = vld [vmem:[#allocation2 + $0x128] sm:$0xff]
        %v1324 = vld [vmem:[#allocation2 + $0x130] sm:$0xff]
        %v1325 = vld [vmem:[#allocation2 + $0x138] sm:$0xff]
        %v1326 = vld [vmem:[#allocation2 + $0x140] sm:$0xff]
        %v1327 = vld [vmem:[#allocation2 + $0x148] sm:$0xff]
        %v1328 = vld [vmem:[#allocation2 + $0x150] sm:$0xff]
        %v1329 = vld [vmem:[#allocation2 + $0x158] sm:$0xff]
        %v1330 = vld [vmem:[#allocation2 + $0x160] sm:$0xff]
        %v1331 = vld [vmem:[#allocation2 + $0x168] sm:$0xff]
        %v1332 = vld [vmem:[#allocation2 + $0x170] sm:$0xff]
        %v1333 = vld [vmem:[#allocation2 + $0x178] sm:$0xff]
        %v1334 = vld [vmem:[#allocation2 + $0x180] sm:$0xff]
        %v1335 = vld [vmem:[#allocation2 + $0x188] sm:$0xff]
        %v1336 = vld [vmem:[#allocation2 + $0x190] sm:$0xff]
        %v1337 = vld [vmem:[#allocation2 + $0x198] sm:$0xff]
        %v1338 = vld [vmem:[#allocation2 + $0x1a0] sm:$0xff]
        %v1339 = vld [vmem:[#allocation2 + $0x1a8] sm:$0xff]
        %v1340 = vld [vmem:[#allocation2 + $0x1b0] sm:$0xff]
        %v1341 = vld [vmem:[#allocation2 + $0x1b8] sm:$0xff]
        %v1342 = vld [vmem:[#allocation2 + $0x1c0] sm:$0xff]
        %v1343 = vld [vmem:[#allocation2 + $0x1c8] sm:$0xff]
        %v1344 = vld [vmem:[#allocation2 + $0x1d0] sm:$0xff]
        %v1345 = vld [vmem:[#allocation2 + $0x1d8] sm:$0xff]
        %v1346 = vld [vmem:[#allocation2 + $0x1e0] sm:$0xff]
        %v1347 = vld [vmem:[#allocation2 + $0x1e8] sm:$0xff]
        %v1348 = vld [vmem:[#allocation2 + $0x1f0] sm:$0xff]
        %v1349 = vld [vmem:[#allocation2 + $0x1f8] sm:$0xff]
        %v1350 = vld [vmem:[#allocation3] sm:$0xff]
        %v1351 = vld [vmem:[#allocation3 + $0x8] sm:$0xff]
        %v1352 = vld [vmem:[#allocation3 + $0x10] sm:$0xff]
        %v1353 = vld [vmem:[#allocation3 + $0x18] sm:$0xff]
        %v1354 = vld [vmem:[#allocation3 + $0x20] sm:$0xff]
        %v1355 = vld [vmem:[#allocation3 + $0x28] sm:$0xff]
        %v1356 = vld [vmem:[#allocation3 + $0x30] sm:$0xff]
        %v1357 = vld [vmem:[#allocation3 + $0x38] sm:$0xff]
        %v1358 = vld [vmem:[#allocation3 + $0x40] sm:$0xff]
        %v1359 = vld [vmem:[#allocation3 + $0x48] sm:$0xff]
        %v1360 = vld [vmem:[#allocation3 + $0x50] sm:$0xff]
        %v1361 = vld [vmem:[#allocation3 + $0x58] sm:$0xff]
        %v1362 = vld [vmem:[#allocation3 + $0x60] sm:$0xff]
        %v1363 = vld [vmem:[#allocation3 + $0x68] sm:$0xff]
        %v1364 = vld [vmem:[#allocation3 + $0x70] sm:$0xff]
        %v1365 = vld [vmem:[#allocation3 + $0x78] sm:$0xff]
        %v1366 = vld [vmem:[#allocation3 + $0x80] sm:$0xff]
        %v1367 = vld [vmem:[#allocation3 + $0x88] sm:$0xff]
        %v1368 = vld [vmem:[#allocation3 + $0x90] sm:$0xff]
        %v1369 = vld [vmem:[#allocation3 + $0x98] sm:$0xff]
        %v1370 = vld [vmem:[#allocation3 + $0xa0] sm:$0xff]
        %v1371 = vld [vmem:[#allocation3 + $0xa8] sm:$0xff]
        %v1372 = vld [vmem:[#allocation3 + $0xb0] sm:$0xff]
        %v1373 = vld [vmem:[#allocation3 + $0xb8] sm:$0xff]
        %v1374 = vld [vmem:[#allocation3 + $0xc0] sm:$0xff]
        %v1375 = vld [vmem:[#allocation3 + $0xc8] sm:$0xff]
        %v1376 = vld [vmem:[#allocation3 + $0xd0] sm:$0xff]
        %v1377 = vld [vmem:[#allocation3 + $0xd8] sm:$0xff]
        %v1378 = vld [vmem:[#allocation3 + $0xe0] sm:$0xff]
        %v1379 = vld [vmem:[#allocation3 + $0xe8] sm:$0xff]
        %v1380 = vld [vmem:[#allocation3 + $0xf0] sm:$0xff]
        %v1381 = vld [vmem:[#allocation3 + $0xf8] sm:$0xff]
        %v1382 = vld [vmem:[#allocation10] sm:$0xff]
        %v1383 = vld [vmem:[#allocation10 + $0x8] sm:$0xff]
        %v1384 = vld [vmem:[#allocation10 + $0x10] sm:$0xff]
        %v1385 = vld [vmem:[#allocation10 + $0x18] sm:$0xff]
        %v1386 = vld [vmem:[#allocation10 + $0x20] sm:$0xff]
        %v1387 = vld [vmem:[#allocation10 + $0x28] sm:$0xff]
        %v1388 = vld [vmem:[#allocation10 + $0x30] sm:$0xff]
        %v1389 = vld [vmem:[#allocation10 + $0x38] sm:$0xff]
        %v1390 = vld [vmem:[#allocation10 + $0x40] sm:$0xff]
        %v1391 = vld [vmem:[#allocation10 + $0x48] sm:$0xff]
        %v1392 = vld [vmem:[#allocation10 + $0x50] sm:$0xff]
        %v1393 = vld [vmem:[#allocation10 + $0x58] sm:$0xff]
        %v1394 = vld [vmem:[#allocation10 + $0x60] sm:$0xff]
        %v1395 = vld [vmem:[#allocation10 + $0x68] sm:$0xff]
        %v1396 = vld [vmem:[#allocation10 + $0x70] sm:$0xff]
        %v1397 = vld [vmem:[#allocation10 + $0x78] sm:$0xff]
        %v1398 = vld [vmem:[#allocation10 + $0x80] sm:$0xff]
        %v1399 = vld [vmem:[#allocation10 + $0x88] sm:$0xff]
        %v1400 = vld [vmem:[#allocation10 + $0x90] sm:$0xff]
        %v1401 = vld [vmem:[#allocation10 + $0x98] sm:$0xff]
        %v1402 = vld [vmem:[#allocation10 + $0xa0] sm:$0xff]
        %v1403 = vld [vmem:[#allocation10 + $0xa8] sm:$0xff]
        %v1404 = vld [vmem:[#allocation10 + $0xb0] sm:$0xff]
        %v1405 = vld [vmem:[#allocation10 + $0xb8] sm:$0xff]
        %v1406 = vld [vmem:[#allocation10 + $0xc0] sm:$0xff]
        %v1407 = vld [vmem:[#allocation10 + $0xc8] sm:$0xff]
        %v1408 = vld [vmem:[#allocation10 + $0xd0] sm:$0xff]
        %v1409 = vld [vmem:[#allocation10 + $0xd8] sm:$0xff]
        %v1410 = vld [vmem:[#allocation10 + $0xe0] sm:$0xff]
        %v1411 = vld [vmem:[#allocation10 + $0xe8] sm:$0xff]
        %v1412 = vld [vmem:[#allocation10 + $0xf0] sm:$0xff]
        %v1413 = vld [vmem:[#allocation10 + $0xf8] sm:$0xff]
        %v1414 = vld [vmem:[%s490] sm:$0x3]
        %v1416 = vlaneseq
        %v1417 = vshrl.u32 %v1416, 7
        %v1418 = vsub.s32 0, %v1417
        %v1419 = vrot.slane %v1414, %v1418
        %v1420 = vlaneseq
        %v1421 = vshrl.u32 %v1420, 7
        %v1422 = vsub.s32 1, %v1421
        %v1423 = vrot.slane %v1414, %v1422
        %v1458 = vunpack.c.l.b16 %v1350
        %v1459 = vunpack.c.h.b16 %v1350
        %v1460 = vunpack.c.l.b16 %v1351
        %v1461 = vunpack.c.h.b16 %v1351
        %v1462 = vunpack.c.l.b16 %v1352
        %v1463 = vunpack.c.h.b16 %v1352
        %v1464 = vunpack.c.l.b16 %v1353
        %v1465 = vunpack.c.h.b16 %v1353
        %v1466 = vunpack.c.l.b16 %v1354
        %v1467 = vunpack.c.h.b16 %v1354
        %v1468 = vunpack.c.l.b16 %v1355
        %v1469 = vunpack.c.h.b16 %v1355
        %v1470 = vunpack.c.l.b16 %v1356
        %v1471 = vunpack.c.h.b16 %v1356
        %v1472 = vunpack.c.l.b16 %v1357
        %v1473 = vunpack.c.h.b16 %v1357
        %v1474 = vunpack.c.l.b16 %v1358
        %v1475 = vunpack.c.h.b16 %v1358
        %v1476 = vunpack.c.l.b16 %v1359
        %v1477 = vunpack.c.h.b16 %v1359
        %v1478 = vunpack.c.l.b16 %v1360
        %v1479 = vunpack.c.h.b16 %v1360
        %v1480 = vunpack.c.l.b16 %v1361
        %v1481 = vunpack.c.h.b16 %v1361
        %v1482 = vunpack.c.l.b16 %v1362
        %v1483 = vunpack.c.h.b16 %v1362
        %v1484 = vunpack.c.l.b16 %v1363
        %v1485 = vunpack.c.h.b16 %v1363
        %v1486 = vunpack.c.l.b16 %v1364
        %v1487 = vunpack.c.h.b16 %v1364
        %v1488 = vunpack.c.l.b16 %v1365
        %v1489 = vunpack.c.h.b16 %v1365
        %v1490 = vunpack.c.l.b16 %v1366
        %v1491 = vunpack.c.h.b16 %v1366
        %v1492 = vunpack.c.l.b16 %v1367
        %v1493 = vunpack.c.h.b16 %v1367
        %v1494 = vunpack.c.l.b16 %v1368
        %v1495 = vunpack.c.h.b16 %v1368
        %v1496 = vunpack.c.l.b16 %v1369
        %v1497 = vunpack.c.h.b16 %v1369
        %v1498 = vunpack.c.l.b16 %v1370
        %v1499 = vunpack.c.h.b16 %v1370
        %v1500 = vunpack.c.l.b16 %v1371
        %v1501 = vunpack.c.h.b16 %v1371
        %v1502 = vunpack.c.l.b16 %v1372
        %v1503 = vunpack.c.h.b16 %v1372
        %v1504 = vunpack.c.l.b16 %v1373
        %v1505 = vunpack.c.h.b16 %v1373
        %v1506 = vunpack.c.l.b16 %v1374
        %v1507 = vunpack.c.h.b16 %v1374
        %v1508 = vunpack.c.l.b16 %v1375
        %v1509 = vunpack.c.h.b16 %v1375
        %v1510 = vunpack.c.l.b16 %v1376
        %v1511 = vunpack.c.h.b16 %v1376
        %v1512 = vunpack.c.l.b16 %v1377
        %v1513 = vunpack.c.h.b16 %v1377
        %v1514 = vunpack.c.l.b16 %v1378
        %v1515 = vunpack.c.h.b16 %v1378
        %v1516 = vunpack.c.l.b16 %v1379
        %v1517 = vunpack.c.h.b16 %v1379
        %v1518 = vunpack.c.l.b16 %v1380
        %v1519 = vunpack.c.h.b16 %v1380
        %v1520 = vunpack.c.l.b16 %v1381
        %v1521 = vunpack.c.h.b16 %v1381
        %v1522 = vpack.c.b16 %v1460, %v1458
        %v1523 = vpack.c.b16 %v1461, %v1459
        %v1524 = vpack.c.b16 %v1464, %v1462
        %v1525 = vpack.c.b16 %v1465, %v1463
        %v1526 = vpack.c.b16 %v1468, %v1466
        %v1527 = vpack.c.b16 %v1469, %v1467
        %v1528 = vpack.c.b16 %v1472, %v1470
        %v1529 = vpack.c.b16 %v1473, %v1471
        %v1530 = vpack.c.b16 %v1476, %v1474
        %v1531 = vpack.c.b16 %v1477, %v1475
        %v1532 = vpack.c.b16 %v1480, %v1478
        %v1533 = vpack.c.b16 %v1481, %v1479
        %v1534 = vpack.c.b16 %v1484, %v1482
        %v1535 = vpack.c.b16 %v1485, %v1483
        %v1536 = vpack.c.b16 %v1488, %v1486
        %v1537 = vpack.c.b16 %v1489, %v1487
        %v1538 = vpack.c.b16 %v1492, %v1490
        %v1539 = vpack.c.b16 %v1493, %v1491
        %v1540 = vpack.c.b16 %v1496, %v1494
        %v1541 = vpack.c.b16 %v1497, %v1495
        %v1542 = vpack.c.b16 %v1500, %v1498
        %v1543 = vpack.c.b16 %v1501, %v1499
        %v1544 = vpack.c.b16 %v1504, %v1502
        %v1545 = vpack.c.b16 %v1505, %v1503
        %v1546 = vpack.c.b16 %v1508, %v1506
        %v1547 = vpack.c.b16 %v1509, %v1507
        %v1548 = vpack.c.b16 %v1512, %v1510
        %v1549 = vpack.c.b16 %v1513, %v1511
        %v1550 = vpack.c.b16 %v1516, %v1514
        %v1551 = vpack.c.b16 %v1517, %v1515
        %v1552 = vpack.c.b16 %v1520, %v1518
        %v1553 = vpack.c.b16 %v1521, %v1519
        %v1618 = vunpack.c.l.b16 %v1382
        %v1619 = vunpack.c.h.b16 %v1382
        %v1620 = vunpack.c.l.b16 %v1383
        %v1621 = vunpack.c.h.b16 %v1383
        %v1622 = vunpack.c.l.b16 %v1384
        %v1623 = vunpack.c.h.b16 %v1384
        %v1624 = vunpack.c.l.b16 %v1385
        %v1625 = vunpack.c.h.b16 %v1385
        %v1626 = vunpack.c.l.b16 %v1386
        %v1627 = vunpack.c.h.b16 %v1386
        %v1628 = vunpack.c.l.b16 %v1387
        %v1629 = vunpack.c.h.b16 %v1387
        %v1630 = vunpack.c.l.b16 %v1388
        %v1631 = vunpack.c.h.b16 %v1388
        %v1632 = vunpack.c.l.b16 %v1389
        %v1633 = vunpack.c.h.b16 %v1389
        %v1634 = vunpack.c.l.b16 %v1390
        %v1635 = vunpack.c.h.b16 %v1390
        %v1636 = vunpack.c.l.b16 %v1391
        %v1637 = vunpack.c.h.b16 %v1391
        %v1638 = vunpack.c.l.b16 %v1392
        %v1639 = vunpack.c.h.b16 %v1392
        %v1640 = vunpack.c.l.b16 %v1393
        %v1641 = vunpack.c.h.b16 %v1393
        %v1642 = vunpack.c.l.b16 %v1394
        %v1643 = vunpack.c.h.b16 %v1394
        %v1644 = vunpack.c.l.b16 %v1395
        %v1645 = vunpack.c.h.b16 %v1395
        %v1646 = vunpack.c.l.b16 %v1396
        %v1647 = vunpack.c.h.b16 %v1396
        %v1648 = vunpack.c.l.b16 %v1397
        %v1649 = vunpack.c.h.b16 %v1397
        %v1650 = vunpack.c.l.b16 %v1398
        %v1651 = vunpack.c.h.b16 %v1398
        %v1652 = vunpack.c.l.b16 %v1399
        %v1653 = vunpack.c.h.b16 %v1399
        %v1654 = vunpack.c.l.b16 %v1400
        %v1655 = vunpack.c.h.b16 %v1400
        %v1656 = vunpack.c.l.b16 %v1401
        %v1657 = vunpack.c.h.b16 %v1401
        %v1658 = vunpack.c.l.b16 %v1402
        %v1659 = vunpack.c.h.b16 %v1402
        %v1660 = vunpack.c.l.b16 %v1403
        %v1661 = vunpack.c.h.b16 %v1403
        %v1662 = vunpack.c.l.b16 %v1404
        %v1663 = vunpack.c.h.b16 %v1404
        %v1664 = vunpack.c.l.b16 %v1405
        %v1665 = vunpack.c.h.b16 %v1405
        %v1666 = vunpack.c.l.b16 %v1406
        %v1667 = vunpack.c.h.b16 %v1406
        %v1668 = vunpack.c.l.b16 %v1407
        %v1669 = vunpack.c.h.b16 %v1407
        %v1670 = vunpack.c.l.b16 %v1408
        %v1671 = vunpack.c.h.b16 %v1408
        %v1672 = vunpack.c.l.b16 %v1409
        %v1673 = vunpack.c.h.b16 %v1409
        %v1674 = vunpack.c.l.b16 %v1410
        %v1675 = vunpack.c.h.b16 %v1410
        %v1676 = vunpack.c.l.b16 %v1411
        %v1677 = vunpack.c.h.b16 %v1411
        %v1678 = vunpack.c.l.b16 %v1412
        %v1679 = vunpack.c.h.b16 %v1412
        %v1680 = vunpack.c.l.b16 %v1413
        %v1681 = vunpack.c.h.b16 %v1413
        %v1682 = vpack.c.b16 %v1620, %v1618
        %v1683 = vpack.c.b16 %v1621, %v1619
        %v1684 = vpack.c.b16 %v1624, %v1622
        %v1685 = vpack.c.b16 %v1625, %v1623
        %v1686 = vpack.c.b16 %v1628, %v1626
        %v1687 = vpack.c.b16 %v1629, %v1627
        %v1688 = vpack.c.b16 %v1632, %v1630
        %v1689 = vpack.c.b16 %v1633, %v1631
        %v1690 = vpack.c.b16 %v1636, %v1634
        %v1691 = vpack.c.b16 %v1637, %v1635
        %v1692 = vpack.c.b16 %v1640, %v1638
        %v1693 = vpack.c.b16 %v1641, %v1639
        %v1694 = vpack.c.b16 %v1644, %v1642
        %v1695 = vpack.c.b16 %v1645, %v1643
        %v1696 = vpack.c.b16 %v1648, %v1646
        %v1697 = vpack.c.b16 %v1649, %v1647
        %v1698 = vpack.c.b16 %v1652, %v1650
        %v1699 = vpack.c.b16 %v1653, %v1651
        %v1700 = vpack.c.b16 %v1656, %v1654
        %v1701 = vpack.c.b16 %v1657, %v1655
        %v1702 = vpack.c.b16 %v1660, %v1658
        %v1703 = vpack.c.b16 %v1661, %v1659
        %v1704 = vpack.c.b16 %v1664, %v1662
        %v1705 = vpack.c.b16 %v1665, %v1663
        %v1706 = vpack.c.b16 %v1668, %v1666
        %v1707 = vpack.c.b16 %v1669, %v1667
        %v1708 = vpack.c.b16 %v1672, %v1670
        %v1709 = vpack.c.b16 %v1673, %v1671
        %v1710 = vpack.c.b16 %v1676, %v1674
        %v1711 = vpack.c.b16 %v1677, %v1675
        %v1712 = vpack.c.b16 %v1680, %v1678
        %v1713 = vpack.c.b16 %v1681, %v1679
        %1746 = vmatprep.subr.bf16.mxu0 %v1697
        %1747 = vmatpush1.bf16.msra.mxu0 %v1696
        %1748 = vmatprep.subr.bf16.mxu0 %v1695
        %1749 = vmatpush1.bf16.msra.mxu0 %v1694
        %1750 = vmatprep.subr.bf16.mxu0 %v1693
        %1751 = vmatpush1.bf16.msra.mxu0 %v1692
        %1752 = vmatprep.subr.bf16.mxu0 %v1691
        %1753 = vmatpush1.bf16.msra.mxu0 %v1690
        %1754 = vmatprep.subr.bf16.mxu0 %v1689
        %1755 = vmatpush1.bf16.msra.mxu0 %v1688
        %1756 = vmatprep.subr.bf16.mxu0 %v1687
        %1757 = vmatpush1.bf16.msra.mxu0 %v1686
        %1758 = vmatprep.subr.bf16.mxu0 %v1685
        %1759 = vmatpush1.bf16.msra.mxu0 %v1684
        %1760 = vmatprep.subr.bf16.mxu0 %v1683
        %1761 = vmatpush1.bf16.msra.mxu0 %v1682
        %1762 = vmatprep.subr.bf16.mxu0 %v1713
        %1763 = vmatpush2.bf16.msra.mxu0 %v1712
        %1764 = vmatprep.subr.bf16.mxu0 %v1711
        %1765 = vmatpush2.bf16.msra.mxu0 %v1710
        %1766 = vmatprep.subr.bf16.mxu0 %v1709
        %1767 = vmatpush2.bf16.msra.mxu0 %v1708
        %1768 = vmatprep.subr.bf16.mxu0 %v1707
        %1769 = vmatpush2.bf16.msra.mxu0 %v1706
        %1770 = vmatprep.subr.bf16.mxu0 %v1705
        %1771 = vmatpush2.bf16.msra.mxu0 %v1704
        %1772 = vmatprep.subr.bf16.mxu0 %v1703
        %1773 = vmatpush2.bf16.msra.mxu0 %v1702
        %1774 = vmatprep.subr.bf16.mxu0 %v1701
        %1775 = vmatpush2.bf16.msra.mxu0 %v1700
        %1776 = vmatprep.subr.bf16.mxu0 %v1699
        %1777 = vmatpush2.bf16.msra.mxu0 %v1698
        %1778 = vmatprep.mubr.bf16.mxu0 %v1523
        %1779 = vmatmul.mubr.bf16.gmra.mxu0 %v1522
        %v1780 = vpop.f32.mrf.mxu0
        %v1781 = vadd.f32 %v1419, %v1780
        %v1782 = vpop.f32.mrf.mxu0
        %v1783 = vadd.f32 %v1423, %v1782
        %v1784 = vpop.f32.mrf.mxu0
        %v1785 = vadd.f32 %v1419, %v1784
        %v1786 = vpop.f32.mrf.mxu0
        %v1787 = vadd.f32 %v1423, %v1786
        %1788 = vmatprep.mubr.bf16.mxu0 %v1525
        %1789 = vmatmul.mubr.bf16.gmra.mxu0 %v1524
        %v1790 = vpop.f32.mrf.mxu0
        %v1791 = vadd.f32 %v1419, %v1790
        %v1792 = vpop.f32.mrf.mxu0
        %v1793 = vadd.f32 %v1423, %v1792
        %v1794 = vpop.f32.mrf.mxu0
        %v1795 = vadd.f32 %v1419, %v1794
        %v1796 = vpop.f32.mrf.mxu0
        %v1797 = vadd.f32 %v1423, %v1796
        %1798 = vmatprep.mubr.bf16.mxu0 %v1527
        %1799 = vmatmul.mubr.bf16.gmra.mxu0 %v1526
        %v1800 = vpop.f32.mrf.mxu0
        %v1801 = vadd.f32 %v1419, %v1800
        %v1802 = vpop.f32.mrf.mxu0
        %v1803 = vadd.f32 %v1423, %v1802
        %v1804 = vpop.f32.mrf.mxu0
        %v1805 = vadd.f32 %v1419, %v1804
        %v1806 = vpop.f32.mrf.mxu0
        %v1807 = vadd.f32 %v1423, %v1806
        %1808 = vmatprep.mubr.bf16.mxu0 %v1529
        %1809 = vmatmul.mubr.bf16.gmra.mxu0 %v1528
        %v1810 = vpop.f32.mrf.mxu0
        %v1811 = vadd.f32 %v1419, %v1810
        %v1812 = vpop.f32.mrf.mxu0
        %v1813 = vadd.f32 %v1423, %v1812
        %v1814 = vpop.f32.mrf.mxu0
        %v1815 = vadd.f32 %v1419, %v1814
        %v1816 = vpop.f32.mrf.mxu0
        %v1817 = vadd.f32 %v1423, %v1816
        %1818 = vmatprep.mubr.bf16.mxu0 %v1531
        %1819 = vmatmul.mubr.bf16.gmra.mxu0 %v1530
        %v1820 = vpop.f32.mrf.mxu0
        %v1821 = vadd.f32 %v1419, %v1820
        %v1822 = vpop.f32.mrf.mxu0
        %v1823 = vadd.f32 %v1423, %v1822
        %v1824 = vpop.f32.mrf.mxu0
        %v1825 = vadd.f32 %v1419, %v1824
        %v1826 = vpop.f32.mrf.mxu0
        %v1827 = vadd.f32 %v1423, %v1826
        %1828 = vmatprep.mubr.bf16.mxu0 %v1533
        %1829 = vmatmul.mubr.bf16.gmra.mxu0 %v1532
        %v1830 = vpop.f32.mrf.mxu0
        %v1831 = vadd.f32 %v1419, %v1830
        %v1832 = vpop.f32.mrf.mxu0
        %v1833 = vadd.f32 %v1423, %v1832
        %v1834 = vpop.f32.mrf.mxu0
        %v1835 = vadd.f32 %v1419, %v1834
        %v1836 = vpop.f32.mrf.mxu0
        %v1837 = vadd.f32 %v1423, %v1836
        %1838 = vmatprep.mubr.bf16.mxu0 %v1535
        %1839 = vmatmul.mubr.bf16.gmra.mxu0 %v1534
        %v1840 = vpop.f32.mrf.mxu0
        %v1841 = vadd.f32 %v1419, %v1840
        %v1842 = vpop.f32.mrf.mxu0
        %v1843 = vadd.f32 %v1423, %v1842
        %v1844 = vpop.f32.mrf.mxu0
        %v1845 = vadd.f32 %v1419, %v1844
        %v1846 = vpop.f32.mrf.mxu0
        %v1847 = vadd.f32 %v1423, %v1846
        %1848 = vmatprep.mubr.bf16.mxu0 %v1537
        %1849 = vmatmul.mubr.bf16.gmra.mxu0 %v1536
        %v1850 = vpop.f32.mrf.mxu0
        %v1851 = vadd.f32 %v1419, %v1850
        %v1852 = vpop.f32.mrf.mxu0
        %v1853 = vadd.f32 %v1423, %v1852
        %v1854 = vpop.f32.mrf.mxu0
        %v1855 = vadd.f32 %v1419, %v1854
        %v1856 = vpop.f32.mrf.mxu0
        %v1857 = vadd.f32 %v1423, %v1856
        %1858 = vmatprep.mubr.bf16.mxu0 %v1539
        %1859 = vmatmul.mubr.bf16.gmra.mxu0 %v1538
        %v1860 = vpop.f32.mrf.mxu0
        %v1861 = vadd.f32 %v1419, %v1860
        %v1862 = vpop.f32.mrf.mxu0
        %v1863 = vadd.f32 %v1423, %v1862
        %v1864 = vpop.f32.mrf.mxu0
        %v1865 = vadd.f32 %v1419, %v1864
        %v1866 = vpop.f32.mrf.mxu0
        %v1867 = vadd.f32 %v1423, %v1866
        %1868 = vmatprep.mubr.bf16.mxu0 %v1541
        %1869 = vmatmul.mubr.bf16.gmra.mxu0 %v1540
        %v1870 = vpop.f32.mrf.mxu0
        %v1871 = vadd.f32 %v1419, %v1870
        %v1872 = vpop.f32.mrf.mxu0
        %v1873 = vadd.f32 %v1423, %v1872
        %v1874 = vpop.f32.mrf.mxu0
        %v1875 = vadd.f32 %v1419, %v1874
        %v1876 = vpop.f32.mrf.mxu0
        %v1877 = vadd.f32 %v1423, %v1876
        %1878 = vmatprep.mubr.bf16.mxu0 %v1543
        %1879 = vmatmul.mubr.bf16.gmra.mxu0 %v1542
        %v1880 = vpop.f32.mrf.mxu0
        %v1881 = vadd.f32 %v1419, %v1880
        %v1882 = vpop.f32.mrf.mxu0
        %v1883 = vadd.f32 %v1423, %v1882
        %v1884 = vpop.f32.mrf.mxu0
        %v1885 = vadd.f32 %v1419, %v1884
        %v1886 = vpop.f32.mrf.mxu0
        %v1887 = vadd.f32 %v1423, %v1886
        %1888 = vmatprep.mubr.bf16.mxu0 %v1545
        %1889 = vmatmul.mubr.bf16.gmra.mxu0 %v1544
        %v1890 = vpop.f32.mrf.mxu0
        %v1891 = vadd.f32 %v1419, %v1890
        %v1892 = vpop.f32.mrf.mxu0
        %v1893 = vadd.f32 %v1423, %v1892
        %v1894 = vpop.f32.mrf.mxu0
        %v1895 = vadd.f32 %v1419, %v1894
        %v1896 = vpop.f32.mrf.mxu0
        %v1897 = vadd.f32 %v1423, %v1896
        %1898 = vmatprep.mubr.bf16.mxu0 %v1547
        %1899 = vmatmul.mubr.bf16.gmra.mxu0 %v1546
        %v1900 = vpop.f32.mrf.mxu0
        %v1901 = vadd.f32 %v1419, %v1900
        %v1902 = vpop.f32.mrf.mxu0
        %v1903 = vadd.f32 %v1423, %v1902
        %v1904 = vpop.f32.mrf.mxu0
        %v1905 = vadd.f32 %v1419, %v1904
        %v1906 = vpop.f32.mrf.mxu0
        %v1907 = vadd.f32 %v1423, %v1906
        %1908 = vmatprep.mubr.bf16.mxu0 %v1549
        %1909 = vmatmul.mubr.bf16.gmra.mxu0 %v1548
        %v1910 = vpop.f32.mrf.mxu0
        %v1911 = vadd.f32 %v1419, %v1910
        %v1912 = vpop.f32.mrf.mxu0
        %v1913 = vadd.f32 %v1423, %v1912
        %v1914 = vpop.f32.mrf.mxu0
        %v1915 = vadd.f32 %v1419, %v1914
        %v1916 = vpop.f32.mrf.mxu0
        %v1917 = vadd.f32 %v1423, %v1916
        %1918 = vmatprep.mubr.bf16.mxu0 %v1551
        %1919 = vmatmul.mubr.bf16.gmra.mxu0 %v1550
        %v1920 = vpop.f32.mrf.mxu0
        %v1921 = vadd.f32 %v1419, %v1920
        %v1922 = vpop.f32.mrf.mxu0
        %v1923 = vadd.f32 %v1423, %v1922
        %v1924 = vpop.f32.mrf.mxu0
        %v1925 = vadd.f32 %v1419, %v1924
        %v1926 = vpop.f32.mrf.mxu0
        %v1927 = vadd.f32 %v1423, %v1926
        %1928 = vmatprep.mubr.bf16.mxu0 %v1553
        %1929 = vmatmul.mubr.bf16.gmra.mxu0 %v1552
        %v1930 = vpop.f32.mrf.mxu0
        %v1931 = vadd.f32 %v1419, %v1930
        %v1932 = vpop.f32.mrf.mxu0
        %v1933 = vadd.f32 %v1423, %v1932
        %v1934 = vpop.f32.mrf.mxu0
        %v1935 = vadd.f32 %v1419, %v1934
        %v1936 = vpop.f32.mrf.mxu0
        %v1937 = vadd.f32 %v1423, %v1936
        %1938 = vdwg.mxu0
        %v1939 = vmax.f32 %v1781, 0.0
        %v1940 = vmax.f32 %v1783, 0.0
        %v1941 = vmax.f32 %v1785, 0.0
        %v1942 = vmax.f32 %v1787, 0.0
        %v1943 = vmax.f32 %v1791, 0.0
        %v1944 = vmax.f32 %v1793, 0.0
        %v1945 = vmax.f32 %v1795, 0.0
        %v1946 = vmax.f32 %v1797, 0.0
        %v1947 = vmax.f32 %v1801, 0.0
        %v1948 = vmax.f32 %v1803, 0.0
        %v1949 = vmax.f32 %v1805, 0.0
        %v1950 = vmax.f32 %v1807, 0.0
        %v1951 = vmax.f32 %v1811, 0.0
        %v1952 = vmax.f32 %v1813, 0.0
        %v1953 = vmax.f32 %v1815, 0.0
        %v1954 = vmax.f32 %v1817, 0.0
        %v1955 = vmax.f32 %v1821, 0.0
        %v1956 = vmax.f32 %v1823, 0.0
        %v1957 = vmax.f32 %v1825, 0.0
        %v1958 = vmax.f32 %v1827, 0.0
        %v1959 = vmax.f32 %v1831, 0.0
        %v1960 = vmax.f32 %v1833, 0.0
        %v1961 = vmax.f32 %v1835, 0.0
        %v1962 = vmax.f32 %v1837, 0.0
        %v1963 = vmax.f32 %v1841, 0.0
        %v1964 = vmax.f32 %v1843, 0.0
        %v1965 = vmax.f32 %v1845, 0.0
        %v1966 = vmax.f32 %v1847, 0.0
        %v1967 = vmax.f32 %v1851, 0.0
        %v1968 = vmax.f32 %v1853, 0.0
        %v1969 = vmax.f32 %v1855, 0.0
        %v1970 = vmax.f32 %v1857, 0.0
        %v1971 = vmax.f32 %v1861, 0.0
        %v1972 = vmax.f32 %v1863, 0.0
        %v1973 = vmax.f32 %v1865, 0.0
        %v1974 = vmax.f32 %v1867, 0.0
        %v1975 = vmax.f32 %v1871, 0.0
        %v1976 = vmax.f32 %v1873, 0.0
        %v1977 = vmax.f32 %v1875, 0.0
        %v1978 = vmax.f32 %v1877, 0.0
        %v1979 = vmax.f32 %v1881, 0.0
        %v1980 = vmax.f32 %v1883, 0.0
        %v1981 = vmax.f32 %v1885, 0.0
        %v1982 = vmax.f32 %v1887, 0.0
        %v1983 = vmax.f32 %v1891, 0.0
        %v1984 = vmax.f32 %v1893, 0.0
        %v1985 = vmax.f32 %v1895, 0.0
        %v1986 = vmax.f32 %v1897, 0.0
        %v1987 = vmax.f32 %v1901, 0.0
        %v1988 = vmax.f32 %v1903, 0.0
        %v1989 = vmax.f32 %v1905, 0.0
        %v1990 = vmax.f32 %v1907, 0.0
        %v1991 = vmax.f32 %v1911, 0.0
        %v1992 = vmax.f32 %v1913, 0.0
        %v1993 = vmax.f32 %v1915, 0.0
        %v1994 = vmax.f32 %v1917, 0.0
        %v1995 = vmax.f32 %v1921, 0.0
        %v1996 = vmax.f32 %v1923, 0.0
        %v1997 = vmax.f32 %v1925, 0.0
        %v1998 = vmax.f32 %v1927, 0.0
        %v1999 = vmax.f32 %v1931, 0.0
        %v2000 = vmax.f32 %v1933, 0.0
        %v2001 = vmax.f32 %v1935, 0.0
        %v2002 = vmax.f32 %v1937, 0.0
        %v2003 = vpack.c.bf16 %v1941, %v1939
        %v2004 = vpack.c.bf16 %v1942, %v1940
        %v2005 = vpack.c.bf16 %v1945, %v1943
        %v2006 = vpack.c.bf16 %v1946, %v1944
        %v2007 = vpack.c.bf16 %v1949, %v1947
        %v2008 = vpack.c.bf16 %v1950, %v1948
        %v2009 = vpack.c.bf16 %v1953, %v1951
        %v2010 = vpack.c.bf16 %v1954, %v1952
        %v2011 = vpack.c.bf16 %v1957, %v1955
        %v2012 = vpack.c.bf16 %v1958, %v1956
        %v2013 = vpack.c.bf16 %v1961, %v1959
        %v2014 = vpack.c.bf16 %v1962, %v1960
        %v2015 = vpack.c.bf16 %v1965, %v1963
        %v2016 = vpack.c.bf16 %v1966, %v1964
        %v2017 = vpack.c.bf16 %v1969, %v1967
        %v2018 = vpack.c.bf16 %v1970, %v1968
        %v2019 = vpack.c.bf16 %v1973, %v1971
        %v2020 = vpack.c.bf16 %v1974, %v1972
        %v2021 = vpack.c.bf16 %v1977, %v1975
        %v2022 = vpack.c.bf16 %v1978, %v1976
        %v2023 = vpack.c.bf16 %v1981, %v1979
        %v2024 = vpack.c.bf16 %v1982, %v1980
        %v2025 = vpack.c.bf16 %v1985, %v1983
        %v2026 = vpack.c.bf16 %v1986, %v1984
        %v2027 = vpack.c.bf16 %v1989, %v1987
        %v2028 = vpack.c.bf16 %v1990, %v1988
        %v2029 = vpack.c.bf16 %v1993, %v1991
        %v2030 = vpack.c.bf16 %v1994, %v1992
        %v2031 = vpack.c.bf16 %v1997, %v1995
        %v2032 = vpack.c.bf16 %v1998, %v1996
        %v2033 = vpack.c.bf16 %v2001, %v1999
        %v2034 = vpack.c.bf16 %v2002, %v2000
        %v2035 = vld [vmem:[#allocation12] sm:$0xff]
        %v2036 = vld [vmem:[#allocation12 + $0x8] sm:$0xff]
        %v2037 = vld [vmem:[#allocation12 + $0x10] sm:$0xff]
        %v2038 = vld [vmem:[#allocation12 + $0x18] sm:$0xff]
        %v2039 = vld [vmem:[#allocation12 + $0x20] sm:$0xff]
        %v2040 = vld [vmem:[#allocation12 + $0x28] sm:$0xff]
        %v2041 = vld [vmem:[#allocation12 + $0x30] sm:$0xff]
        %v2042 = vld [vmem:[#allocation12 + $0x38] sm:$0xff]
        %v2043 = vld [vmem:[#allocation12 + $0x40] sm:$0xff]
        %v2044 = vld [vmem:[#allocation12 + $0x48] sm:$0xff]
        %v2045 = vld [vmem:[#allocation12 + $0x50] sm:$0xff]
        %v2046 = vld [vmem:[#allocation12 + $0x58] sm:$0xff]
        %v2047 = vld [vmem:[#allocation12 + $0x60] sm:$0xff]
        %v2048 = vld [vmem:[#allocation12 + $0x68] sm:$0xff]
        %v2049 = vld [vmem:[#allocation12 + $0x70] sm:$0xff]
        %v2050 = vld [vmem:[#allocation12 + $0x78] sm:$0xff]
        %v2051 = vld [vmem:[#allocation12 + $0x80] sm:$0xff]
        %v2052 = vld [vmem:[#allocation12 + $0x88] sm:$0xff]
        %v2053 = vld [vmem:[#allocation12 + $0x90] sm:$0xff]
        %v2054 = vld [vmem:[#allocation12 + $0x98] sm:$0xff]
        %v2055 = vld [vmem:[#allocation12 + $0xa0] sm:$0xff]
        %v2056 = vld [vmem:[#allocation12 + $0xa8] sm:$0xff]
        %v2057 = vld [vmem:[#allocation12 + $0xb0] sm:$0xff]
        %v2058 = vld [vmem:[#allocation12 + $0xb8] sm:$0xff]
        %v2059 = vld [vmem:[#allocation12 + $0xc0] sm:$0xff]
        %v2060 = vld [vmem:[#allocation12 + $0xc8] sm:$0xff]
        %v2061 = vld [vmem:[#allocation12 + $0xd0] sm:$0xff]
        %v2062 = vld [vmem:[#allocation12 + $0xd8] sm:$0xff]
        %v2063 = vld [vmem:[#allocation12 + $0xe0] sm:$0xff]
        %v2064 = vld [vmem:[#allocation12 + $0xe8] sm:$0xff]
        %v2065 = vld [vmem:[#allocation12 + $0xf0] sm:$0xff]
        %v2066 = vld [vmem:[#allocation12 + $0xf8] sm:$0xff]
        %v2067 = vld [vmem:[%s497] sm:$0x3]
        %v2069 = vlaneseq
        %v2070 = vshrl.u32 %v2069, 7
        %v2071 = vsub.s32 0, %v2070
        %v2072 = vrot.slane %v2067, %v2071
        %v2073 = vlaneseq
        %v2074 = vshrl.u32 %v2073, 7
        %v2075 = vsub.s32 1, %v2074
        %v2076 = vrot.slane %v2067, %v2075
        %v2111 = vunpack.c.l.b16 %v2035
        %v2112 = vunpack.c.h.b16 %v2035
        %v2113 = vunpack.c.l.b16 %v2036
        %v2114 = vunpack.c.h.b16 %v2036
        %v2115 = vunpack.c.l.b16 %v2037
        %v2116 = vunpack.c.h.b16 %v2037
        %v2117 = vunpack.c.l.b16 %v2038
        %v2118 = vunpack.c.h.b16 %v2038
        %v2119 = vunpack.c.l.b16 %v2039
        %v2120 = vunpack.c.h.b16 %v2039
        %v2121 = vunpack.c.l.b16 %v2040
        %v2122 = vunpack.c.h.b16 %v2040
        %v2123 = vunpack.c.l.b16 %v2041
        %v2124 = vunpack.c.h.b16 %v2041
        %v2125 = vunpack.c.l.b16 %v2042
        %v2126 = vunpack.c.h.b16 %v2042
        %v2127 = vunpack.c.l.b16 %v2043
        %v2128 = vunpack.c.h.b16 %v2043
        %v2129 = vunpack.c.l.b16 %v2044
        %v2130 = vunpack.c.h.b16 %v2044
        %v2131 = vunpack.c.l.b16 %v2045
        %v2132 = vunpack.c.h.b16 %v2045
        %v2133 = vunpack.c.l.b16 %v2046
        %v2134 = vunpack.c.h.b16 %v2046
        %v2135 = vunpack.c.l.b16 %v2047
        %v2136 = vunpack.c.h.b16 %v2047
        %v2137 = vunpack.c.l.b16 %v2048
        %v2138 = vunpack.c.h.b16 %v2048
        %v2139 = vunpack.c.l.b16 %v2049
        %v2140 = vunpack.c.h.b16 %v2049
        %v2141 = vunpack.c.l.b16 %v2050
        %v2142 = vunpack.c.h.b16 %v2050
        %v2143 = vunpack.c.l.b16 %v2051
        %v2144 = vunpack.c.h.b16 %v2051
        %v2145 = vunpack.c.l.b16 %v2052
        %v2146 = vunpack.c.h.b16 %v2052
        %v2147 = vunpack.c.l.b16 %v2053
        %v2148 = vunpack.c.h.b16 %v2053
        %v2149 = vunpack.c.l.b16 %v2054
        %v2150 = vunpack.c.h.b16 %v2054
        %v2151 = vunpack.c.l.b16 %v2055
        %v2152 = vunpack.c.h.b16 %v2055
        %v2153 = vunpack.c.l.b16 %v2056
        %v2154 = vunpack.c.h.b16 %v2056
        %v2155 = vunpack.c.l.b16 %v2057
        %v2156 = vunpack.c.h.b16 %v2057
        %v2157 = vunpack.c.l.b16 %v2058
        %v2158 = vunpack.c.h.b16 %v2058
        %v2159 = vunpack.c.l.b16 %v2059
        %v2160 = vunpack.c.h.b16 %v2059
        %v2161 = vunpack.c.l.b16 %v2060
        %v2162 = vunpack.c.h.b16 %v2060
        %v2163 = vunpack.c.l.b16 %v2061
        %v2164 = vunpack.c.h.b16 %v2061
        %v2165 = vunpack.c.l.b16 %v2062
        %v2166 = vunpack.c.h.b16 %v2062
        %v2167 = vunpack.c.l.b16 %v2063
        %v2168 = vunpack.c.h.b16 %v2063
        %v2169 = vunpack.c.l.b16 %v2064
        %v2170 = vunpack.c.h.b16 %v2064
        %v2171 = vunpack.c.l.b16 %v2065
        %v2172 = vunpack.c.h.b16 %v2065
        %v2173 = vunpack.c.l.b16 %v2066
        %v2174 = vunpack.c.h.b16 %v2066
        %v2175 = vpack.c.b16 %v2113, %v2111
        %v2176 = vpack.c.b16 %v2114, %v2112
        %v2177 = vpack.c.b16 %v2117, %v2115
        %v2178 = vpack.c.b16 %v2118, %v2116
        %v2179 = vpack.c.b16 %v2121, %v2119
        %v2180 = vpack.c.b16 %v2122, %v2120
        %v2181 = vpack.c.b16 %v2125, %v2123
        %v2182 = vpack.c.b16 %v2126, %v2124
        %v2183 = vpack.c.b16 %v2129, %v2127
        %v2184 = vpack.c.b16 %v2130, %v2128
        %v2185 = vpack.c.b16 %v2133, %v2131
        %v2186 = vpack.c.b16 %v2134, %v2132
        %v2187 = vpack.c.b16 %v2137, %v2135
        %v2188 = vpack.c.b16 %v2138, %v2136
        %v2189 = vpack.c.b16 %v2141, %v2139
        %v2190 = vpack.c.b16 %v2142, %v2140
        %v2191 = vpack.c.b16 %v2145, %v2143
        %v2192 = vpack.c.b16 %v2146, %v2144
        %v2193 = vpack.c.b16 %v2149, %v2147
        %v2194 = vpack.c.b16 %v2150, %v2148
        %v2195 = vpack.c.b16 %v2153, %v2151
        %v2196 = vpack.c.b16 %v2154, %v2152
        %v2197 = vpack.c.b16 %v2157, %v2155
        %v2198 = vpack.c.b16 %v2158, %v2156
        %v2199 = vpack.c.b16 %v2161, %v2159
        %v2200 = vpack.c.b16 %v2162, %v2160
        %v2201 = vpack.c.b16 %v2165, %v2163
        %v2202 = vpack.c.b16 %v2166, %v2164
        %v2203 = vpack.c.b16 %v2169, %v2167
        %v2204 = vpack.c.b16 %v2170, %v2168
        %v2205 = vpack.c.b16 %v2173, %v2171
        %v2206 = vpack.c.b16 %v2174, %v2172
        %2239 = vmatprep.subr.bf16.mxu0 %v2190
        %2240 = vmatpush1.bf16.msra.mxu0 %v2189
        %2241 = vmatprep.subr.bf16.mxu0 %v2188
        %2242 = vmatpush1.bf16.msra.mxu0 %v2187
        %2243 = vmatprep.subr.bf16.mxu0 %v2186
        %2244 = vmatpush1.bf16.msra.mxu0 %v2185
        %2245 = vmatprep.subr.bf16.mxu0 %v2184
        %2246 = vmatpush1.bf16.msra.mxu0 %v2183
        %2247 = vmatprep.subr.bf16.mxu0 %v2182
        %2248 = vmatpush1.bf16.msra.mxu0 %v2181
        %2249 = vmatprep.subr.bf16.mxu0 %v2180
        %2250 = vmatpush1.bf16.msra.mxu0 %v2179
        %2251 = vmatprep.subr.bf16.mxu0 %v2178
        %2252 = vmatpush1.bf16.msra.mxu0 %v2177
        %2253 = vmatprep.subr.bf16.mxu0 %v2176
        %2254 = vmatpush1.bf16.msra.mxu0 %v2175
        %2255 = vmatprep.subr.bf16.mxu0 %v2206
        %2256 = vmatpush2.bf16.msra.mxu0 %v2205
        %2257 = vmatprep.subr.bf16.mxu0 %v2204
        %2258 = vmatpush2.bf16.msra.mxu0 %v2203
        %2259 = vmatprep.subr.bf16.mxu0 %v2202
        %2260 = vmatpush2.bf16.msra.mxu0 %v2201
        %2261 = vmatprep.subr.bf16.mxu0 %v2200
        %2262 = vmatpush2.bf16.msra.mxu0 %v2199
        %2263 = vmatprep.subr.bf16.mxu0 %v2198
        %2264 = vmatpush2.bf16.msra.mxu0 %v2197
        %2265 = vmatprep.subr.bf16.mxu0 %v2196
        %2266 = vmatpush2.bf16.msra.mxu0 %v2195
        %2267 = vmatprep.subr.bf16.mxu0 %v2194
        %2268 = vmatpush2.bf16.msra.mxu0 %v2193
        %2269 = vmatprep.subr.bf16.mxu0 %v2192
        %2270 = vmatpush2.bf16.msra.mxu0 %v2191
        %2271 = vmatprep.mubr.bf16.mxu0 %v2004
        %2272 = vmatmul.mubr.bf16.gmra.mxu0 %v2003
        %v2273 = vpop.f32.mrf.mxu0
        %v2274 = vadd.f32 %v2072, %v2273
        %v2275 = vpop.f32.mrf.mxu0
        %v2276 = vadd.f32 %v2076, %v2275
        %v2277 = vpop.f32.mrf.mxu0
        %v2278 = vadd.f32 %v2072, %v2277
        %v2279 = vpop.f32.mrf.mxu0
        %v2280 = vadd.f32 %v2076, %v2279
        %2281 = vmatprep.mubr.bf16.mxu0 %v2006
        %2282 = vmatmul.mubr.bf16.gmra.mxu0 %v2005
        %v2283 = vpop.f32.mrf.mxu0
        %v2284 = vadd.f32 %v2072, %v2283
        %v2285 = vpop.f32.mrf.mxu0
        %v2286 = vadd.f32 %v2076, %v2285
        %v2287 = vpop.f32.mrf.mxu0
        %v2288 = vadd.f32 %v2072, %v2287
        %v2289 = vpop.f32.mrf.mxu0
        %v2290 = vadd.f32 %v2076, %v2289
        %2291 = vmatprep.mubr.bf16.mxu0 %v2008
        %2292 = vmatmul.mubr.bf16.gmra.mxu0 %v2007
        %v2293 = vpop.f32.mrf.mxu0
        %v2294 = vadd.f32 %v2072, %v2293
        %v2295 = vpop.f32.mrf.mxu0
        %v2296 = vadd.f32 %v2076, %v2295
        %v2297 = vpop.f32.mrf.mxu0
        %v2298 = vadd.f32 %v2072, %v2297
        %v2299 = vpop.f32.mrf.mxu0
        %v2300 = vadd.f32 %v2076, %v2299
        %2301 = vmatprep.mubr.bf16.mxu0 %v2010
        %2302 = vmatmul.mubr.bf16.gmra.mxu0 %v2009
        %v2303 = vpop.f32.mrf.mxu0
        %v2304 = vadd.f32 %v2072, %v2303
        %v2305 = vpop.f32.mrf.mxu0
        %v2306 = vadd.f32 %v2076, %v2305
        %v2307 = vpop.f32.mrf.mxu0
        %v2308 = vadd.f32 %v2072, %v2307
        %v2309 = vpop.f32.mrf.mxu0
        %v2310 = vadd.f32 %v2076, %v2309
        %2311 = vmatprep.mubr.bf16.mxu0 %v2012
        %2312 = vmatmul.mubr.bf16.gmra.mxu0 %v2011
        %v2313 = vpop.f32.mrf.mxu0
        %v2314 = vadd.f32 %v2072, %v2313
        %v2315 = vpop.f32.mrf.mxu0
        %v2316 = vadd.f32 %v2076, %v2315
        %v2317 = vpop.f32.mrf.mxu0
        %v2318 = vadd.f32 %v2072, %v2317
        %v2319 = vpop.f32.mrf.mxu0
        %v2320 = vadd.f32 %v2076, %v2319
        %2321 = vmatprep.mubr.bf16.mxu0 %v2014
        %2322 = vmatmul.mubr.bf16.gmra.mxu0 %v2013
        %v2323 = vpop.f32.mrf.mxu0
        %v2324 = vadd.f32 %v2072, %v2323
        %v2325 = vpop.f32.mrf.mxu0
        %v2326 = vadd.f32 %v2076, %v2325
        %v2327 = vpop.f32.mrf.mxu0
        %v2328 = vadd.f32 %v2072, %v2327
        %v2329 = vpop.f32.mrf.mxu0
        %v2330 = vadd.f32 %v2076, %v2329
        %2331 = vmatprep.mubr.bf16.mxu0 %v2016
        %2332 = vmatmul.mubr.bf16.gmra.mxu0 %v2015
        %v2333 = vpop.f32.mrf.mxu0
        %v2334 = vadd.f32 %v2072, %v2333
        %v2335 = vpop.f32.mrf.mxu0
        %v2336 = vadd.f32 %v2076, %v2335
        %v2337 = vpop.f32.mrf.mxu0
        %v2338 = vadd.f32 %v2072, %v2337
        %v2339 = vpop.f32.mrf.mxu0
        %v2340 = vadd.f32 %v2076, %v2339
        %2341 = vmatprep.mubr.bf16.mxu0 %v2018
        %2342 = vmatmul.mubr.bf16.gmra.mxu0 %v2017
        %v2343 = vpop.f32.mrf.mxu0
        %v2344 = vadd.f32 %v2072, %v2343
        %v2345 = vpop.f32.mrf.mxu0
        %v2346 = vadd.f32 %v2076, %v2345
        %v2347 = vpop.f32.mrf.mxu0
        %v2348 = vadd.f32 %v2072, %v2347
        %v2349 = vpop.f32.mrf.mxu0
        %v2350 = vadd.f32 %v2076, %v2349
        %2351 = vmatprep.mubr.bf16.mxu0 %v2020
        %2352 = vmatmul.mubr.bf16.gmra.mxu0 %v2019
        %v2353 = vpop.f32.mrf.mxu0
        %v2354 = vadd.f32 %v2072, %v2353
        %v2355 = vpop.f32.mrf.mxu0
        %v2356 = vadd.f32 %v2076, %v2355
        %v2357 = vpop.f32.mrf.mxu0
        %v2358 = vadd.f32 %v2072, %v2357
        %v2359 = vpop.f32.mrf.mxu0
        %v2360 = vadd.f32 %v2076, %v2359
        %2361 = vmatprep.mubr.bf16.mxu0 %v2022
        %2362 = vmatmul.mubr.bf16.gmra.mxu0 %v2021
        %v2363 = vpop.f32.mrf.mxu0
        %v2364 = vadd.f32 %v2072, %v2363
        %v2365 = vpop.f32.mrf.mxu0
        %v2366 = vadd.f32 %v2076, %v2365
        %v2367 = vpop.f32.mrf.mxu0
        %v2368 = vadd.f32 %v2072, %v2367
        %v2369 = vpop.f32.mrf.mxu0
        %v2370 = vadd.f32 %v2076, %v2369
        %2371 = vmatprep.mubr.bf16.mxu0 %v2024
        %2372 = vmatmul.mubr.bf16.gmra.mxu0 %v2023
        %v2373 = vpop.f32.mrf.mxu0
        %v2374 = vadd.f32 %v2072, %v2373
        %v2375 = vpop.f32.mrf.mxu0
        %v2376 = vadd.f32 %v2076, %v2375
        %v2377 = vpop.f32.mrf.mxu0
        %v2378 = vadd.f32 %v2072, %v2377
        %v2379 = vpop.f32.mrf.mxu0
        %v2380 = vadd.f32 %v2076, %v2379
        %2381 = vmatprep.mubr.bf16.mxu0 %v2026
        %2382 = vmatmul.mubr.bf16.gmra.mxu0 %v2025
        %v2383 = vpop.f32.mrf.mxu0
        %v2384 = vadd.f32 %v2072, %v2383
        %v2385 = vpop.f32.mrf.mxu0
        %v2386 = vadd.f32 %v2076, %v2385
        %v2387 = vpop.f32.mrf.mxu0
        %v2388 = vadd.f32 %v2072, %v2387
        %v2389 = vpop.f32.mrf.mxu0
        %v2390 = vadd.f32 %v2076, %v2389
        %2391 = vmatprep.mubr.bf16.mxu0 %v2028
        %2392 = vmatmul.mubr.bf16.gmra.mxu0 %v2027
        %v2393 = vpop.f32.mrf.mxu0
        %v2394 = vadd.f32 %v2072, %v2393
        %v2395 = vpop.f32.mrf.mxu0
        %v2396 = vadd.f32 %v2076, %v2395
        %v2397 = vpop.f32.mrf.mxu0
        %v2398 = vadd.f32 %v2072, %v2397
        %v2399 = vpop.f32.mrf.mxu0
        %v2400 = vadd.f32 %v2076, %v2399
        %2401 = vmatprep.mubr.bf16.mxu0 %v2030
        %2402 = vmatmul.mubr.bf16.gmra.mxu0 %v2029
        %v2403 = vpop.f32.mrf.mxu0
        %v2404 = vadd.f32 %v2072, %v2403
        %v2405 = vpop.f32.mrf.mxu0
        %v2406 = vadd.f32 %v2076, %v2405
        %v2407 = vpop.f32.mrf.mxu0
        %v2408 = vadd.f32 %v2072, %v2407
        %v2409 = vpop.f32.mrf.mxu0
        %v2410 = vadd.f32 %v2076, %v2409
        %2411 = vmatprep.mubr.bf16.mxu0 %v2032
        %2412 = vmatmul.mubr.bf16.gmra.mxu0 %v2031
        %v2413 = vpop.f32.mrf.mxu0
        %v2414 = vadd.f32 %v2072, %v2413
        %v2415 = vpop.f32.mrf.mxu0
        %v2416 = vadd.f32 %v2076, %v2415
        %v2417 = vpop.f32.mrf.mxu0
        %v2418 = vadd.f32 %v2072, %v2417
        %v2419 = vpop.f32.mrf.mxu0
        %v2420 = vadd.f32 %v2076, %v2419
        %2421 = vmatprep.mubr.bf16.mxu0 %v2034
        %2422 = vmatmul.mubr.bf16.gmra.mxu0 %v2033
        %v2423 = vpop.f32.mrf.mxu0
        %v2424 = vadd.f32 %v2072, %v2423
        %v2425 = vpop.f32.mrf.mxu0
        %v2426 = vadd.f32 %v2076, %v2425
        %v2427 = vpop.f32.mrf.mxu0
        %v2428 = vadd.f32 %v2072, %v2427
        %v2429 = vpop.f32.mrf.mxu0
        %v2430 = vadd.f32 %v2076, %v2429
        %2431 = vdwg.mxu0
        %v2432 = vadd.f32 %v1286, %v2274
        %v2433 = vadd.f32 %v1287, %v2276
        %v2434 = vadd.f32 %v1288, %v2278
        %v2435 = vadd.f32 %v1289, %v2280
        %v2436 = vadd.f32 %v1290, %v2284
        %v2437 = vadd.f32 %v1291, %v2286
        %v2438 = vadd.f32 %v1292, %v2288
        %v2439 = vadd.f32 %v1293, %v2290
        %v2440 = vadd.f32 %v1294, %v2294
        %v2441 = vadd.f32 %v1295, %v2296
        %v2442 = vadd.f32 %v1296, %v2298
        %v2443 = vadd.f32 %v1297, %v2300
        %v2444 = vadd.f32 %v1298, %v2304
        %v2445 = vadd.f32 %v1299, %v2306
        %v2446 = vadd.f32 %v1300, %v2308
        %v2447 = vadd.f32 %v1301, %v2310
        %v2448 = vadd.f32 %v1302, %v2314
        %v2449 = vadd.f32 %v1303, %v2316
        %v2450 = vadd.f32 %v1304, %v2318
        %v2451 = vadd.f32 %v1305, %v2320
        %v2452 = vadd.f32 %v1306, %v2324
        %v2453 = vadd.f32 %v1307, %v2326
        %v2454 = vadd.f32 %v1308, %v2328
        %v2455 = vadd.f32 %v1309, %v2330
        %v2456 = vadd.f32 %v1310, %v2334
        %v2457 = vadd.f32 %v1311, %v2336
        %v2458 = vadd.f32 %v1312, %v2338
        %v2459 = vadd.f32 %v1313, %v2340
        %v2460 = vadd.f32 %v1314, %v2344
        %v2461 = vadd.f32 %v1315, %v2346
        %v2462 = vadd.f32 %v1316, %v2348
        %v2463 = vadd.f32 %v1317, %v2350
        %v2464 = vadd.f32 %v1318, %v2354
        %v2465 = vadd.f32 %v1319, %v2356
        %v2466 = vadd.f32 %v1320, %v2358
        %v2467 = vadd.f32 %v1321, %v2360
        %v2468 = vadd.f32 %v1322, %v2364
        %v2469 = vadd.f32 %v1323, %v2366
        %v2470 = vadd.f32 %v1324, %v2368
        %v2471 = vadd.f32 %v1325, %v2370
        %v2472 = vadd.f32 %v1326, %v2374
        %v2473 = vadd.f32 %v1327, %v2376
        %v2474 = vadd.f32 %v1328, %v2378
        %v2475 = vadd.f32 %v1329, %v2380
        %v2476 = vadd.f32 %v1330, %v2384
        %v2477 = vadd.f32 %v1331, %v2386
        %v2478 = vadd.f32 %v1332, %v2388
        %v2479 = vadd.f32 %v1333, %v2390
        %v2480 = vadd.f32 %v1334, %v2394
        %v2481 = vadd.f32 %v1335, %v2396
        %v2482 = vadd.f32 %v1336, %v2398
        %v2483 = vadd.f32 %v1337, %v2400
        %v2484 = vadd.f32 %v1338, %v2404
        %v2485 = vadd.f32 %v1339, %v2406
        %v2486 = vadd.f32 %v1340, %v2408
        %v2487 = vadd.f32 %v1341, %v2410
        %v2488 = vadd.f32 %v1342, %v2414
        %v2489 = vadd.f32 %v1343, %v2416
        %v2490 = vadd.f32 %v1344, %v2418
        %v2491 = vadd.f32 %v1345, %v2420
        %v2492 = vadd.f32 %v1346, %v2424
        %v2493 = vadd.f32 %v1347, %v2426
        %v2494 = vadd.f32 %v1348, %v2428
        %v2495 = vadd.f32 %v1349, %v2430
        %v2496 = vmax.f32 %v2432, 0.0
        %v2497 = vmax.f32 %v2433, 0.0
        %v2498 = vmax.f32 %v2434, 0.0
        %v2499 = vmax.f32 %v2435, 0.0
        %v2500 = vmax.f32 %v2436, 0.0
        %v2501 = vmax.f32 %v2437, 0.0
        %v2502 = vmax.f32 %v2438, 0.0
        %v2503 = vmax.f32 %v2439, 0.0
        %v2504 = vmax.f32 %v2440, 0.0
        %v2505 = vmax.f32 %v2441, 0.0
        %v2506 = vmax.f32 %v2442, 0.0
        %v2507 = vmax.f32 %v2443, 0.0
        %v2508 = vmax.f32 %v2444, 0.0
        %v2509 = vmax.f32 %v2445, 0.0
        %v2510 = vmax.f32 %v2446, 0.0
        %v2511 = vmax.f32 %v2447, 0.0
        %v2512 = vmax.f32 %v2448, 0.0
        %v2513 = vmax.f32 %v2449, 0.0
        %v2514 = vmax.f32 %v2450, 0.0
        %v2515 = vmax.f32 %v2451, 0.0
        %v2516 = vmax.f32 %v2452, 0.0
        %v2517 = vmax.f32 %v2453, 0.0
        %v2518 = vmax.f32 %v2454, 0.0
        %v2519 = vmax.f32 %v2455, 0.0
        %v2520 = vmax.f32 %v2456, 0.0
        %v2521 = vmax.f32 %v2457, 0.0
        %v2522 = vmax.f32 %v2458, 0.0
        %v2523 = vmax.f32 %v2459, 0.0
        %v2524 = vmax.f32 %v2460, 0.0
        %v2525 = vmax.f32 %v2461, 0.0
        %v2526 = vmax.f32 %v2462, 0.0
        %v2527 = vmax.f32 %v2463, 0.0
        %v2528 = vmax.f32 %v2464, 0.0
        %v2529 = vmax.f32 %v2465, 0.0
        %v2530 = vmax.f32 %v2466, 0.0
        %v2531 = vmax.f32 %v2467, 0.0
        %v2532 = vmax.f32 %v2468, 0.0
        %v2533 = vmax.f32 %v2469, 0.0
        %v2534 = vmax.f32 %v2470, 0.0
        %v2535 = vmax.f32 %v2471, 0.0
        %v2536 = vmax.f32 %v2472, 0.0
        %v2537 = vmax.f32 %v2473, 0.0
        %v2538 = vmax.f32 %v2474, 0.0
        %v2539 = vmax.f32 %v2475, 0.0
        %v2540 = vmax.f32 %v2476, 0.0
        %v2541 = vmax.f32 %v2477, 0.0
        %v2542 = vmax.f32 %v2478, 0.0
        %v2543 = vmax.f32 %v2479, 0.0
        %v2544 = vmax.f32 %v2480, 0.0
        %v2545 = vmax.f32 %v2481, 0.0
        %v2546 = vmax.f32 %v2482, 0.0
        %v2547 = vmax.f32 %v2483, 0.0
        %v2548 = vmax.f32 %v2484, 0.0
        %v2549 = vmax.f32 %v2485, 0.0
        %v2550 = vmax.f32 %v2486, 0.0
        %v2551 = vmax.f32 %v2487, 0.0
        %v2552 = vmax.f32 %v2488, 0.0
        %v2553 = vmax.f32 %v2489, 0.0
        %v2554 = vmax.f32 %v2490, 0.0
        %v2555 = vmax.f32 %v2491, 0.0
        %v2556 = vmax.f32 %v2492, 0.0
        %v2557 = vmax.f32 %v2493, 0.0
        %v2558 = vmax.f32 %v2494, 0.0
        %v2559 = vmax.f32 %v2495, 0.0
        %v2560 = vpack.c.bf16 %v2498, %v2496
        %v2561 = vpack.c.bf16 %v2499, %v2497
        %v2562 = vpack.c.bf16 %v2502, %v2500
        %v2563 = vpack.c.bf16 %v2503, %v2501
        %v2564 = vpack.c.bf16 %v2506, %v2504
        %v2565 = vpack.c.bf16 %v2507, %v2505
        %v2566 = vpack.c.bf16 %v2510, %v2508
        %v2567 = vpack.c.bf16 %v2511, %v2509
        %v2568 = vpack.c.bf16 %v2514, %v2512
        %v2569 = vpack.c.bf16 %v2515, %v2513
        %v2570 = vpack.c.bf16 %v2518, %v2516
        %v2571 = vpack.c.bf16 %v2519, %v2517
        %v2572 = vpack.c.bf16 %v2522, %v2520
        %v2573 = vpack.c.bf16 %v2523, %v2521
        %v2574 = vpack.c.bf16 %v2526, %v2524
        %v2575 = vpack.c.bf16 %v2527, %v2525
        %v2576 = vpack.c.bf16 %v2530, %v2528
        %v2577 = vpack.c.bf16 %v2531, %v2529
        %v2578 = vpack.c.bf16 %v2534, %v2532
        %v2579 = vpack.c.bf16 %v2535, %v2533
        %v2580 = vpack.c.bf16 %v2538, %v2536
        %v2581 = vpack.c.bf16 %v2539, %v2537
        %v2582 = vpack.c.bf16 %v2542, %v2540
        %v2583 = vpack.c.bf16 %v2543, %v2541
        %v2584 = vpack.c.bf16 %v2546, %v2544
        %v2585 = vpack.c.bf16 %v2547, %v2545
        %v2586 = vpack.c.bf16 %v2550, %v2548
        %v2587 = vpack.c.bf16 %v2551, %v2549
        %v2588 = vpack.c.bf16 %v2554, %v2552
        %v2589 = vpack.c.bf16 %v2555, %v2553
        %v2590 = vpack.c.bf16 %v2558, %v2556
        %v2591 = vpack.c.bf16 %v2559, %v2557
        %s2592 = scalar_lea.vmem [#allocation10], 256
        %v2593 = vld [vmem:[%s2592] sm:$0xff]
        %v2594 = vld [vmem:[%s2592 + $0x8] sm:$0xff]
        %v2595 = vld [vmem:[%s2592 + $0x10] sm:$0xff]
        %v2596 = vld [vmem:[%s2592 + $0x18] sm:$0xff]
        %v2597 = vld [vmem:[%s2592 + $0x20] sm:$0xff]
        %v2598 = vld [vmem:[%s2592 + $0x28] sm:$0xff]
        %v2599 = vld [vmem:[%s2592 + $0x30] sm:$0xff]
        %v2600 = vld [vmem:[%s2592 + $0x38] sm:$0xff]
        %v2601 = vld [vmem:[%s2592 + $0x40] sm:$0xff]
        %v2602 = vld [vmem:[%s2592 + $0x48] sm:$0xff]
        %v2603 = vld [vmem:[%s2592 + $0x50] sm:$0xff]
        %v2604 = vld [vmem:[%s2592 + $0x58] sm:$0xff]
        %v2605 = vld [vmem:[%s2592 + $0x60] sm:$0xff]
        %v2606 = vld [vmem:[%s2592 + $0x68] sm:$0xff]
        %v2607 = vld [vmem:[%s2592 + $0x70] sm:$0xff]
        %v2608 = vld [vmem:[%s2592 + $0x78] sm:$0xff]
        %v2609 = vld [vmem:[%s2592 + $0x80] sm:$0xff]
        %v2610 = vld [vmem:[%s2592 + $0x88] sm:$0xff]
        %v2611 = vld [vmem:[%s2592 + $0x90] sm:$0xff]
        %v2612 = vld [vmem:[%s2592 + $0x98] sm:$0xff]
        %v2613 = vld [vmem:[%s2592 + $0xa0] sm:$0xff]
        %v2614 = vld [vmem:[%s2592 + $0xa8] sm:$0xff]
        %v2615 = vld [vmem:[%s2592 + $0xb0] sm:$0xff]
        %v2616 = vld [vmem:[%s2592 + $0xb8] sm:$0xff]
        %v2617 = vld [vmem:[%s2592 + $0xc0] sm:$0xff]
        %v2618 = vld [vmem:[%s2592 + $0xc8] sm:$0xff]
        %v2619 = vld [vmem:[%s2592 + $0xd0] sm:$0xff]
        %v2620 = vld [vmem:[%s2592 + $0xd8] sm:$0xff]
        %v2621 = vld [vmem:[%s2592 + $0xe0] sm:$0xff]
        %v2622 = vld [vmem:[%s2592 + $0xe8] sm:$0xff]
        %v2623 = vld [vmem:[%s2592 + $0xf0] sm:$0xff]
        %v2624 = vld [vmem:[%s2592 + $0xf8] sm:$0xff]
        %s2625 = scalar_lea.vmem %s490, 2
        %v2626 = vld [vmem:[%s2625] sm:$0x3]
        %v2628 = vlaneseq
        %v2629 = vshrl.u32 %v2628, 7
        %v2630 = vsub.s32 0, %v2629
        %v2631 = vrot.slane %v2626, %v2630
        %v2632 = vlaneseq
        %v2633 = vshrl.u32 %v2632, 7
        %v2634 = vsub.s32 1, %v2633
        %v2635 = vrot.slane %v2626, %v2634
        %v2670 = vunpack.c.l.b16 %v2593
        %v2671 = vunpack.c.h.b16 %v2593
        %v2672 = vunpack.c.l.b16 %v2594
        %v2673 = vunpack.c.h.b16 %v2594
        %v2674 = vunpack.c.l.b16 %v2595
        %v2675 = vunpack.c.h.b16 %v2595
        %v2676 = vunpack.c.l.b16 %v2596
        %v2677 = vunpack.c.h.b16 %v2596
        %v2678 = vunpack.c.l.b16 %v2597
        %v2679 = vunpack.c.h.b16 %v2597
        %v2680 = vunpack.c.l.b16 %v2598
        %v2681 = vunpack.c.h.b16 %v2598
        %v2682 = vunpack.c.l.b16 %v2599
        %v2683 = vunpack.c.h.b16 %v2599
        %v2684 = vunpack.c.l.b16 %v2600
        %v2685 = vunpack.c.h.b16 %v2600
        %v2686 = vunpack.c.l.b16 %v2601
        %v2687 = vunpack.c.h.b16 %v2601
        %v2688 = vunpack.c.l.b16 %v2602
        %v2689 = vunpack.c.h.b16 %v2602
        %v2690 = vunpack.c.l.b16 %v2603
        %v2691 = vunpack.c.h.b16 %v2603
        %v2692 = vunpack.c.l.b16 %v2604
        %v2693 = vunpack.c.h.b16 %v2604
        %v2694 = vunpack.c.l.b16 %v2605
        %v2695 = vunpack.c.h.b16 %v2605
        %v2696 = vunpack.c.l.b16 %v2606
        %v2697 = vunpack.c.h.b16 %v2606
        %v2698 = vunpack.c.l.b16 %v2607
        %v2699 = vunpack.c.h.b16 %v2607
        %v2700 = vunpack.c.l.b16 %v2608
        %v2701 = vunpack.c.h.b16 %v2608
        %v2702 = vunpack.c.l.b16 %v2609
        %v2703 = vunpack.c.h.b16 %v2609
        %v2704 = vunpack.c.l.b16 %v2610
        %v2705 = vunpack.c.h.b16 %v2610
        %v2706 = vunpack.c.l.b16 %v2611
        %v2707 = vunpack.c.h.b16 %v2611
        %v2708 = vunpack.c.l.b16 %v2612
        %v2709 = vunpack.c.h.b16 %v2612
        %v2710 = vunpack.c.l.b16 %v2613
        %v2711 = vunpack.c.h.b16 %v2613
        %v2712 = vunpack.c.l.b16 %v2614
        %v2713 = vunpack.c.h.b16 %v2614
        %v2714 = vunpack.c.l.b16 %v2615
        %v2715 = vunpack.c.h.b16 %v2615
        %v2716 = vunpack.c.l.b16 %v2616
        %v2717 = vunpack.c.h.b16 %v2616
        %v2718 = vunpack.c.l.b16 %v2617
        %v2719 = vunpack.c.h.b16 %v2617
        %v2720 = vunpack.c.l.b16 %v2618
        %v2721 = vunpack.c.h.b16 %v2618
        %v2722 = vunpack.c.l.b16 %v2619
        %v2723 = vunpack.c.h.b16 %v2619
        %v2724 = vunpack.c.l.b16 %v2620
        %v2725 = vunpack.c.h.b16 %v2620
        %v2726 = vunpack.c.l.b16 %v2621
        %v2727 = vunpack.c.h.b16 %v2621
        %v2728 = vunpack.c.l.b16 %v2622
        %v2729 = vunpack.c.h.b16 %v2622
        %v2730 = vunpack.c.l.b16 %v2623
        %v2731 = vunpack.c.h.b16 %v2623
        %v2732 = vunpack.c.l.b16 %v2624
        %v2733 = vunpack.c.h.b16 %v2624
        %v2734 = vpack.c.b16 %v2672, %v2670
        %v2735 = vpack.c.b16 %v2673, %v2671
        %v2736 = vpack.c.b16 %v2676, %v2674
        %v2737 = vpack.c.b16 %v2677, %v2675
        %v2738 = vpack.c.b16 %v2680, %v2678
        %v2739 = vpack.c.b16 %v2681, %v2679
        %v2740 = vpack.c.b16 %v2684, %v2682
        %v2741 = vpack.c.b16 %v2685, %v2683
        %v2742 = vpack.c.b16 %v2688, %v2686
        %v2743 = vpack.c.b16 %v2689, %v2687
        %v2744 = vpack.c.b16 %v2692, %v2690
        %v2745 = vpack.c.b16 %v2693, %v2691
        %v2746 = vpack.c.b16 %v2696, %v2694
        %v2747 = vpack.c.b16 %v2697, %v2695
        %v2748 = vpack.c.b16 %v2700, %v2698
        %v2749 = vpack.c.b16 %v2701, %v2699
        %v2750 = vpack.c.b16 %v2704, %v2702
        %v2751 = vpack.c.b16 %v2705, %v2703
        %v2752 = vpack.c.b16 %v2708, %v2706
        %v2753 = vpack.c.b16 %v2709, %v2707
        %v2754 = vpack.c.b16 %v2712, %v2710
        %v2755 = vpack.c.b16 %v2713, %v2711
        %v2756 = vpack.c.b16 %v2716, %v2714
        %v2757 = vpack.c.b16 %v2717, %v2715
        %v2758 = vpack.c.b16 %v2720, %v2718
        %v2759 = vpack.c.b16 %v2721, %v2719
        %v2760 = vpack.c.b16 %v2724, %v2722
        %v2761 = vpack.c.b16 %v2725, %v2723
        %v2762 = vpack.c.b16 %v2728, %v2726
        %v2763 = vpack.c.b16 %v2729, %v2727
        %v2764 = vpack.c.b16 %v2732, %v2730
        %v2765 = vpack.c.b16 %v2733, %v2731
        %2798 = vmatprep.subr.bf16.mxu0 %v2749
        %2799 = vmatpush1.bf16.msra.mxu0 %v2748
        %2800 = vmatprep.subr.bf16.mxu0 %v2747
        %2801 = vmatpush1.bf16.msra.mxu0 %v2746
        %2802 = vmatprep.subr.bf16.mxu0 %v2745
        %2803 = vmatpush1.bf16.msra.mxu0 %v2744
        %2804 = vmatprep.subr.bf16.mxu0 %v2743
        %2805 = vmatpush1.bf16.msra.mxu0 %v2742
        %2806 = vmatprep.subr.bf16.mxu0 %v2741
        %2807 = vmatpush1.bf16.msra.mxu0 %v2740
        %2808 = vmatprep.subr.bf16.mxu0 %v2739
        %2809 = vmatpush1.bf16.msra.mxu0 %v2738
        %2810 = vmatprep.subr.bf16.mxu0 %v2737
        %2811 = vmatpush1.bf16.msra.mxu0 %v2736
        %2812 = vmatprep.subr.bf16.mxu0 %v2735
        %2813 = vmatpush1.bf16.msra.mxu0 %v2734
        %2814 = vmatprep.subr.bf16.mxu0 %v2765
        %2815 = vmatpush2.bf16.msra.mxu0 %v2764
        %2816 = vmatprep.subr.bf16.mxu0 %v2763
        %2817 = vmatpush2.bf16.msra.mxu0 %v2762
        %2818 = vmatprep.subr.bf16.mxu0 %v2761
        %2819 = vmatpush2.bf16.msra.mxu0 %v2760
        %2820 = vmatprep.subr.bf16.mxu0 %v2759
        %2821 = vmatpush2.bf16.msra.mxu0 %v2758
        %2822 = vmatprep.subr.bf16.mxu0 %v2757
        %2823 = vmatpush2.bf16.msra.mxu0 %v2756
        %2824 = vmatprep.subr.bf16.mxu0 %v2755
        %2825 = vmatpush2.bf16.msra.mxu0 %v2754
        %2826 = vmatprep.subr.bf16.mxu0 %v2753
        %2827 = vmatpush2.bf16.msra.mxu0 %v2752
        %2828 = vmatprep.subr.bf16.mxu0 %v2751
        %2829 = vmatpush2.bf16.msra.mxu0 %v2750
        %2830 = vmatprep.mubr.bf16.mxu0 %v2561
        %2831 = vmatmul.mubr.bf16.gmra.mxu0 %v2560
        %v2832 = vpop.f32.mrf.mxu0
        %v2833 = vadd.f32 %v2631, %v2832
        %v2834 = vpop.f32.mrf.mxu0
        %v2835 = vadd.f32 %v2635, %v2834
        %v2836 = vpop.f32.mrf.mxu0
        %v2837 = vadd.f32 %v2631, %v2836
        %v2838 = vpop.f32.mrf.mxu0
        %v2839 = vadd.f32 %v2635, %v2838
        %2840 = vmatprep.mubr.bf16.mxu0 %v2563
        %2841 = vmatmul.mubr.bf16.gmra.mxu0 %v2562
        %v2842 = vpop.f32.mrf.mxu0
        %v2843 = vadd.f32 %v2631, %v2842
        %v2844 = vpop.f32.mrf.mxu0
        %v2845 = vadd.f32 %v2635, %v2844
        %v2846 = vpop.f32.mrf.mxu0
        %v2847 = vadd.f32 %v2631, %v2846
        %v2848 = vpop.f32.mrf.mxu0
        %v2849 = vadd.f32 %v2635, %v2848
        %2850 = vmatprep.mubr.bf16.mxu0 %v2565
        %2851 = vmatmul.mubr.bf16.gmra.mxu0 %v2564
        %v2852 = vpop.f32.mrf.mxu0
        %v2853 = vadd.f32 %v2631, %v2852
        %v2854 = vpop.f32.mrf.mxu0
        %v2855 = vadd.f32 %v2635, %v2854
        %v2856 = vpop.f32.mrf.mxu0
        %v2857 = vadd.f32 %v2631, %v2856
        %v2858 = vpop.f32.mrf.mxu0
        %v2859 = vadd.f32 %v2635, %v2858
        %2860 = vmatprep.mubr.bf16.mxu0 %v2567
        %2861 = vmatmul.mubr.bf16.gmra.mxu0 %v2566
        %v2862 = vpop.f32.mrf.mxu0
        %v2863 = vadd.f32 %v2631, %v2862
        %v2864 = vpop.f32.mrf.mxu0
        %v2865 = vadd.f32 %v2635, %v2864
        %v2866 = vpop.f32.mrf.mxu0
        %v2867 = vadd.f32 %v2631, %v2866
        %v2868 = vpop.f32.mrf.mxu0
        %v2869 = vadd.f32 %v2635, %v2868
        %2870 = vmatprep.mubr.bf16.mxu0 %v2569
        %2871 = vmatmul.mubr.bf16.gmra.mxu0 %v2568
        %v2872 = vpop.f32.mrf.mxu0
        %v2873 = vadd.f32 %v2631, %v2872
        %v2874 = vpop.f32.mrf.mxu0
        %v2875 = vadd.f32 %v2635, %v2874
        %v2876 = vpop.f32.mrf.mxu0
        %v2877 = vadd.f32 %v2631, %v2876
        %v2878 = vpop.f32.mrf.mxu0
        %v2879 = vadd.f32 %v2635, %v2878
        %2880 = vmatprep.mubr.bf16.mxu0 %v2571
        %2881 = vmatmul.mubr.bf16.gmra.mxu0 %v2570
        %v2882 = vpop.f32.mrf.mxu0
        %v2883 = vadd.f32 %v2631, %v2882
        %v2884 = vpop.f32.mrf.mxu0
        %v2885 = vadd.f32 %v2635, %v2884
        %v2886 = vpop.f32.mrf.mxu0
        %v2887 = vadd.f32 %v2631, %v2886
        %v2888 = vpop.f32.mrf.mxu0
        %v2889 = vadd.f32 %v2635, %v2888
        %2890 = vmatprep.mubr.bf16.mxu0 %v2573
        %2891 = vmatmul.mubr.bf16.gmra.mxu0 %v2572
        %v2892 = vpop.f32.mrf.mxu0
        %v2893 = vadd.f32 %v2631, %v2892
        %v2894 = vpop.f32.mrf.mxu0
        %v2895 = vadd.f32 %v2635, %v2894
        %v2896 = vpop.f32.mrf.mxu0
        %v2897 = vadd.f32 %v2631, %v2896
        %v2898 = vpop.f32.mrf.mxu0
        %v2899 = vadd.f32 %v2635, %v2898
        %2900 = vmatprep.mubr.bf16.mxu0 %v2575
        %2901 = vmatmul.mubr.bf16.gmra.mxu0 %v2574
        %v2902 = vpop.f32.mrf.mxu0
        %v2903 = vadd.f32 %v2631, %v2902
        %v2904 = vpop.f32.mrf.mxu0
        %v2905 = vadd.f32 %v2635, %v2904
        %v2906 = vpop.f32.mrf.mxu0
        %v2907 = vadd.f32 %v2631, %v2906
        %v2908 = vpop.f32.mrf.mxu0
        %v2909 = vadd.f32 %v2635, %v2908
        %2910 = vmatprep.mubr.bf16.mxu0 %v2577
        %2911 = vmatmul.mubr.bf16.gmra.mxu0 %v2576
        %v2912 = vpop.f32.mrf.mxu0
        %v2913 = vadd.f32 %v2631, %v2912
        %v2914 = vpop.f32.mrf.mxu0
        %v2915 = vadd.f32 %v2635, %v2914
        %v2916 = vpop.f32.mrf.mxu0
        %v2917 = vadd.f32 %v2631, %v2916
        %v2918 = vpop.f32.mrf.mxu0
        %v2919 = vadd.f32 %v2635, %v2918
        %2920 = vmatprep.mubr.bf16.mxu0 %v2579
        %2921 = vmatmul.mubr.bf16.gmra.mxu0 %v2578
        %v2922 = vpop.f32.mrf.mxu0
        %v2923 = vadd.f32 %v2631, %v2922
        %v2924 = vpop.f32.mrf.mxu0
        %v2925 = vadd.f32 %v2635, %v2924
        %v2926 = vpop.f32.mrf.mxu0
        %v2927 = vadd.f32 %v2631, %v2926
        %v2928 = vpop.f32.mrf.mxu0
        %v2929 = vadd.f32 %v2635, %v2928
        %2930 = vmatprep.mubr.bf16.mxu0 %v2581
        %2931 = vmatmul.mubr.bf16.gmra.mxu0 %v2580
        %v2932 = vpop.f32.mrf.mxu0
        %v2933 = vadd.f32 %v2631, %v2932
        %v2934 = vpop.f32.mrf.mxu0
        %v2935 = vadd.f32 %v2635, %v2934
        %v2936 = vpop.f32.mrf.mxu0
        %v2937 = vadd.f32 %v2631, %v2936
        %v2938 = vpop.f32.mrf.mxu0
        %v2939 = vadd.f32 %v2635, %v2938
        %2940 = vmatprep.mubr.bf16.mxu0 %v2583
        %2941 = vmatmul.mubr.bf16.gmra.mxu0 %v2582
        %v2942 = vpop.f32.mrf.mxu0
        %v2943 = vadd.f32 %v2631, %v2942
        %v2944 = vpop.f32.mrf.mxu0
        %v2945 = vadd.f32 %v2635, %v2944
        %v2946 = vpop.f32.mrf.mxu0
        %v2947 = vadd.f32 %v2631, %v2946
        %v2948 = vpop.f32.mrf.mxu0
        %v2949 = vadd.f32 %v2635, %v2948
        %2950 = vmatprep.mubr.bf16.mxu0 %v2585
        %2951 = vmatmul.mubr.bf16.gmra.mxu0 %v2584
        %v2952 = vpop.f32.mrf.mxu0
        %v2953 = vadd.f32 %v2631, %v2952
        %v2954 = vpop.f32.mrf.mxu0
        %v2955 = vadd.f32 %v2635, %v2954
        %v2956 = vpop.f32.mrf.mxu0
        %v2957 = vadd.f32 %v2631, %v2956
        %v2958 = vpop.f32.mrf.mxu0
        %v2959 = vadd.f32 %v2635, %v2958
        %2960 = vmatprep.mubr.bf16.mxu0 %v2587
        %2961 = vmatmul.mubr.bf16.gmra.mxu0 %v2586
        %v2962 = vpop.f32.mrf.mxu0
        %v2963 = vadd.f32 %v2631, %v2962
        %v2964 = vpop.f32.mrf.mxu0
        %v2965 = vadd.f32 %v2635, %v2964
        %v2966 = vpop.f32.mrf.mxu0
        %v2967 = vadd.f32 %v2631, %v2966
        %v2968 = vpop.f32.mrf.mxu0
        %v2969 = vadd.f32 %v2635, %v2968
        %2970 = vmatprep.mubr.bf16.mxu0 %v2589
        %2971 = vmatmul.mubr.bf16.gmra.mxu0 %v2588
        %v2972 = vpop.f32.mrf.mxu0
        %v2973 = vadd.f32 %v2631, %v2972
        %v2974 = vpop.f32.mrf.mxu0
        %v2975 = vadd.f32 %v2635, %v2974
        %v2976 = vpop.f32.mrf.mxu0
        %v2977 = vadd.f32 %v2631, %v2976
        %v2978 = vpop.f32.mrf.mxu0
        %v2979 = vadd.f32 %v2635, %v2978
        %2980 = vmatprep.mubr.bf16.mxu0 %v2591
        %2981 = vmatmul.mubr.bf16.gmra.mxu0 %v2590
        %v2982 = vpop.f32.mrf.mxu0
        %v2983 = vadd.f32 %v2631, %v2982
        %v2984 = vpop.f32.mrf.mxu0
        %v2985 = vadd.f32 %v2635, %v2984
        %v2986 = vpop.f32.mrf.mxu0
        %v2987 = vadd.f32 %v2631, %v2986
        %v2988 = vpop.f32.mrf.mxu0
        %v2989 = vadd.f32 %v2635, %v2988
        %2990 = vdwg.mxu0
        %v2991 = vmax.f32 %v2833, 0.0
        %v2992 = vmax.f32 %v2835, 0.0
        %v2993 = vmax.f32 %v2837, 0.0
        %v2994 = vmax.f32 %v2839, 0.0
        %v2995 = vmax.f32 %v2843, 0.0
        %v2996 = vmax.f32 %v2845, 0.0
        %v2997 = vmax.f32 %v2847, 0.0
        %v2998 = vmax.f32 %v2849, 0.0
        %v2999 = vmax.f32 %v2853, 0.0
        %v3000 = vmax.f32 %v2855, 0.0
        %v3001 = vmax.f32 %v2857, 0.0
        %v3002 = vmax.f32 %v2859, 0.0
        %v3003 = vmax.f32 %v2863, 0.0
        %v3004 = vmax.f32 %v2865, 0.0
        %v3005 = vmax.f32 %v2867, 0.0
        %v3006 = vmax.f32 %v2869, 0.0
        %v3007 = vmax.f32 %v2873, 0.0
        %v3008 = vmax.f32 %v2875, 0.0
        %v3009 = vmax.f32 %v2877, 0.0
        %v3010 = vmax.f32 %v2879, 0.0
        %v3011 = vmax.f32 %v2883, 0.0
        %v3012 = vmax.f32 %v2885, 0.0
        %v3013 = vmax.f32 %v2887, 0.0
        %v3014 = vmax.f32 %v2889, 0.0
        %v3015 = vmax.f32 %v2893, 0.0
        %v3016 = vmax.f32 %v2895, 0.0
        %v3017 = vmax.f32 %v2897, 0.0
        %v3018 = vmax.f32 %v2899, 0.0
        %v3019 = vmax.f32 %v2903, 0.0
        %v3020 = vmax.f32 %v2905, 0.0
        %v3021 = vmax.f32 %v2907, 0.0
        %v3022 = vmax.f32 %v2909, 0.0
        %v3023 = vmax.f32 %v2913, 0.0
        %v3024 = vmax.f32 %v2915, 0.0
        %v3025 = vmax.f32 %v2917, 0.0
        %v3026 = vmax.f32 %v2919, 0.0
        %v3027 = vmax.f32 %v2923, 0.0
        %v3028 = vmax.f32 %v2925, 0.0
        %v3029 = vmax.f32 %v2927, 0.0
        %v3030 = vmax.f32 %v2929, 0.0
        %v3031 = vmax.f32 %v2933, 0.0
        %v3032 = vmax.f32 %v2935, 0.0
        %v3033 = vmax.f32 %v2937, 0.0
        %v3034 = vmax.f32 %v2939, 0.0
        %v3035 = vmax.f32 %v2943, 0.0
        %v3036 = vmax.f32 %v2945, 0.0
        %v3037 = vmax.f32 %v2947, 0.0
        %v3038 = vmax.f32 %v2949, 0.0
        %v3039 = vmax.f32 %v2953, 0.0
        %v3040 = vmax.f32 %v2955, 0.0
        %v3041 = vmax.f32 %v2957, 0.0
        %v3042 = vmax.f32 %v2959, 0.0
        %v3043 = vmax.f32 %v2963, 0.0
        %v3044 = vmax.f32 %v2965, 0.0
        %v3045 = vmax.f32 %v2967, 0.0
        %v3046 = vmax.f32 %v2969, 0.0
        %v3047 = vmax.f32 %v2973, 0.0
        %v3048 = vmax.f32 %v2975, 0.0
        %v3049 = vmax.f32 %v2977, 0.0
        %v3050 = vmax.f32 %v2979, 0.0
        %v3051 = vmax.f32 %v2983, 0.0
        %v3052 = vmax.f32 %v2985, 0.0
        %v3053 = vmax.f32 %v2987, 0.0
        %v3054 = vmax.f32 %v2989, 0.0
        %v3055 = vpack.c.bf16 %v2993, %v2991
        %v3056 = vpack.c.bf16 %v2994, %v2992
        %v3057 = vpack.c.bf16 %v2997, %v2995
        %v3058 = vpack.c.bf16 %v2998, %v2996
        %v3059 = vpack.c.bf16 %v3001, %v2999
        %v3060 = vpack.c.bf16 %v3002, %v3000
        %v3061 = vpack.c.bf16 %v3005, %v3003
        %v3062 = vpack.c.bf16 %v3006, %v3004
        %v3063 = vpack.c.bf16 %v3009, %v3007
        %v3064 = vpack.c.bf16 %v3010, %v3008
        %v3065 = vpack.c.bf16 %v3013, %v3011
        %v3066 = vpack.c.bf16 %v3014, %v3012
        %v3067 = vpack.c.bf16 %v3017, %v3015
        %v3068 = vpack.c.bf16 %v3018, %v3016
        %v3069 = vpack.c.bf16 %v3021, %v3019
        %v3070 = vpack.c.bf16 %v3022, %v3020
        %v3071 = vpack.c.bf16 %v3025, %v3023
        %v3072 = vpack.c.bf16 %v3026, %v3024
        %v3073 = vpack.c.bf16 %v3029, %v3027
        %v3074 = vpack.c.bf16 %v3030, %v3028
        %v3075 = vpack.c.bf16 %v3033, %v3031
        %v3076 = vpack.c.bf16 %v3034, %v3032
        %v3077 = vpack.c.bf16 %v3037, %v3035
        %v3078 = vpack.c.bf16 %v3038, %v3036
        %v3079 = vpack.c.bf16 %v3041, %v3039
        %v3080 = vpack.c.bf16 %v3042, %v3040
        %v3081 = vpack.c.bf16 %v3045, %v3043
        %v3082 = vpack.c.bf16 %v3046, %v3044
        %v3083 = vpack.c.bf16 %v3049, %v3047
        %v3084 = vpack.c.bf16 %v3050, %v3048
        %v3085 = vpack.c.bf16 %v3053, %v3051
        %v3086 = vpack.c.bf16 %v3054, %v3052
        %s3087 = scalar_lea.vmem [#allocation12], 256
        %v3088 = vld [vmem:[%s3087] sm:$0xff]
        %v3089 = vld [vmem:[%s3087 + $0x8] sm:$0xff]
        %v3090 = vld [vmem:[%s3087 + $0x10] sm:$0xff]
        %v3091 = vld [vmem:[%s3087 + $0x18] sm:$0xff]
        %v3092 = vld [vmem:[%s3087 + $0x20] sm:$0xff]
        %v3093 = vld [vmem:[%s3087 + $0x28] sm:$0xff]
        %v3094 = vld [vmem:[%s3087 + $0x30] sm:$0xff]
        %v3095 = vld [vmem:[%s3087 + $0x38] sm:$0xff]
        %v3096 = vld [vmem:[%s3087 + $0x40] sm:$0xff]
        %v3097 = vld [vmem:[%s3087 + $0x48] sm:$0xff]
        %v3098 = vld [vmem:[%s3087 + $0x50] sm:$0xff]
        %v3099 = vld [vmem:[%s3087 + $0x58] sm:$0xff]
        %v3100 = vld [vmem:[%s3087 + $0x60] sm:$0xff]
        %v3101 = vld [vmem:[%s3087 + $0x68] sm:$0xff]
        %v3102 = vld [vmem:[%s3087 + $0x70] sm:$0xff]
        %v3103 = vld [vmem:[%s3087 + $0x78] sm:$0xff]
        %v3104 = vld [vmem:[%s3087 + $0x80] sm:$0xff]
        %v3105 = vld [vmem:[%s3087 + $0x88] sm:$0xff]
        %v3106 = vld [vmem:[%s3087 + $0x90] sm:$0xff]
        %v3107 = vld [vmem:[%s3087 + $0x98] sm:$0xff]
        %v3108 = vld [vmem:[%s3087 + $0xa0] sm:$0xff]
        %v3109 = vld [vmem:[%s3087 + $0xa8] sm:$0xff]
        %v3110 = vld [vmem:[%s3087 + $0xb0] sm:$0xff]
        %v3111 = vld [vmem:[%s3087 + $0xb8] sm:$0xff]
        %v3112 = vld [vmem:[%s3087 + $0xc0] sm:$0xff]
        %v3113 = vld [vmem:[%s3087 + $0xc8] sm:$0xff]
        %v3114 = vld [vmem:[%s3087 + $0xd0] sm:$0xff]
        %v3115 = vld [vmem:[%s3087 + $0xd8] sm:$0xff]
        %v3116 = vld [vmem:[%s3087 + $0xe0] sm:$0xff]
        %v3117 = vld [vmem:[%s3087 + $0xe8] sm:$0xff]
        %v3118 = vld [vmem:[%s3087 + $0xf0] sm:$0xff]
        %v3119 = vld [vmem:[%s3087 + $0xf8] sm:$0xff]
        %s3120 = scalar_lea.vmem %s497, 2
        %v3121 = vld [vmem:[%s3120] sm:$0x3]
        %v3123 = vlaneseq
        %v3124 = vshrl.u32 %v3123, 7
        %v3125 = vsub.s32 0, %v3124
        %v3126 = vrot.slane %v3121, %v3125
        %v3127 = vlaneseq
        %v3128 = vshrl.u32 %v3127, 7
        %v3129 = vsub.s32 1, %v3128
        %v3130 = vrot.slane %v3121, %v3129
        %v3165 = vunpack.c.l.b16 %v3088
        %v3166 = vunpack.c.h.b16 %v3088
        %v3167 = vunpack.c.l.b16 %v3089
        %v3168 = vunpack.c.h.b16 %v3089
        %v3169 = vunpack.c.l.b16 %v3090
        %v3170 = vunpack.c.h.b16 %v3090
        %v3171 = vunpack.c.l.b16 %v3091
        %v3172 = vunpack.c.h.b16 %v3091
        %v3173 = vunpack.c.l.b16 %v3092
        %v3174 = vunpack.c.h.b16 %v3092
        %v3175 = vunpack.c.l.b16 %v3093
        %v3176 = vunpack.c.h.b16 %v3093
        %v3177 = vunpack.c.l.b16 %v3094
        %v3178 = vunpack.c.h.b16 %v3094
        %v3179 = vunpack.c.l.b16 %v3095
        %v3180 = vunpack.c.h.b16 %v3095
        %v3181 = vunpack.c.l.b16 %v3096
        %v3182 = vunpack.c.h.b16 %v3096
        %v3183 = vunpack.c.l.b16 %v3097
        %v3184 = vunpack.c.h.b16 %v3097
        %v3185 = vunpack.c.l.b16 %v3098
        %v3186 = vunpack.c.h.b16 %v3098
        %v3187 = vunpack.c.l.b16 %v3099
        %v3188 = vunpack.c.h.b16 %v3099
        %v3189 = vunpack.c.l.b16 %v3100
        %v3190 = vunpack.c.h.b16 %v3100
        %v3191 = vunpack.c.l.b16 %v3101
        %v3192 = vunpack.c.h.b16 %v3101
        %v3193 = vunpack.c.l.b16 %v3102
        %v3194 = vunpack.c.h.b16 %v3102
        %v3195 = vunpack.c.l.b16 %v3103
        %v3196 = vunpack.c.h.b16 %v3103
        %v3197 = vunpack.c.l.b16 %v3104
        %v3198 = vunpack.c.h.b16 %v3104
        %v3199 = vunpack.c.l.b16 %v3105
        %v3200 = vunpack.c.h.b16 %v3105
        %v3201 = vunpack.c.l.b16 %v3106
        %v3202 = vunpack.c.h.b16 %v3106
        %v3203 = vunpack.c.l.b16 %v3107
        %v3204 = vunpack.c.h.b16 %v3107
        %v3205 = vunpack.c.l.b16 %v3108
        %v3206 = vunpack.c.h.b16 %v3108
        %v3207 = vunpack.c.l.b16 %v3109
        %v3208 = vunpack.c.h.b16 %v3109
        %v3209 = vunpack.c.l.b16 %v3110
        %v3210 = vunpack.c.h.b16 %v3110
        %v3211 = vunpack.c.l.b16 %v3111
        %v3212 = vunpack.c.h.b16 %v3111
        %v3213 = vunpack.c.l.b16 %v3112
        %v3214 = vunpack.c.h.b16 %v3112
        %v3215 = vunpack.c.l.b16 %v3113
        %v3216 = vunpack.c.h.b16 %v3113
        %v3217 = vunpack.c.l.b16 %v3114
        %v3218 = vunpack.c.h.b16 %v3114
        %v3219 = vunpack.c.l.b16 %v3115
        %v3220 = vunpack.c.h.b16 %v3115
        %v3221 = vunpack.c.l.b16 %v3116
        %v3222 = vunpack.c.h.b16 %v3116
        %v3223 = vunpack.c.l.b16 %v3117
        %v3224 = vunpack.c.h.b16 %v3117
        %v3225 = vunpack.c.l.b16 %v3118
        %v3226 = vunpack.c.h.b16 %v3118
        %v3227 = vunpack.c.l.b16 %v3119
        %v3228 = vunpack.c.h.b16 %v3119
        %v3229 = vpack.c.b16 %v3167, %v3165
        %v3230 = vpack.c.b16 %v3168, %v3166
        %v3231 = vpack.c.b16 %v3171, %v3169
        %v3232 = vpack.c.b16 %v3172, %v3170
        %v3233 = vpack.c.b16 %v3175, %v3173
        %v3234 = vpack.c.b16 %v3176, %v3174
        %v3235 = vpack.c.b16 %v3179, %v3177
        %v3236 = vpack.c.b16 %v3180, %v3178
        %v3237 = vpack.c.b16 %v3183, %v3181
        %v3238 = vpack.c.b16 %v3184, %v3182
        %v3239 = vpack.c.b16 %v3187, %v3185
        %v3240 = vpack.c.b16 %v3188, %v3186
        %v3241 = vpack.c.b16 %v3191, %v3189
        %v3242 = vpack.c.b16 %v3192, %v3190
        %v3243 = vpack.c.b16 %v3195, %v3193
        %v3244 = vpack.c.b16 %v3196, %v3194
        %v3245 = vpack.c.b16 %v3199, %v3197
        %v3246 = vpack.c.b16 %v3200, %v3198
        %v3247 = vpack.c.b16 %v3203, %v3201
        %v3248 = vpack.c.b16 %v3204, %v3202
        %v3249 = vpack.c.b16 %v3207, %v3205
        %v3250 = vpack.c.b16 %v3208, %v3206
        %v3251 = vpack.c.b16 %v3211, %v3209
        %v3252 = vpack.c.b16 %v3212, %v3210
        %v3253 = vpack.c.b16 %v3215, %v3213
        %v3254 = vpack.c.b16 %v3216, %v3214
        %v3255 = vpack.c.b16 %v3219, %v3217
        %v3256 = vpack.c.b16 %v3220, %v3218
        %v3257 = vpack.c.b16 %v3223, %v3221
        %v3258 = vpack.c.b16 %v3224, %v3222
        %v3259 = vpack.c.b16 %v3227, %v3225
        %v3260 = vpack.c.b16 %v3228, %v3226
        %3293 = vmatprep.subr.bf16.mxu0 %v3244
        %3294 = vmatpush1.bf16.msra.mxu0 %v3243
        %3295 = vmatprep.subr.bf16.mxu0 %v3242
        %3296 = vmatpush1.bf16.msra.mxu0 %v3241
        %3297 = vmatprep.subr.bf16.mxu0 %v3240
        %3298 = vmatpush1.bf16.msra.mxu0 %v3239
        %3299 = vmatprep.subr.bf16.mxu0 %v3238
        %3300 = vmatpush1.bf16.msra.mxu0 %v3237
        %3301 = vmatprep.subr.bf16.mxu0 %v3236
        %3302 = vmatpush1.bf16.msra.mxu0 %v3235
        %3303 = vmatprep.subr.bf16.mxu0 %v3234
        %3304 = vmatpush1.bf16.msra.mxu0 %v3233
        %3305 = vmatprep.subr.bf16.mxu0 %v3232
        %3306 = vmatpush1.bf16.msra.mxu0 %v3231
        %3307 = vmatprep.subr.bf16.mxu0 %v3230
        %3308 = vmatpush1.bf16.msra.mxu0 %v3229
        %3309 = vmatprep.subr.bf16.mxu0 %v3260
        %3310 = vmatpush2.bf16.msra.mxu0 %v3259
        %3311 = vmatprep.subr.bf16.mxu0 %v3258
        %3312 = vmatpush2.bf16.msra.mxu0 %v3257
        %3313 = vmatprep.subr.bf16.mxu0 %v3256
        %3314 = vmatpush2.bf16.msra.mxu0 %v3255
        %3315 = vmatprep.subr.bf16.mxu0 %v3254
        %3316 = vmatpush2.bf16.msra.mxu0 %v3253
        %3317 = vmatprep.subr.bf16.mxu0 %v3252
        %3318 = vmatpush2.bf16.msra.mxu0 %v3251
        %3319 = vmatprep.subr.bf16.mxu0 %v3250
        %3320 = vmatpush2.bf16.msra.mxu0 %v3249
        %3321 = vmatprep.subr.bf16.mxu0 %v3248
        %3322 = vmatpush2.bf16.msra.mxu0 %v3247
        %3323 = vmatprep.subr.bf16.mxu0 %v3246
        %3324 = vmatpush2.bf16.msra.mxu0 %v3245
        %3325 = vmatprep.mubr.bf16.mxu0 %v3056
        %3326 = vmatmul.mubr.bf16.gmra.mxu0 %v3055
        %v3327 = vpop.f32.mrf.mxu0
        %v3328 = vadd.f32 %v3126, %v3327
        %v3329 = vpop.f32.mrf.mxu0
        %v3330 = vadd.f32 %v3130, %v3329
        %v3331 = vpop.f32.mrf.mxu0
        %v3332 = vadd.f32 %v3126, %v3331
        %v3333 = vpop.f32.mrf.mxu0
        %v3334 = vadd.f32 %v3130, %v3333
        %3335 = vmatprep.mubr.bf16.mxu0 %v3058
        %3336 = vmatmul.mubr.bf16.gmra.mxu0 %v3057
        %v3337 = vpop.f32.mrf.mxu0
        %v3338 = vadd.f32 %v3126, %v3337
        %v3339 = vpop.f32.mrf.mxu0
        %v3340 = vadd.f32 %v3130, %v3339
        %v3341 = vpop.f32.mrf.mxu0
        %v3342 = vadd.f32 %v3126, %v3341
        %v3343 = vpop.f32.mrf.mxu0
        %v3344 = vadd.f32 %v3130, %v3343
        %3345 = vmatprep.mubr.bf16.mxu0 %v3060
        %3346 = vmatmul.mubr.bf16.gmra.mxu0 %v3059
        %v3347 = vpop.f32.mrf.mxu0
        %v3348 = vadd.f32 %v3126, %v3347
        %v3349 = vpop.f32.mrf.mxu0
        %v3350 = vadd.f32 %v3130, %v3349
        %v3351 = vpop.f32.mrf.mxu0
        %v3352 = vadd.f32 %v3126, %v3351
        %v3353 = vpop.f32.mrf.mxu0
        %v3354 = vadd.f32 %v3130, %v3353
        %3355 = vmatprep.mubr.bf16.mxu0 %v3062
        %3356 = vmatmul.mubr.bf16.gmra.mxu0 %v3061
        %v3357 = vpop.f32.mrf.mxu0
        %v3358 = vadd.f32 %v3126, %v3357
        %v3359 = vpop.f32.mrf.mxu0
        %v3360 = vadd.f32 %v3130, %v3359
        %v3361 = vpop.f32.mrf.mxu0
        %v3362 = vadd.f32 %v3126, %v3361
        %v3363 = vpop.f32.mrf.mxu0
        %v3364 = vadd.f32 %v3130, %v3363
        %3365 = vmatprep.mubr.bf16.mxu0 %v3064
        %3366 = vmatmul.mubr.bf16.gmra.mxu0 %v3063
        %v3367 = vpop.f32.mrf.mxu0
        %v3368 = vadd.f32 %v3126, %v3367
        %v3369 = vpop.f32.mrf.mxu0
        %v3370 = vadd.f32 %v3130, %v3369
        %v3371 = vpop.f32.mrf.mxu0
        %v3372 = vadd.f32 %v3126, %v3371
        %v3373 = vpop.f32.mrf.mxu0
        %v3374 = vadd.f32 %v3130, %v3373
        %3375 = vmatprep.mubr.bf16.mxu0 %v3066
        %3376 = vmatmul.mubr.bf16.gmra.mxu0 %v3065
        %v3377 = vpop.f32.mrf.mxu0
        %v3378 = vadd.f32 %v3126, %v3377
        %v3379 = vpop.f32.mrf.mxu0
        %v3380 = vadd.f32 %v3130, %v3379
        %v3381 = vpop.f32.mrf.mxu0
        %v3382 = vadd.f32 %v3126, %v3381
        %v3383 = vpop.f32.mrf.mxu0
        %v3384 = vadd.f32 %v3130, %v3383
        %3385 = vmatprep.mubr.bf16.mxu0 %v3068
        %3386 = vmatmul.mubr.bf16.gmra.mxu0 %v3067
        %v3387 = vpop.f32.mrf.mxu0
        %v3388 = vadd.f32 %v3126, %v3387
        %v3389 = vpop.f32.mrf.mxu0
        %v3390 = vadd.f32 %v3130, %v3389
        %v3391 = vpop.f32.mrf.mxu0
        %v3392 = vadd.f32 %v3126, %v3391
        %v3393 = vpop.f32.mrf.mxu0
        %v3394 = vadd.f32 %v3130, %v3393
        %3395 = vmatprep.mubr.bf16.mxu0 %v3070
        %3396 = vmatmul.mubr.bf16.gmra.mxu0 %v3069
        %v3397 = vpop.f32.mrf.mxu0
        %v3398 = vadd.f32 %v3126, %v3397
        %v3399 = vpop.f32.mrf.mxu0
        %v3400 = vadd.f32 %v3130, %v3399
        %v3401 = vpop.f32.mrf.mxu0
        %v3402 = vadd.f32 %v3126, %v3401
        %v3403 = vpop.f32.mrf.mxu0
        %v3404 = vadd.f32 %v3130, %v3403
        %3405 = vmatprep.mubr.bf16.mxu0 %v3072
        %3406 = vmatmul.mubr.bf16.gmra.mxu0 %v3071
        %v3407 = vpop.f32.mrf.mxu0
        %v3408 = vadd.f32 %v3126, %v3407
        %v3409 = vpop.f32.mrf.mxu0
        %v3410 = vadd.f32 %v3130, %v3409
        %v3411 = vpop.f32.mrf.mxu0
        %v3412 = vadd.f32 %v3126, %v3411
        %v3413 = vpop.f32.mrf.mxu0
        %v3414 = vadd.f32 %v3130, %v3413
        %3415 = vmatprep.mubr.bf16.mxu0 %v3074
        %3416 = vmatmul.mubr.bf16.gmra.mxu0 %v3073
        %v3417 = vpop.f32.mrf.mxu0
        %v3418 = vadd.f32 %v3126, %v3417
        %v3419 = vpop.f32.mrf.mxu0
        %v3420 = vadd.f32 %v3130, %v3419
        %v3421 = vpop.f32.mrf.mxu0
        %v3422 = vadd.f32 %v3126, %v3421
        %v3423 = vpop.f32.mrf.mxu0
        %v3424 = vadd.f32 %v3130, %v3423
        %3425 = vmatprep.mubr.bf16.mxu0 %v3076
        %3426 = vmatmul.mubr.bf16.gmra.mxu0 %v3075
        %v3427 = vpop.f32.mrf.mxu0
        %v3428 = vadd.f32 %v3126, %v3427
        %v3429 = vpop.f32.mrf.mxu0
        %v3430 = vadd.f32 %v3130, %v3429
        %v3431 = vpop.f32.mrf.mxu0
        %v3432 = vadd.f32 %v3126, %v3431
        %v3433 = vpop.f32.mrf.mxu0
        %v3434 = vadd.f32 %v3130, %v3433
        %3435 = vmatprep.mubr.bf16.mxu0 %v3078
        %3436 = vmatmul.mubr.bf16.gmra.mxu0 %v3077
        %v3437 = vpop.f32.mrf.mxu0
        %v3438 = vadd.f32 %v3126, %v3437
        %v3439 = vpop.f32.mrf.mxu0
        %v3440 = vadd.f32 %v3130, %v3439
        %v3441 = vpop.f32.mrf.mxu0
        %v3442 = vadd.f32 %v3126, %v3441
        %v3443 = vpop.f32.mrf.mxu0
        %v3444 = vadd.f32 %v3130, %v3443
        %3445 = vmatprep.mubr.bf16.mxu0 %v3080
        %3446 = vmatmul.mubr.bf16.gmra.mxu0 %v3079
        %v3447 = vpop.f32.mrf.mxu0
        %v3448 = vadd.f32 %v3126, %v3447
        %v3449 = vpop.f32.mrf.mxu0
        %v3450 = vadd.f32 %v3130, %v3449
        %v3451 = vpop.f32.mrf.mxu0
        %v3452 = vadd.f32 %v3126, %v3451
        %v3453 = vpop.f32.mrf.mxu0
        %v3454 = vadd.f32 %v3130, %v3453
        %3455 = vmatprep.mubr.bf16.mxu0 %v3082
        %3456 = vmatmul.mubr.bf16.gmra.mxu0 %v3081
        %v3457 = vpop.f32.mrf.mxu0
        %v3458 = vadd.f32 %v3126, %v3457
        %v3459 = vpop.f32.mrf.mxu0
        %v3460 = vadd.f32 %v3130, %v3459
        %v3461 = vpop.f32.mrf.mxu0
        %v3462 = vadd.f32 %v3126, %v3461
        %v3463 = vpop.f32.mrf.mxu0
        %v3464 = vadd.f32 %v3130, %v3463
        %3465 = vmatprep.mubr.bf16.mxu0 %v3084
        %3466 = vmatmul.mubr.bf16.gmra.mxu0 %v3083
        %v3467 = vpop.f32.mrf.mxu0
        %v3468 = vadd.f32 %v3126, %v3467
        %v3469 = vpop.f32.mrf.mxu0
        %v3470 = vadd.f32 %v3130, %v3469
        %v3471 = vpop.f32.mrf.mxu0
        %v3472 = vadd.f32 %v3126, %v3471
        %v3473 = vpop.f32.mrf.mxu0
        %v3474 = vadd.f32 %v3130, %v3473
        %3475 = vmatprep.mubr.bf16.mxu0 %v3086
        %3476 = vmatmul.mubr.bf16.gmra.mxu0 %v3085
        %v3477 = vpop.f32.mrf.mxu0
        %v3478 = vadd.f32 %v3126, %v3477
        %v3479 = vpop.f32.mrf.mxu0
        %v3480 = vadd.f32 %v3130, %v3479
        %v3481 = vpop.f32.mrf.mxu0
        %v3482 = vadd.f32 %v3126, %v3481
        %v3483 = vpop.f32.mrf.mxu0
        %v3484 = vadd.f32 %v3130, %v3483
        %3485 = vdwg.mxu0
        %v3486 = vadd.f32 %v2496, %v3328
        %v3487 = vadd.f32 %v2497, %v3330
        %v3488 = vadd.f32 %v2498, %v3332
        %v3489 = vadd.f32 %v2499, %v3334
        %v3490 = vadd.f32 %v2500, %v3338
        %v3491 = vadd.f32 %v2501, %v3340
        %v3492 = vadd.f32 %v2502, %v3342
        %v3493 = vadd.f32 %v2503, %v3344
        %v3494 = vadd.f32 %v2504, %v3348
        %v3495 = vadd.f32 %v2505, %v3350
        %v3496 = vadd.f32 %v2506, %v3352
        %v3497 = vadd.f32 %v2507, %v3354
        %v3498 = vadd.f32 %v2508, %v3358
        %v3499 = vadd.f32 %v2509, %v3360
        %v3500 = vadd.f32 %v2510, %v3362
        %v3501 = vadd.f32 %v2511, %v3364
        %v3502 = vadd.f32 %v2512, %v3368
        %v3503 = vadd.f32 %v2513, %v3370
        %v3504 = vadd.f32 %v2514, %v3372
        %v3505 = vadd.f32 %v2515, %v3374
        %v3506 = vadd.f32 %v2516, %v3378
        %v3507 = vadd.f32 %v2517, %v3380
        %v3508 = vadd.f32 %v2518, %v3382
        %v3509 = vadd.f32 %v2519, %v3384
        %v3510 = vadd.f32 %v2520, %v3388
        %v3511 = vadd.f32 %v2521, %v3390
        %v3512 = vadd.f32 %v2522, %v3392
        %v3513 = vadd.f32 %v2523, %v3394
        %v3514 = vadd.f32 %v2524, %v3398
        %v3515 = vadd.f32 %v2525, %v3400
        %v3516 = vadd.f32 %v2526, %v3402
        %v3517 = vadd.f32 %v2527, %v3404
        %v3518 = vadd.f32 %v2528, %v3408
        %v3519 = vadd.f32 %v2529, %v3410
        %v3520 = vadd.f32 %v2530, %v3412
        %v3521 = vadd.f32 %v2531, %v3414
        %v3522 = vadd.f32 %v2532, %v3418
        %v3523 = vadd.f32 %v2533, %v3420
        %v3524 = vadd.f32 %v2534, %v3422
        %v3525 = vadd.f32 %v2535, %v3424
        %v3526 = vadd.f32 %v2536, %v3428
        %v3527 = vadd.f32 %v2537, %v3430
        %v3528 = vadd.f32 %v2538, %v3432
        %v3529 = vadd.f32 %v2539, %v3434
        %v3530 = vadd.f32 %v2540, %v3438
        %v3531 = vadd.f32 %v2541, %v3440
        %v3532 = vadd.f32 %v2542, %v3442
        %v3533 = vadd.f32 %v2543, %v3444
        %v3534 = vadd.f32 %v2544, %v3448
        %v3535 = vadd.f32 %v2545, %v3450
        %v3536 = vadd.f32 %v2546, %v3452
        %v3537 = vadd.f32 %v2547, %v3454
        %v3538 = vadd.f32 %v2548, %v3458
        %v3539 = vadd.f32 %v2549, %v3460
        %v3540 = vadd.f32 %v2550, %v3462
        %v3541 = vadd.f32 %v2551, %v3464
        %v3542 = vadd.f32 %v2552, %v3468
        %v3543 = vadd.f32 %v2553, %v3470
        %v3544 = vadd.f32 %v2554, %v3472
        %v3545 = vadd.f32 %v2555, %v3474
        %v3546 = vadd.f32 %v2556, %v3478
        %v3547 = vadd.f32 %v2557, %v3480
        %v3548 = vadd.f32 %v2558, %v3482
        %v3549 = vadd.f32 %v2559, %v3484
        %v3550 = vmax.f32 %v3486, 0.0
        %v3551 = vmax.f32 %v3487, 0.0
        %v3552 = vmax.f32 %v3488, 0.0
        %v3553 = vmax.f32 %v3489, 0.0
        %v3554 = vmax.f32 %v3490, 0.0
        %v3555 = vmax.f32 %v3491, 0.0
        %v3556 = vmax.f32 %v3492, 0.0
        %v3557 = vmax.f32 %v3493, 0.0
        %v3558 = vmax.f32 %v3494, 0.0
        %v3559 = vmax.f32 %v3495, 0.0
        %v3560 = vmax.f32 %v3496, 0.0
        %v3561 = vmax.f32 %v3497, 0.0
        %v3562 = vmax.f32 %v3498, 0.0
        %v3563 = vmax.f32 %v3499, 0.0
        %v3564 = vmax.f32 %v3500, 0.0
        %v3565 = vmax.f32 %v3501, 0.0
        %v3566 = vmax.f32 %v3502, 0.0
        %v3567 = vmax.f32 %v3503, 0.0
        %v3568 = vmax.f32 %v3504, 0.0
        %v3569 = vmax.f32 %v3505, 0.0
        %v3570 = vmax.f32 %v3506, 0.0
        %v3571 = vmax.f32 %v3507, 0.0
        %v3572 = vmax.f32 %v3508, 0.0
        %v3573 = vmax.f32 %v3509, 0.0
        %v3574 = vmax.f32 %v3510, 0.0
        %v3575 = vmax.f32 %v3511, 0.0
        %v3576 = vmax.f32 %v3512, 0.0
        %v3577 = vmax.f32 %v3513, 0.0
        %v3578 = vmax.f32 %v3514, 0.0
        %v3579 = vmax.f32 %v3515, 0.0
        %v3580 = vmax.f32 %v3516, 0.0
        %v3581 = vmax.f32 %v3517, 0.0
        %v3582 = vmax.f32 %v3518, 0.0
        %v3583 = vmax.f32 %v3519, 0.0
        %v3584 = vmax.f32 %v3520, 0.0
        %v3585 = vmax.f32 %v3521, 0.0
        %v3586 = vmax.f32 %v3522, 0.0
        %v3587 = vmax.f32 %v3523, 0.0
        %v3588 = vmax.f32 %v3524, 0.0
        %v3589 = vmax.f32 %v3525, 0.0
        %v3590 = vmax.f32 %v3526, 0.0
        %v3591 = vmax.f32 %v3527, 0.0
        %v3592 = vmax.f32 %v3528, 0.0
        %v3593 = vmax.f32 %v3529, 0.0
        %v3594 = vmax.f32 %v3530, 0.0
        %v3595 = vmax.f32 %v3531, 0.0
        %v3596 = vmax.f32 %v3532, 0.0
        %v3597 = vmax.f32 %v3533, 0.0
        %v3598 = vmax.f32 %v3534, 0.0
        %v3599 = vmax.f32 %v3535, 0.0
        %v3600 = vmax.f32 %v3536, 0.0
        %v3601 = vmax.f32 %v3537, 0.0
        %v3602 = vmax.f32 %v3538, 0.0
        %v3603 = vmax.f32 %v3539, 0.0
        %v3604 = vmax.f32 %v3540, 0.0
        %v3605 = vmax.f32 %v3541, 0.0
        %v3606 = vmax.f32 %v3542, 0.0
        %v3607 = vmax.f32 %v3543, 0.0
        %v3608 = vmax.f32 %v3544, 0.0
        %v3609 = vmax.f32 %v3545, 0.0
        %v3610 = vmax.f32 %v3546, 0.0
        %v3611 = vmax.f32 %v3547, 0.0
        %v3612 = vmax.f32 %v3548, 0.0
        %v3613 = vmax.f32 %v3549, 0.0
        %v3614 = vpack.c.bf16 %v3552, %v3550
        %v3615 = vpack.c.bf16 %v3553, %v3551
        %v3616 = vpack.c.bf16 %v3556, %v3554
        %v3617 = vpack.c.bf16 %v3557, %v3555
        %v3618 = vpack.c.bf16 %v3560, %v3558
        %v3619 = vpack.c.bf16 %v3561, %v3559
        %v3620 = vpack.c.bf16 %v3564, %v3562
        %v3621 = vpack.c.bf16 %v3565, %v3563
        %v3622 = vpack.c.bf16 %v3568, %v3566
        %v3623 = vpack.c.bf16 %v3569, %v3567
        %v3624 = vpack.c.bf16 %v3572, %v3570
        %v3625 = vpack.c.bf16 %v3573, %v3571
        %v3626 = vpack.c.bf16 %v3576, %v3574
        %v3627 = vpack.c.bf16 %v3577, %v3575
        %v3628 = vpack.c.bf16 %v3580, %v3578
        %v3629 = vpack.c.bf16 %v3581, %v3579
        %v3630 = vpack.c.bf16 %v3584, %v3582
        %v3631 = vpack.c.bf16 %v3585, %v3583
        %v3632 = vpack.c.bf16 %v3588, %v3586
        %v3633 = vpack.c.bf16 %v3589, %v3587
        %v3634 = vpack.c.bf16 %v3592, %v3590
        %v3635 = vpack.c.bf16 %v3593, %v3591
        %v3636 = vpack.c.bf16 %v3596, %v3594
        %v3637 = vpack.c.bf16 %v3597, %v3595
        %v3638 = vpack.c.bf16 %v3600, %v3598
        %v3639 = vpack.c.bf16 %v3601, %v3599
        %v3640 = vpack.c.bf16 %v3604, %v3602
        %v3641 = vpack.c.bf16 %v3605, %v3603
        %v3642 = vpack.c.bf16 %v3608, %v3606
        %v3643 = vpack.c.bf16 %v3609, %v3607
        %v3644 = vpack.c.bf16 %v3612, %v3610
        %v3645 = vpack.c.bf16 %v3613, %v3611
        %3646 = vst [vmem:[#allocation2] sm:$0xff] %v3550
        %3647 = vst [vmem:[#allocation2 + $0x8] sm:$0xff] %v3551
        %3648 = vst [vmem:[#allocation2 + $0x10] sm:$0xff] %v3552
        %3649 = vst [vmem:[#allocation2 + $0x18] sm:$0xff] %v3553
        %3650 = vst [vmem:[#allocation2 + $0x20] sm:$0xff] %v3554
        %3651 = vst [vmem:[#allocation2 + $0x28] sm:$0xff] %v3555
        %3652 = vst [vmem:[#allocation2 + $0x30] sm:$0xff] %v3556
        %3653 = vst [vmem:[#allocation2 + $0x38] sm:$0xff] %v3557
        %3654 = vst [vmem:[#allocation2 + $0x40] sm:$0xff] %v3558
        %3655 = vst [vmem:[#allocation2 + $0x48] sm:$0xff] %v3559
        %3656 = vst [vmem:[#allocation2 + $0x50] sm:$0xff] %v3560
        %3657 = vst [vmem:[#allocation2 + $0x58] sm:$0xff] %v3561
        %3658 = vst [vmem:[#allocation2 + $0x60] sm:$0xff] %v3562
        %3659 = vst [vmem:[#allocation2 + $0x68] sm:$0xff] %v3563
        %3660 = vst [vmem:[#allocation2 + $0x70] sm:$0xff] %v3564
        %3661 = vst [vmem:[#allocation2 + $0x78] sm:$0xff] %v3565
        %3662 = vst [vmem:[#allocation2 + $0x80] sm:$0xff] %v3566
        %3663 = vst [vmem:[#allocation2 + $0x88] sm:$0xff] %v3567
        %3664 = vst [vmem:[#allocation2 + $0x90] sm:$0xff] %v3568
        %3665 = vst [vmem:[#allocation2 + $0x98] sm:$0xff] %v3569
        %3666 = vst [vmem:[#allocation2 + $0xa0] sm:$0xff] %v3570
        %3667 = vst [vmem:[#allocation2 + $0xa8] sm:$0xff] %v3571
        %3668 = vst [vmem:[#allocation2 + $0xb0] sm:$0xff] %v3572
        %3669 = vst [vmem:[#allocation2 + $0xb8] sm:$0xff] %v3573
        %3670 = vst [vmem:[#allocation2 + $0xc0] sm:$0xff] %v3574
        %3671 = vst [vmem:[#allocation2 + $0xc8] sm:$0xff] %v3575
        %3672 = vst [vmem:[#allocation2 + $0xd0] sm:$0xff] %v3576
        %3673 = vst [vmem:[#allocation2 + $0xd8] sm:$0xff] %v3577
        %3674 = vst [vmem:[#allocation2 + $0xe0] sm:$0xff] %v3578
        %3675 = vst [vmem:[#allocation2 + $0xe8] sm:$0xff] %v3579
        %3676 = vst [vmem:[#allocation2 + $0xf0] sm:$0xff] %v3580
        %3677 = vst [vmem:[#allocation2 + $0xf8] sm:$0xff] %v3581
        %3678 = vst [vmem:[#allocation2 + $0x100] sm:$0xff] %v3582
        %3679 = vst [vmem:[#allocation2 + $0x108] sm:$0xff] %v3583
        %3680 = vst [vmem:[#allocation2 + $0x110] sm:$0xff] %v3584
        %3681 = vst [vmem:[#allocation2 + $0x118] sm:$0xff] %v3585
        %3682 = vst [vmem:[#allocation2 + $0x120] sm:$0xff] %v3586
        %3683 = vst [vmem:[#allocation2 + $0x128] sm:$0xff] %v3587
        %3684 = vst [vmem:[#allocation2 + $0x130] sm:$0xff] %v3588
        %3685 = vst [vmem:[#allocation2 + $0x138] sm:$0xff] %v3589
        %3686 = vst [vmem:[#allocation2 + $0x140] sm:$0xff] %v3590
        %3687 = vst [vmem:[#allocation2 + $0x148] sm:$0xff] %v3591
        %3688 = vst [vmem:[#allocation2 + $0x150] sm:$0xff] %v3592
        %3689 = vst [vmem:[#allocation2 + $0x158] sm:$0xff] %v3593
        %3690 = vst [vmem:[#allocation2 + $0x160] sm:$0xff] %v3594
        %3691 = vst [vmem:[#allocation2 + $0x168] sm:$0xff] %v3595
        %3692 = vst [vmem:[#allocation2 + $0x170] sm:$0xff] %v3596
        %3693 = vst [vmem:[#allocation2 + $0x178] sm:$0xff] %v3597
        %3694 = vst [vmem:[#allocation2 + $0x180] sm:$0xff] %v3598
        %3695 = vst [vmem:[#allocation2 + $0x188] sm:$0xff] %v3599
        %3696 = vst [vmem:[#allocation2 + $0x190] sm:$0xff] %v3600
        %3697 = vst [vmem:[#allocation2 + $0x198] sm:$0xff] %v3601
        %3698 = vst [vmem:[#allocation2 + $0x1a0] sm:$0xff] %v3602
        %3699 = vst [vmem:[#allocation2 + $0x1a8] sm:$0xff] %v3603
        %3700 = vst [vmem:[#allocation2 + $0x1b0] sm:$0xff] %v3604
        %3701 = vst [vmem:[#allocation2 + $0x1b8] sm:$0xff] %v3605
        %3702 = vst [vmem:[#allocation2 + $0x1c0] sm:$0xff] %v3606
        %3703 = vst [vmem:[#allocation2 + $0x1c8] sm:$0xff] %v3607
        %3704 = vst [vmem:[#allocation2 + $0x1d0] sm:$0xff] %v3608
        %3705 = vst [vmem:[#allocation2 + $0x1d8] sm:$0xff] %v3609
        %3706 = vst [vmem:[#allocation2 + $0x1e0] sm:$0xff] %v3610
        %3707 = vst [vmem:[#allocation2 + $0x1e8] sm:$0xff] %v3611
        %3708 = vst [vmem:[#allocation2 + $0x1f0] sm:$0xff] %v3612
        %3709 = vst [vmem:[#allocation2 + $0x1f8] sm:$0xff] %v3613
        %v3742 = vunpack.c.l.b16 %v3614
        %v3743 = vunpack.c.l.b16 %v3615
        %v3744 = vunpack.c.h.b16 %v3614
        %v3745 = vunpack.c.h.b16 %v3615
        %v3746 = vunpack.c.l.b16 %v3616
        %v3747 = vunpack.c.l.b16 %v3617
        %v3748 = vunpack.c.h.b16 %v3616
        %v3749 = vunpack.c.h.b16 %v3617
        %v3750 = vunpack.c.l.b16 %v3618
        %v3751 = vunpack.c.l.b16 %v3619
        %v3752 = vunpack.c.h.b16 %v3618
        %v3753 = vunpack.c.h.b16 %v3619
        %v3754 = vunpack.c.l.b16 %v3620
        %v3755 = vunpack.c.l.b16 %v3621
        %v3756 = vunpack.c.h.b16 %v3620
        %v3757 = vunpack.c.h.b16 %v3621
        %v3758 = vunpack.c.l.b16 %v3622
        %v3759 = vunpack.c.l.b16 %v3623
        %v3760 = vunpack.c.h.b16 %v3622
        %v3761 = vunpack.c.h.b16 %v3623
        %v3762 = vunpack.c.l.b16 %v3624
        %v3763 = vunpack.c.l.b16 %v3625
        %v3764 = vunpack.c.h.b16 %v3624
        %v3765 = vunpack.c.h.b16 %v3625
        %v3766 = vunpack.c.l.b16 %v3626
        %v3767 = vunpack.c.l.b16 %v3627
        %v3768 = vunpack.c.h.b16 %v3626
        %v3769 = vunpack.c.h.b16 %v3627
        %v3770 = vunpack.c.l.b16 %v3628
        %v3771 = vunpack.c.l.b16 %v3629
        %v3772 = vunpack.c.h.b16 %v3628
        %v3773 = vunpack.c.h.b16 %v3629
        %v3774 = vunpack.c.l.b16 %v3630
        %v3775 = vunpack.c.l.b16 %v3631
        %v3776 = vunpack.c.h.b16 %v3630
        %v3777 = vunpack.c.h.b16 %v3631
        %v3778 = vunpack.c.l.b16 %v3632
        %v3779 = vunpack.c.l.b16 %v3633
        %v3780 = vunpack.c.h.b16 %v3632
        %v3781 = vunpack.c.h.b16 %v3633
        %v3782 = vunpack.c.l.b16 %v3634
        %v3783 = vunpack.c.l.b16 %v3635
        %v3784 = vunpack.c.h.b16 %v3634
        %v3785 = vunpack.c.h.b16 %v3635
        %v3786 = vunpack.c.l.b16 %v3636
        %v3787 = vunpack.c.l.b16 %v3637
        %v3788 = vunpack.c.h.b16 %v3636
        %v3789 = vunpack.c.h.b16 %v3637
        %v3790 = vunpack.c.l.b16 %v3638
        %v3791 = vunpack.c.l.b16 %v3639
        %v3792 = vunpack.c.h.b16 %v3638
        %v3793 = vunpack.c.h.b16 %v3639
        %v3794 = vunpack.c.l.b16 %v3640
        %v3795 = vunpack.c.l.b16 %v3641
        %v3796 = vunpack.c.h.b16 %v3640
        %v3797 = vunpack.c.h.b16 %v3641
        %v3798 = vunpack.c.l.b16 %v3642
        %v3799 = vunpack.c.l.b16 %v3643
        %v3800 = vunpack.c.h.b16 %v3642
        %v3801 = vunpack.c.h.b16 %v3643
        %v3802 = vunpack.c.l.b16 %v3644
        %v3803 = vunpack.c.l.b16 %v3645
        %v3804 = vunpack.c.h.b16 %v3644
        %v3805 = vunpack.c.h.b16 %v3645
        %v3806 = vpack.c.b16 %v3743, %v3742
        %v3807 = vpack.c.b16 %v3745, %v3744
        %v3808 = vpack.c.b16 %v3747, %v3746
        %v3809 = vpack.c.b16 %v3749, %v3748
        %v3810 = vpack.c.b16 %v3751, %v3750
        %v3811 = vpack.c.b16 %v3753, %v3752
        %v3812 = vpack.c.b16 %v3755, %v3754
        %v3813 = vpack.c.b16 %v3757, %v3756
        %v3814 = vpack.c.b16 %v3759, %v3758
        %v3815 = vpack.c.b16 %v3761, %v3760
        %v3816 = vpack.c.b16 %v3763, %v3762
        %v3817 = vpack.c.b16 %v3765, %v3764
        %v3818 = vpack.c.b16 %v3767, %v3766
        %v3819 = vpack.c.b16 %v3769, %v3768
        %v3820 = vpack.c.b16 %v3771, %v3770
        %v3821 = vpack.c.b16 %v3773, %v3772
        %v3822 = vpack.c.b16 %v3775, %v3774
        %v3823 = vpack.c.b16 %v3777, %v3776
        %v3824 = vpack.c.b16 %v3779, %v3778
        %v3825 = vpack.c.b16 %v3781, %v3780
        %v3826 = vpack.c.b16 %v3783, %v3782
        %v3827 = vpack.c.b16 %v3785, %v3784
        %v3828 = vpack.c.b16 %v3787, %v3786
        %v3829 = vpack.c.b16 %v3789, %v3788
        %v3830 = vpack.c.b16 %v3791, %v3790
        %v3831 = vpack.c.b16 %v3793, %v3792
        %v3832 = vpack.c.b16 %v3795, %v3794
        %v3833 = vpack.c.b16 %v3797, %v3796
        %v3834 = vpack.c.b16 %v3799, %v3798
        %v3835 = vpack.c.b16 %v3801, %v3800
        %v3836 = vpack.c.b16 %v3803, %v3802
        %v3837 = vpack.c.b16 %v3805, %v3804
        %3870 = vst [vmem:[#allocation3] sm:$0xff] %v3806
        %3871 = vst [vmem:[#allocation3 + $0x8] sm:$0xff] %v3807
        %3872 = vst [vmem:[#allocation3 + $0x10] sm:$0xff] %v3808
        %3873 = vst [vmem:[#allocation3 + $0x18] sm:$0xff] %v3809
        %3874 = vst [vmem:[#allocation3 + $0x20] sm:$0xff] %v3810
        %3875 = vst [vmem:[#allocation3 + $0x28] sm:$0xff] %v3811
        %3876 = vst [vmem:[#allocation3 + $0x30] sm:$0xff] %v3812
        %3877 = vst [vmem:[#allocation3 + $0x38] sm:$0xff] %v3813
        %3878 = vst [vmem:[#allocation3 + $0x40] sm:$0xff] %v3814
        %3879 = vst [vmem:[#allocation3 + $0x48] sm:$0xff] %v3815
        %3880 = vst [vmem:[#allocation3 + $0x50] sm:$0xff] %v3816
        %3881 = vst [vmem:[#allocation3 + $0x58] sm:$0xff] %v3817
        %3882 = vst [vmem:[#allocation3 + $0x60] sm:$0xff] %v3818
        %3883 = vst [vmem:[#allocation3 + $0x68] sm:$0xff] %v3819
        %3884 = vst [vmem:[#allocation3 + $0x70] sm:$0xff] %v3820
        %3885 = vst [vmem:[#allocation3 + $0x78] sm:$0xff] %v3821
        %3886 = vst [vmem:[#allocation3 + $0x80] sm:$0xff] %v3822
        %3887 = vst [vmem:[#allocation3 + $0x88] sm:$0xff] %v3823
        %3888 = vst [vmem:[#allocation3 + $0x90] sm:$0xff] %v3824
        %3889 = vst [vmem:[#allocation3 + $0x98] sm:$0xff] %v3825
        %3890 = vst [vmem:[#allocation3 + $0xa0] sm:$0xff] %v3826
        %3891 = vst [vmem:[#allocation3 + $0xa8] sm:$0xff] %v3827
        %3892 = vst [vmem:[#allocation3 + $0xb0] sm:$0xff] %v3828
        %3893 = vst [vmem:[#allocation3 + $0xb8] sm:$0xff] %v3829
        %3894 = vst [vmem:[#allocation3 + $0xc0] sm:$0xff] %v3830
        %3895 = vst [vmem:[#allocation3 + $0xc8] sm:$0xff] %v3831
        %3896 = vst [vmem:[#allocation3 + $0xd0] sm:$0xff] %v3832
        %3897 = vst [vmem:[#allocation3 + $0xd8] sm:$0xff] %v3833
        %3898 = vst [vmem:[#allocation3 + $0xe0] sm:$0xff] %v3834
        %3899 = vst [vmem:[#allocation3 + $0xe8] sm:$0xff] %v3835
        %3900 = vst [vmem:[#allocation3 + $0xf0] sm:$0xff] %v3836
        %3901 = vst [vmem:[#allocation3 + $0xf8] sm:$0xff] %v3837
        // Predicated region
        $region85: #{tpu_custom_call.1} parent=55 // pred_check
          %p3902 = pneg %p501
        $region86: #{tpu_custom_call.1} parent=55 // pred_check_branch
          %3904 = sbr.rel (%p3902) target = $region88
        $region87: #{tpu_custom_call.1} parent=55 // pred_region
          %v3905 = vld [vmem:[#allocation13] sm:$0xf]
          %v3906 = vld [vmem:[#allocation13 + $0x4] sm:$0xf]
          %v3907 = vld [vmem:[#allocation13 + $0x8] sm:$0xf]
          %v3908 = vld [vmem:[#allocation13 + $0xc] sm:$0xf]
          %v3909 = vld [vmem:[#allocation13 + $0x10] sm:$0xf]
          %v3910 = vld [vmem:[#allocation13 + $0x14] sm:$0xf]
          %v3911 = vld [vmem:[#allocation13 + $0x18] sm:$0xf]
          %v3912 = vld [vmem:[#allocation13 + $0x1c] sm:$0xf]
          %v3913 = vld [vmem:[#allocation13 + $0x20] sm:$0xf]
          %v3914 = vld [vmem:[#allocation13 + $0x24] sm:$0xf]
          %v3915 = vld [vmem:[#allocation13 + $0x28] sm:$0xf]
          %v3916 = vld [vmem:[#allocation13 + $0x2c] sm:$0xf]
          %v3917 = vld [vmem:[#allocation13 + $0x30] sm:$0xf]
          %v3918 = vld [vmem:[#allocation13 + $0x34] sm:$0xf]
          %v3919 = vld [vmem:[#allocation13 + $0x38] sm:$0xf]
          %v3920 = vld [vmem:[#allocation13 + $0x3c] sm:$0xf]
          %v3921 = vld [vmem:[#allocation13 + $0x40] sm:$0xf]
          %v3922 = vld [vmem:[#allocation13 + $0x44] sm:$0xf]
          %v3923 = vld [vmem:[#allocation13 + $0x48] sm:$0xf]
          %v3924 = vld [vmem:[#allocation13 + $0x4c] sm:$0xf]
          %v3925 = vld [vmem:[#allocation13 + $0x50] sm:$0xf]
          %v3926 = vld [vmem:[#allocation13 + $0x54] sm:$0xf]
          %v3927 = vld [vmem:[#allocation13 + $0x58] sm:$0xf]
          %v3928 = vld [vmem:[#allocation13 + $0x5c] sm:$0xf]
          %v3929 = vld [vmem:[#allocation13 + $0x60] sm:$0xf]
          %v3930 = vld [vmem:[#allocation13 + $0x64] sm:$0xf]
          %v3931 = vld [vmem:[#allocation13 + $0x68] sm:$0xf]
          %v3932 = vld [vmem:[#allocation13 + $0x6c] sm:$0xf]
          %v3933 = vld [vmem:[#allocation13 + $0x70] sm:$0xf]
          %v3934 = vld [vmem:[#allocation13 + $0x74] sm:$0xf]
          %v3935 = vld [vmem:[#allocation13 + $0x78] sm:$0xf]
          %v3936 = vld [vmem:[#allocation13 + $0x7c] sm:$0xf]
          %v3937 = vld [vmem:[%s8] sm:$0x1]
          %v3939 = vlaneseq
          %v3940 = vshrl.u32 %v3939, 7
          %v3941 = vsub.s32 0, %v3940
          %v3942 = vrot.slane %v3937, %v3941
          %v3976 = vunpack.c.l.b16 %v3905
          %v3977 = vunpack.c.l.b16 %v3906
          %v3978 = vunpack.c.l.b16 %v3907
          %v3979 = vunpack.c.l.b16 %v3908
          %v3980 = vunpack.c.l.b16 %v3909
          %v3981 = vunpack.c.l.b16 %v3910
          %v3982 = vunpack.c.l.b16 %v3911
          %v3983 = vunpack.c.l.b16 %v3912
          %v3984 = vunpack.c.l.b16 %v3913
          %v3985 = vunpack.c.l.b16 %v3914
          %v3986 = vunpack.c.l.b16 %v3915
          %v3987 = vunpack.c.l.b16 %v3916
          %v3988 = vunpack.c.l.b16 %v3917
          %v3989 = vunpack.c.l.b16 %v3918
          %v3990 = vunpack.c.l.b16 %v3919
          %v3991 = vunpack.c.l.b16 %v3920
          %v3992 = vunpack.c.l.b16 %v3921
          %v3993 = vunpack.c.l.b16 %v3922
          %v3994 = vunpack.c.l.b16 %v3923
          %v3995 = vunpack.c.l.b16 %v3924
          %v3996 = vunpack.c.l.b16 %v3925
          %v3997 = vunpack.c.l.b16 %v3926
          %v3998 = vunpack.c.l.b16 %v3927
          %v3999 = vunpack.c.l.b16 %v3928
          %v4000 = vunpack.c.l.b16 %v3929
          %v4001 = vunpack.c.l.b16 %v3930
          %v4002 = vunpack.c.l.b16 %v3931
          %v4003 = vunpack.c.l.b16 %v3932
          %v4004 = vunpack.c.l.b16 %v3933
          %v4005 = vunpack.c.l.b16 %v3934
          %v4006 = vunpack.c.l.b16 %v3935
          %v4007 = vunpack.c.l.b16 %v3936
          %v4008 = vpack.c.b16 %v3977, %v3976
          %v4009 = vpack.c.b16 %v3979, %v3978
          %v4010 = vpack.c.b16 %v3981, %v3980
          %v4011 = vpack.c.b16 %v3983, %v3982
          %v4012 = vpack.c.b16 %v3985, %v3984
          %v4013 = vpack.c.b16 %v3987, %v3986
          %v4014 = vpack.c.b16 %v3989, %v3988
          %v4015 = vpack.c.b16 %v3991, %v3990
          %v4016 = vpack.c.b16 %v3993, %v3992
          %v4017 = vpack.c.b16 %v3995, %v3994
          %v4018 = vpack.c.b16 %v3997, %v3996
          %v4019 = vpack.c.b16 %v3999, %v3998
          %v4020 = vpack.c.b16 %v4001, %v4000
          %v4021 = vpack.c.b16 %v4003, %v4002
          %v4022 = vpack.c.b16 %v4005, %v4004
          %v4023 = vpack.c.b16 %v4007, %v4006
          %4040 = vmatprep.subr.bf16.mxu0 0
          %4041 = vmatpush1.bf16.msra.mxu0 %v4015
          %4042 = vmatprep.subr.bf16.mxu0 0
          %4043 = vmatpush1.bf16.msra.mxu0 %v4014
          %4044 = vmatprep.subr.bf16.mxu0 0
          %4045 = vmatpush1.bf16.msra.mxu0 %v4013
          %4046 = vmatprep.subr.bf16.mxu0 0
          %4047 = vmatpush1.bf16.msra.mxu0 %v4012
          %4048 = vmatprep.subr.bf16.mxu0 0
          %4049 = vmatpush1.bf16.msra.mxu0 %v4011
          %4050 = vmatprep.subr.bf16.mxu0 0
          %4051 = vmatpush1.bf16.msra.mxu0 %v4010
          %4052 = vmatprep.subr.bf16.mxu0 0
          %4053 = vmatpush1.bf16.msra.mxu0 %v4009
          %4054 = vmatprep.subr.bf16.mxu0 0
          %4055 = vmatpush1.bf16.msra.mxu0 %v4008
          %4056 = vmatprep.subr.bf16.mxu0 0
          %4057 = vmatpush2.bf16.msra.mxu0 %v4023
          %4058 = vmatprep.subr.bf16.mxu0 0
          %4059 = vmatpush2.bf16.msra.mxu0 %v4022
          %4060 = vmatprep.subr.bf16.mxu0 0
          %4061 = vmatpush2.bf16.msra.mxu0 %v4021
          %4062 = vmatprep.subr.bf16.mxu0 0
          %4063 = vmatpush2.bf16.msra.mxu0 %v4020
          %4064 = vmatprep.subr.bf16.mxu0 0
          %4065 = vmatpush2.bf16.msra.mxu0 %v4019
          %4066 = vmatprep.subr.bf16.mxu0 0
          %4067 = vmatpush2.bf16.msra.mxu0 %v4018
          %4068 = vmatprep.subr.bf16.mxu0 0
          %4069 = vmatpush2.bf16.msra.mxu0 %v4017
          %4070 = vmatprep.subr.bf16.mxu0 0
          %4071 = vmatpush2.bf16.msra.mxu0 %v4016
          %4072 = vmatprep.mubr.bf16.mxu0 %v3615
          %4073 = vmatmul.mubr.bf16.gmra.mxu0 %v3614
          %v4074 = vpop.f32.mrf.mxu0
          %v4075 = vadd.f32 %v3942, %v4074
          %v4076 = vpop.f32.mrf.mxu0
          %v4077 = vpop.f32.mrf.mxu0
          %v4078 = vadd.f32 %v3942, %v4077
          %v4079 = vpop.f32.mrf.mxu0
          %4080 = vmatprep.mubr.bf16.mxu0 %v3617
          %4081 = vmatmul.mubr.bf16.gmra.mxu0 %v3616
          %v4082 = vpop.f32.mrf.mxu0
          %v4083 = vadd.f32 %v3942, %v4082
          %v4084 = vpop.f32.mrf.mxu0
          %v4085 = vpop.f32.mrf.mxu0
          %v4086 = vadd.f32 %v3942, %v4085
          %v4087 = vpop.f32.mrf.mxu0
          %4088 = vmatprep.mubr.bf16.mxu0 %v3619
          %4089 = vmatmul.mubr.bf16.gmra.mxu0 %v3618
          %v4090 = vpop.f32.mrf.mxu0
          %v4091 = vadd.f32 %v3942, %v4090
          %v4092 = vpop.f32.mrf.mxu0
          %v4093 = vpop.f32.mrf.mxu0
          %v4094 = vadd.f32 %v3942, %v4093
          %v4095 = vpop.f32.mrf.mxu0
          %4096 = vmatprep.mubr.bf16.mxu0 %v3621
          %4097 = vmatmul.mubr.bf16.gmra.mxu0 %v3620
          %v4098 = vpop.f32.mrf.mxu0
          %v4099 = vadd.f32 %v3942, %v4098
          %v4100 = vpop.f32.mrf.mxu0
          %v4101 = vpop.f32.mrf.mxu0
          %v4102 = vadd.f32 %v3942, %v4101
          %v4103 = vpop.f32.mrf.mxu0
          %4104 = vmatprep.mubr.bf16.mxu0 %v3623
          %4105 = vmatmul.mubr.bf16.gmra.mxu0 %v3622
          %v4106 = vpop.f32.mrf.mxu0
          %v4107 = vadd.f32 %v3942, %v4106
          %v4108 = vpop.f32.mrf.mxu0
          %v4109 = vpop.f32.mrf.mxu0
          %v4110 = vadd.f32 %v3942, %v4109
          %v4111 = vpop.f32.mrf.mxu0
          %4112 = vmatprep.mubr.bf16.mxu0 %v3625
          %4113 = vmatmul.mubr.bf16.gmra.mxu0 %v3624
          %v4114 = vpop.f32.mrf.mxu0
          %v4115 = vadd.f32 %v3942, %v4114
          %v4116 = vpop.f32.mrf.mxu0
          %v4117 = vpop.f32.mrf.mxu0
          %v4118 = vadd.f32 %v3942, %v4117
          %v4119 = vpop.f32.mrf.mxu0
          %4120 = vmatprep.mubr.bf16.mxu0 %v3627
          %4121 = vmatmul.mubr.bf16.gmra.mxu0 %v3626
          %v4122 = vpop.f32.mrf.mxu0
          %v4123 = vadd.f32 %v3942, %v4122
          %v4124 = vpop.f32.mrf.mxu0
          %v4125 = vpop.f32.mrf.mxu0
          %v4126 = vadd.f32 %v3942, %v4125
          %v4127 = vpop.f32.mrf.mxu0
          %4128 = vmatprep.mubr.bf16.mxu0 %v3629
          %4129 = vmatmul.mubr.bf16.gmra.mxu0 %v3628
          %v4130 = vpop.f32.mrf.mxu0
          %v4131 = vadd.f32 %v3942, %v4130
          %v4132 = vpop.f32.mrf.mxu0
          %v4133 = vpop.f32.mrf.mxu0
          %v4134 = vadd.f32 %v3942, %v4133
          %v4135 = vpop.f32.mrf.mxu0
          %4136 = vmatprep.mubr.bf16.mxu0 %v3631
          %4137 = vmatmul.mubr.bf16.gmra.mxu0 %v3630
          %v4138 = vpop.f32.mrf.mxu0
          %v4139 = vadd.f32 %v3942, %v4138
          %v4140 = vpop.f32.mrf.mxu0
          %v4141 = vpop.f32.mrf.mxu0
          %v4142 = vadd.f32 %v3942, %v4141
          %v4143 = vpop.f32.mrf.mxu0
          %4144 = vmatprep.mubr.bf16.mxu0 %v3633
          %4145 = vmatmul.mubr.bf16.gmra.mxu0 %v3632
          %v4146 = vpop.f32.mrf.mxu0
          %v4147 = vadd.f32 %v3942, %v4146
          %v4148 = vpop.f32.mrf.mxu0
          %v4149 = vpop.f32.mrf.mxu0
          %v4150 = vadd.f32 %v3942, %v4149
          %v4151 = vpop.f32.mrf.mxu0
          %4152 = vmatprep.mubr.bf16.mxu0 %v3635
          %4153 = vmatmul.mubr.bf16.gmra.mxu0 %v3634
          %v4154 = vpop.f32.mrf.mxu0
          %v4155 = vadd.f32 %v3942, %v4154
          %v4156 = vpop.f32.mrf.mxu0
          %v4157 = vpop.f32.mrf.mxu0
          %v4158 = vadd.f32 %v3942, %v4157
          %v4159 = vpop.f32.mrf.mxu0
          %4160 = vmatprep.mubr.bf16.mxu0 %v3637
          %4161 = vmatmul.mubr.bf16.gmra.mxu0 %v3636
          %v4162 = vpop.f32.mrf.mxu0
          %v4163 = vadd.f32 %v3942, %v4162
          %v4164 = vpop.f32.mrf.mxu0
          %v4165 = vpop.f32.mrf.mxu0
          %v4166 = vadd.f32 %v3942, %v4165
          %v4167 = vpop.f32.mrf.mxu0
          %4168 = vmatprep.mubr.bf16.mxu0 %v3639
          %4169 = vmatmul.mubr.bf16.gmra.mxu0 %v3638
          %v4170 = vpop.f32.mrf.mxu0
          %v4171 = vadd.f32 %v3942, %v4170
          %v4172 = vpop.f32.mrf.mxu0
          %v4173 = vpop.f32.mrf.mxu0
          %v4174 = vadd.f32 %v3942, %v4173
          %v4175 = vpop.f32.mrf.mxu0
          %4176 = vmatprep.mubr.bf16.mxu0 %v3641
          %4177 = vmatmul.mubr.bf16.gmra.mxu0 %v3640
          %v4178 = vpop.f32.mrf.mxu0
          %v4179 = vadd.f32 %v3942, %v4178
          %v4180 = vpop.f32.mrf.mxu0
          %v4181 = vpop.f32.mrf.mxu0
          %v4182 = vadd.f32 %v3942, %v4181
          %v4183 = vpop.f32.mrf.mxu0
          %4184 = vmatprep.mubr.bf16.mxu0 %v3643
          %4185 = vmatmul.mubr.bf16.gmra.mxu0 %v3642
          %v4186 = vpop.f32.mrf.mxu0
          %v4187 = vadd.f32 %v3942, %v4186
          %v4188 = vpop.f32.mrf.mxu0
          %v4189 = vpop.f32.mrf.mxu0
          %v4190 = vadd.f32 %v3942, %v4189
          %v4191 = vpop.f32.mrf.mxu0
          %4192 = vmatprep.mubr.bf16.mxu0 %v3645
          %4193 = vmatmul.mubr.bf16.gmra.mxu0 %v3644
          %v4194 = vpop.f32.mrf.mxu0
          %v4195 = vadd.f32 %v3942, %v4194
          %v4196 = vpop.f32.mrf.mxu0
          %v4197 = vpop.f32.mrf.mxu0
          %v4198 = vadd.f32 %v3942, %v4197
          %v4199 = vpop.f32.mrf.mxu0
          %4200 = vdwg.mxu0
          %4201 = vst [vmem:[%s483] sm:$0xff] %v4075
          %4202 = vst [vmem:[%s483 + $0x8] sm:$0xff] %v4078
          %4203 = vst [vmem:[%s483 + $0x10] sm:$0xff] %v4083
          %4204 = vst [vmem:[%s483 + $0x18] sm:$0xff] %v4086
          %4205 = vst [vmem:[%s483 + $0x20] sm:$0xff] %v4091
          %4206 = vst [vmem:[%s483 + $0x28] sm:$0xff] %v4094
          %4207 = vst [vmem:[%s483 + $0x30] sm:$0xff] %v4099
          %4208 = vst [vmem:[%s483 + $0x38] sm:$0xff] %v4102
          %4209 = vst [vmem:[%s483 + $0x40] sm:$0xff] %v4107
          %4210 = vst [vmem:[%s483 + $0x48] sm:$0xff] %v4110
          %4211 = vst [vmem:[%s483 + $0x50] sm:$0xff] %v4115
          %4212 = vst [vmem:[%s483 + $0x58] sm:$0xff] %v4118
          %4213 = vst [vmem:[%s483 + $0x60] sm:$0xff] %v4123
          %4214 = vst [vmem:[%s483 + $0x68] sm:$0xff] %v4126
          %4215 = vst [vmem:[%s483 + $0x70] sm:$0xff] %v4131
          %4216 = vst [vmem:[%s483 + $0x78] sm:$0xff] %v4134
          %4217 = vst [vmem:[%s483 + $0x80] sm:$0xff] %v4139
          %4218 = vst [vmem:[%s483 + $0x88] sm:$0xff] %v4142
          %4219 = vst [vmem:[%s483 + $0x90] sm:$0xff] %v4147
          %4220 = vst [vmem:[%s483 + $0x98] sm:$0xff] %v4150
          %4221 = vst [vmem:[%s483 + $0xa0] sm:$0xff] %v4155
          %4222 = vst [vmem:[%s483 + $0xa8] sm:$0xff] %v4158
          %4223 = vst [vmem:[%s483 + $0xb0] sm:$0xff] %v4163
          %4224 = vst [vmem:[%s483 + $0xb8] sm:$0xff] %v4166
          %4225 = vst [vmem:[%s483 + $0xc0] sm:$0xff] %v4171
          %4226 = vst [vmem:[%s483 + $0xc8] sm:$0xff] %v4174
          %4227 = vst [vmem:[%s483 + $0xd0] sm:$0xff] %v4179
          %4228 = vst [vmem:[%s483 + $0xd8] sm:$0xff] %v4182
          %4229 = vst [vmem:[%s483 + $0xe0] sm:$0xff] %v4187
          %4230 = vst [vmem:[%s483 + $0xe8] sm:$0xff] %v4190
          %4231 = vst [vmem:[%s483 + $0xf0] sm:$0xff] %v4195
          %4232 = vst [vmem:[%s483 + $0xf8] sm:$0xff] %v4198
        $region88: #{tpu_custom_call.1} parent=55 // pred_fallthru
          _
        %s4233 = sand.u32 %s263, 1
        %s4234 = scalar_lea.sflag [#allocation6], %s4233
        %s4235 = sand.u32 %s263, 1
        %s4236 = smul.addr %s4235, 256
        %s4237 = scalar_lea.vmem [#allocation15], %s4236
        // Predicated region
        $region89: #{tpu_custom_call.1} parent=55 // pred_check
          %p4238 = pneg %p273
        $region90: #{tpu_custom_call.1} parent=55 // pred_check_branch
          %4240 = sbr.rel (%p4238) target = $region92
        $region91: #{tpu_custom_call.1} parent=55 // pred_region
          %s4241 = smul.u32 32, %s33
          %s4243 = ssub.s32 4096, 4096
          %4244 = vsyncadd %s4234, %s4243
          %s4245 = smul.addr %s4241, 128
          %s4246 = scalar_lea.hbm %s9, %s4245
          %s4247 = sshll.u32 %s4237, 4
          %s4248 = int_to_ptr.vmem [resolvable:$true] %s4247
          %4253 = dma.vmem_to_hbm [thread:$0]  %s4248, 4096, %s4246, %s4234, 128, 128, 8
        $region92: #{tpu_custom_call.1} parent=55 // pred_fallthru
          _
      $region56: #{tpu_custom_call.1} parent=5 // pred_fallthru
        _
      %p4254 = scmp.le.s32.totalorder 2, %s24
      // Predicated region
      $region93: #{tpu_custom_call.1} parent=5 // pred_check
        %p4255 = pneg %p4254
      $region94: #{tpu_custom_call.1} parent=5 // pred_check_branch
        %4257 = sbr.rel (%p4255) target = $region96
      $region95: #{tpu_custom_call.1} parent=5 // pred_region
        %s4258 = ssub.s32 %s24, 2
        // Predicated region
        $region97: #{tpu_custom_call.1} parent=95 // pred_check
          %p4259 = pneg %p279
        $region98: #{tpu_custom_call.1} parent=95 // pred_check_branch
          %4261 = sbr.rel (%p4259) target = $region100
        $region99: #{tpu_custom_call.1} parent=95 // pred_region
          %s4262 = sand.u32 %s264, 1
          %s4263 = scalar_lea.sflag [#allocation6], %s4262
          %s4264 = sand.u32 %s264, 1
          %s4265 = smul.addr %s4264, 256
          %s4266 = scalar_lea.vmem [#allocation15], %s4265
          %4267 = dma.done %s4263, 4096
        $region100: #{tpu_custom_call.1} parent=95 // pred_fallthru
          _
      $region96: #{tpu_custom_call.1} parent=5 // pred_fallthru
        _
    $region6: #{tpu_custom_call.1} parent=1 // loop_footer
      %s28 = sadd.s32 1, %s24
    $region7: #{tpu_custom_call.1} parent=1 // loop_footer_branch
      %23 = sbr.rel target = $region3
    $region8: #{tpu_custom_call.1} parent=1 // loop_exit
      _
    %4268 = vsyncpa [#allocation5], 1
    %s4269 = scalar_lea.sflag [#allocation5], 1
    %4270 = vsyncpa %s4269, 1
    %4271 = vsyncpa [#allocation8], 1
    %4272 = vsyncpa [#allocation11], 1
    %4273 = vsyncpa [#allocation14], 1
    %4274 = vsyncpa [#allocation6], 1
    %s4275 = scalar_lea.sflag [#allocation6], 1
    %4276 = vsyncpa %s4275, 1

</llo_original>
